<compile_context>
chip_gen: v5e
topology: v5e:2x2
jax: 0.10.0
libtpu: 0.0.40
codegen_flags: <defaults>
</compile_context>

<pallas_src>
import functools

import jax
import jax.numpy as jnp
from jax.experimental import pallas as pl
from jax.experimental.pallas import tpu as pltpu


def _round_up(x, m):
    return (x + m - 1) // m * m


# ----------------------------- Pallas kernels -------------------------------

def _conv_pool_kernel(a_ref, w_ref, b_ref, o_ref):
    # a: (4, TM, K) bf16  -- im2col rows for the 4 pooling parities
    # w: (K, C)   bf16 (resident), b: (1, C) f32 (resident)
    # o: (TM, C)  bf16  -- pooled, ReLU'd activation
    w = w_ref[...]
    acc = jnp.dot(a_ref[0], w, preferred_element_type=jnp.float32)
    for p in range(1, 4):
        acc = jnp.maximum(
            acc, jnp.dot(a_ref[p], w, preferred_element_type=jnp.float32))
    # max_p relu(x_p + b) == relu(max_p x_p + b)  (monotonicity)
    o_ref[...] = jnp.maximum(acc + b_ref[...], 0.0).astype(o_ref.dtype)


def _matmul_bias_kernel(x_ref, w_ref, b_ref, o_ref, *, relu):
    acc = jnp.dot(x_ref[...], w_ref[...], preferred_element_type=jnp.float32)
    acc = acc + b_ref[...]
    if relu:
        acc = jnp.maximum(acc, 0.0)
    o_ref[...] = acc.astype(o_ref.dtype)


# ----------------------------- kernel wrappers -------------------------------

def matmul_bias(x, w, b, *, relu, out_dtype=jnp.float32, tm=256):
    """(x @ w + b) with optional ReLU; M-tiled, weight/bias resident."""
    m, k = x.shape
    k2, n = w.shape
    assert k == k2
    tm = min(tm, _round_up(m, 16))
    mp = _round_up(m, tm)
    if mp != m:
        x = jnp.pad(x, ((0, mp - m), (0, 0)))
    out = pl.pallas_call(
        functools.partial(_matmul_bias_kernel, relu=relu),
        out_shape=jax.ShapeDtypeStruct((mp, n), out_dtype),
        grid=(mp // tm,),
        in_specs=[
            pl.BlockSpec((tm, k), lambda i: (i, 0)),
            pl.BlockSpec((k, n), lambda i: (0, 0)),   # resident weight
            pl.BlockSpec((1, n), lambda i: (0, 0)),   # resident bias
        ],
        out_specs=pl.BlockSpec((tm, n), lambda i: (i, 0)),
        compiler_params=pltpu.CompilerParams(dimension_semantics=("parallel",)),
    )(x, w, b.reshape(1, n).astype(jnp.float32))
    return out[:m] if mp != m else out


def conv_relu_pool(x_nhwc, w_im2col, b, *, tm=512):
    """Fused 5x5 'same' conv + bias + ReLU + 2x2 max-pool (stride 2), NHWC."""
    n, h, wdim, cin = x_nhwc.shape
    k, cout = w_im2col.shape
    assert k == 25 * cin
    hh, wh = h // 2, wdim // 2

    # Zero-pad spatially (pad=2 "same"; +1 extra so strided slices stay in-bounds),
    # cast to bf16, and build the parity-split im2col (plain-JAX glue).
    xp = jnp.pad(x_nhwc, ((0, 0), (2, 3), (2, 3), (0, 0))).astype(jnp.bfloat16)
    par = []
    for ph in range(2):
        for pw in range(2):
            taps = []
            for kh in range(5):
                for kw in range(5):
                    taps.append(
                        xp[:, ph + kh:ph + kh + h:2, pw + kw:pw + kw + wdim:2, :])
            # rows ordered (n, hh, wh); K ordered (kh, kw, cin)
            par.append(jnp.concatenate(taps, axis=-1).reshape(n * hh * wh, k))
    a4 = jnp.stack(par, axis=0)                        # (4, M, 25*Cin) bf16

    m = n * hh * wh
    tm = min(tm, _round_up(m, 16))
    mp = _round_up(m, tm)
    if mp != m:
        a4 = jnp.pad(a4, ((0, 0), (0, mp - m), (0, 0)))

    out = pl.pallas_call(
        _conv_pool_kernel,
        out_shape=jax.ShapeDtypeStruct((mp, cout), jnp.bfloat16),
        grid=(mp // tm,),
        in_specs=[
            pl.BlockSpec((4, tm, k), lambda i: (0, i, 0)),
            pl.BlockSpec((k, cout), lambda i: (0, 0)),   # resident weight
            pl.BlockSpec((1, cout), lambda i: (0, 0)),   # resident bias
        ],
        out_specs=pl.BlockSpec((tm, cout), lambda i: (i, 0)),
        compiler_params=pltpu.CompilerParams(dimension_semantics=("parallel",)),
    )(a4, w_im2col, b.reshape(1, cout).astype(jnp.float32))
    if mp != m:
        out = out[:m]
    return out.reshape(n, hh, wh, cout)


# ------------------------------- params & forward ----------------------------

def init_params(key):
    """Deterministic synthetic parameters with the torch module's shapes."""
    ks = jax.random.split(key, 8)

    def u(k, shape, fan_in):
        bound = float(fan_in) ** -0.5
        return jax.random.uniform(k, shape, jnp.float32, -bound, bound)

    w1 = u(ks[0], (16, 1, 5, 5), 1 * 25)           # nn.Conv2d(1, 16, 5, padding=2)
    b1 = u(ks[1], (16,), 1 * 25)
    w2 = u(ks[2], (32, 16, 5, 5), 16 * 25)         # nn.Conv2d(16, 32, 5, padding=2)
    b2 = u(ks[3], (32,), 16 * 25)
    fw1 = u(ks[4], (512, 32 * 7 * 7), 32 * 7 * 7)  # nn.Linear(1568, 512)
    fb1 = u(ks[5], (512,), 32 * 7 * 7)
    fw2 = u(ks[6], (62, 512), 512)                 # nn.Linear(512, 62)
    fb2 = u(ks[7], (62,), 512)
    return (w1, b1, w2, b2, fw1, fb1, fw2, fb2)


def prepare_params(params):
    """One-time weight preprocessing (im2col layout, bf16, folded transposes)."""
    w1, b1, w2, b2, fw1, fb1, fw2, fb2 = params
    # Conv weights (Cout, Cin, KH, KW) -> (KH*KW*Cin, Cout), bf16.
    cw1 = jnp.transpose(w1, (2, 3, 1, 0)).reshape(25 * 1, 16).astype(jnp.bfloat16)
    cw2 = jnp.transpose(w2, (2, 3, 1, 0)).reshape(25 * 16, 32).astype(jnp.bfloat16)
    # fc1: fold torch's NCHW flatten order (c,h,w) into the weight rows so the
    # forward can flatten the NHWC activation directly (no runtime transpose).
    W1 = jnp.transpose(fw1.reshape(512, 32, 7, 7), (2, 3, 1, 0))
    W1 = W1.reshape(32 * 7 * 7, 512).astype(jnp.bfloat16)
    # fc2: pre-transpose and zero-pad output lanes 62 -> 128 (lane-dense store).
    W2 = jnp.zeros((512, 128), jnp.float32).at[:, :62].set(fw2.T).astype(jnp.bfloat16)
    B2 = jnp.zeros((128,), jnp.float32).at[:62].set(fb2)
    return (cw1, b1, cw2, b2, W1, fb1, W2, B2)


def mnist_conv_forward(x, prepped):
    cw1, b1, cw2, b2, W1, fb1, W2, B2 = prepped
    x = x.reshape(-1, 1, 28, 28)                   # torch: x.reshape(-1, 1, 28, 28)
    n = x.shape[0]
    x = jnp.transpose(x, (0, 2, 3, 1))             # NCHW -> NHWC

    p1 = conv_relu_pool(x, cw1, b1)                # (N, 14, 14, 16)  conv1+relu+pool
    p2 = conv_relu_pool(p1, cw2, b2)               # (N, 7, 7, 32)    conv2+relu+pool

    flat = p2.reshape(n, 32 * 7 * 7)               # NHWC flatten (fc1 rows pre-reordered)
    h1 = matmul_bias(flat, W1, fb1, relu=True, out_dtype=jnp.bfloat16)   # (N, 512)
    logits = matmul_bias(h1, W2, B2, relu=False, out_dtype=jnp.float32)  # (N, 128)
    return logits[:, :62]


if __name__ == "__main__":
    key = jax.random.PRNGKey(0)
    pkey, xkey = jax.random.split(key)
    params = init_params(pkey)
    prepped = prepare_params(params)
    # Small batch, NCHW like the torch module (spatial fixed to 28x28 by forward).
    x = jax.random.normal(xkey, (2, 1, 28, 28), jnp.float32)

    out = jax.jit(mnist_conv_forward)(x, prepped)
    out = jax.block_until_ready(out)
    assert out.shape == (2, 62), out.shape
    print("KERNEL_OK")
</pallas_src>

<mosaic_0001>
module attributes {stable_mosaic.version = 11 : i64} {
  func.func @_conv_pool_kernel(%arg0: i32, %arg1: memref<4x400x25xbf16, #tpu.memory_space<vmem>>, %arg2: memref<25x16xbf16, #tpu.memory_space<vmem>>, %arg3: memref<1x16xf32, #tpu.memory_space<vmem>>, %arg4: memref<400x16xbf16, #tpu.memory_space<vmem>>) attributes {dimension_semantics = [#tpu.dimension_semantics<parallel>], iteration_bounds = array<i64: 1>, scalar_prefetch = 0 : i64, scratch_operands = 0 : i64, tpu.core_type = #tpu.core_type<tc>, window_params = [{transform_indices = @transform_0, window_bounds = array<i64: 4, 400, 25>}, {pipeline_mode = #tpu.pipeline_mode<synchronous>, transform_indices = @transform_1, window_bounds = array<i64: 25, 16>}, {pipeline_mode = #tpu.pipeline_mode<synchronous>, transform_indices = @transform_2, window_bounds = array<i64: 1, 16>}, {transform_indices = @transform_3, window_bounds = array<i64: 400, 16>}]} {
    %c0 = arith.constant 0 : index
    %c0_0 = arith.constant 0 : index
    %0 = vector.load %arg2[%c0, %c0_0] : memref<25x16xbf16, #tpu.memory_space<vmem>>, vector<25x16xbf16>
    %c0_1 = arith.constant 0 : index
    %c0_2 = arith.constant 0 : index
    %c0_3 = arith.constant 0 : index
    %1 = vector.load %arg1[%c0_1, %c0_2, %c0_3] : memref<4x400x25xbf16, #tpu.memory_space<vmem>>, vector<1x400x25xbf16>
    %2 = vector.shape_cast %1 : vector<1x400x25xbf16> to vector<400x25xbf16>
    %cst = arith.constant dense<0.000000e+00> : vector<400x16xf32>
    %3 = tpu.matmul %2, %0, %cst {dimension_numbers = #tpu.dot_dimension_numbers<[1], [0], [0], [1], [0, 0, 1, 1], [], []>} : vector<400x25xbf16>, vector<25x16xbf16>, vector<400x16xf32> -> vector<400x16xf32>
    %c1 = arith.constant 1 : index
    %c0_4 = arith.constant 0 : index
    %c0_5 = arith.constant 0 : index
    %4 = vector.load %arg1[%c1, %c0_4, %c0_5] : memref<4x400x25xbf16, #tpu.memory_space<vmem>>, vector<1x400x25xbf16>
    %5 = vector.shape_cast %4 : vector<1x400x25xbf16> to vector<400x25xbf16>
    %cst_6 = arith.constant dense<0.000000e+00> : vector<400x16xf32>
    %6 = tpu.matmul %5, %0, %cst_6 {dimension_numbers = #tpu.dot_dimension_numbers<[1], [0], [0], [1], [0, 0, 1, 1], [], []>} : vector<400x25xbf16>, vector<25x16xbf16>, vector<400x16xf32> -> vector<400x16xf32>
    %7 = arith.maximumf %3, %6 : vector<400x16xf32>
    %c2 = arith.constant 2 : index
    %c0_7 = arith.constant 0 : index
    %c0_8 = arith.constant 0 : index
    %8 = vector.load %arg1[%c2, %c0_7, %c0_8] : memref<4x400x25xbf16, #tpu.memory_space<vmem>>, vector<1x400x25xbf16>
    %9 = vector.shape_cast %8 : vector<1x400x25xbf16> to vector<400x25xbf16>
    %cst_9 = arith.constant dense<0.000000e+00> : vector<400x16xf32>
    %10 = tpu.matmul %9, %0, %cst_9 {dimension_numbers = #tpu.dot_dimension_numbers<[1], [0], [0], [1], [0, 0, 1, 1], [], []>} : vector<400x25xbf16>, vector<25x16xbf16>, vector<400x16xf32> -> vector<400x16xf32>
    %11 = arith.maximumf %7, %10 : vector<400x16xf32>
    %c3 = arith.constant 3 : index
    %c0_10 = arith.constant 0 : index
    %c0_11 = arith.constant 0 : index
    %12 = vector.load %arg1[%c3, %c0_10, %c0_11] : memref<4x400x25xbf16, #tpu.memory_space<vmem>>, vector<1x400x25xbf16>
    %13 = vector.shape_cast %12 : vector<1x400x25xbf16> to vector<400x25xbf16>
    %cst_12 = arith.constant dense<0.000000e+00> : vector<400x16xf32>
    %14 = tpu.matmul %13, %0, %cst_12 {dimension_numbers = #tpu.dot_dimension_numbers<[1], [0], [0], [1], [0, 0, 1, 1], [], []>} : vector<400x25xbf16>, vector<25x16xbf16>, vector<400x16xf32> -> vector<400x16xf32>
    %15 = arith.maximumf %11, %14 : vector<400x16xf32>
    %c0_13 = arith.constant 0 : index
    %c0_14 = arith.constant 0 : index
    %16 = vector.load %arg3[%c0_13, %c0_14] : memref<1x16xf32, #tpu.memory_space<vmem>>, vector<1x16xf32>
    %17 = vector.broadcast %16 : vector<1x16xf32> to vector<400x16xf32>
    %18 = arith.addf %15, %17 : vector<400x16xf32>
    %cst_15 = arith.constant 0.000000e+00 : f32
    %19 = vector.broadcast %cst_15 : f32 to vector<400x16xf32>
    %20 = arith.maximumf %18, %19 : vector<400x16xf32>
    %21 = arith.truncf %20 : vector<400x16xf32> to vector<400x16xbf16>
    %c0_16 = arith.constant 0 : index
    %c0_17 = arith.constant 0 : index
    %22 = vector.load %arg4[%c0_16, %c0_17] : memref<400x16xbf16, #tpu.memory_space<vmem>>, vector<400x16xbf16>
    tpu.vector_store %arg4[%c0_16, %c0_17], %21 {strides = array<i32>} : memref<400x16xbf16, #tpu.memory_space<vmem>>, vector<400x16xbf16>,
    return
  }
  func.func @transform_0(%arg0: i32) -> (i32, i32, i32) {
    %c0_i32 = arith.constant 0 : i32
    %c0_i32_0 = arith.constant 0 : i32
    %c0_i32_1 = arith.constant 0 : i32
    return %c0_i32, %arg0, %c0_i32_0 : i32, i32, i32
  }
  func.func @transform_1(%arg0: i32) -> (i32, i32) {
    %c0_i32 = arith.constant 0 : i32
    %c0_i32_0 = arith.constant 0 : i32
    %c0_i32_1 = arith.constant 0 : i32
    return %c0_i32, %c0_i32_0 : i32, i32
  }
  func.func @transform_2(%arg0: i32) -> (i32, i32) {
    %c0_i32 = arith.constant 0 : i32
    %c0_i32_0 = arith.constant 0 : i32
    %c0_i32_1 = arith.constant 0 : i32
    return %c0_i32, %c0_i32_0 : i32, i32
  }
  func.func @transform_3(%arg0: i32) -> (i32, i32) {
    %c0_i32 = arith.constant 0 : i32
    %c0_i32_0 = arith.constant 0 : i32
    return %arg0, %c0_i32 : i32, i32
  }
}

module attributes {stable_mosaic.version = 11 : i64} {
  func.func @_conv_pool_kernel(%arg0: i32, %arg1: memref<4x112x400xbf16, #tpu.memory_space<vmem>>, %arg2: memref<400x32xbf16, #tpu.memory_space<vmem>>, %arg3: memref<1x32xf32, #tpu.memory_space<vmem>>, %arg4: memref<112x32xbf16, #tpu.memory_space<vmem>>) attributes {dimension_semantics = [#tpu.dimension_semantics<parallel>], iteration_bounds = array<i64: 1>, scalar_prefetch = 0 : i64, scratch_operands = 0 : i64, tpu.core_type = #tpu.core_type<tc>, window_params = [{transform_indices = @transform_0, window_bounds = array<i64: 4, 112, 400>}, {pipeline_mode = #tpu.pipeline_mode<synchronous>, transform_indices = @transform_1, window_bounds = array<i64: 400, 32>}, {pipeline_mode = #tpu.pipeline_mode<synchronous>, transform_indices = @transform_2, window_bounds = array<i64: 1, 32>}, {transform_indices = @transform_3, window_bounds = array<i64: 112, 32>}]} {
    %c0 = arith.constant 0 : index
    %c0_0 = arith.constant 0 : index
    %0 = vector.load %arg2[%c0, %c0_0] : memref<400x32xbf16, #tpu.memory_space<vmem>>, vector<400x32xbf16>
    %c0_1 = arith.constant 0 : index
    %c0_2 = arith.constant 0 : index
    %c0_3 = arith.constant 0 : index
    %1 = vector.load %arg1[%c0_1, %c0_2, %c0_3] : memref<4x112x400xbf16, #tpu.memory_space<vmem>>, vector<1x112x400xbf16>
    %2 = vector.shape_cast %1 : vector<1x112x400xbf16> to vector<112x400xbf16>
    %cst = arith.constant dense<0.000000e+00> : vector<112x32xf32>
    %3 = tpu.matmul %2, %0, %cst {dimension_numbers = #tpu.dot_dimension_numbers<[1], [0], [0], [1], [0, 0, 1, 1], [], []>} : vector<112x400xbf16>, vector<400x32xbf16>, vector<112x32xf32> -> vector<112x32xf32>
    %c1 = arith.constant 1 : index
    %c0_4 = arith.constant 0 : index
    %c0_5 = arith.constant 0 : index
    %4 = vector.load %arg1[%c1, %c0_4, %c0_5] : memref<4x112x400xbf16, #tpu.memory_space<vmem>>, vector<1x112x400xbf16>
    %5 = vector.shape_cast %4 : vector<1x112x400xbf16> to vector<112x400xbf16>
    %cst_6 = arith.constant dense<0.000000e+00> : vector<112x32xf32>
    %6 = tpu.matmul %5, %0, %cst_6 {dimension_numbers = #tpu.dot_dimension_numbers<[1], [0], [0], [1], [0, 0, 1, 1], [], []>} : vector<112x400xbf16>, vector<400x32xbf16>, vector<112x32xf32> -> vector<112x32xf32>
    %7 = arith.maximumf %3, %6 : vector<112x32xf32>
    %c2 = arith.constant 2 : index
    %c0_7 = arith.constant 0 : index
    %c0_8 = arith.constant 0 : index
    %8 = vector.load %arg1[%c2, %c0_7, %c0_8] : memref<4x112x400xbf16, #tpu.memory_space<vmem>>, vector<1x112x400xbf16>
    %9 = vector.shape_cast %8 : vector<1x112x400xbf16> to vector<112x400xbf16>
    %cst_9 = arith.constant dense<0.000000e+00> : vector<112x32xf32>
    %10 = tpu.matmul %9, %0, %cst_9 {dimension_numbers = #tpu.dot_dimension_numbers<[1], [0], [0], [1], [0, 0, 1, 1], [], []>} : vector<112x400xbf16>, vector<400x32xbf16>, vector<112x32xf32> -> vector<112x32xf32>
    %11 = arith.maximumf %7, %10 : vector<112x32xf32>
    %c3 = arith.constant 3 : index
    %c0_10 = arith.constant 0 : index
    %c0_11 = arith.constant 0 : index
    %12 = vector.load %arg1[%c3, %c0_10, %c0_11] : memref<4x112x400xbf16, #tpu.memory_space<vmem>>, vector<1x112x400xbf16>
    %13 = vector.shape_cast %12 : vector<1x112x400xbf16> to vector<112x400xbf16>
    %cst_12 = arith.constant dense<0.000000e+00> : vector<112x32xf32>
    %14 = tpu.matmul %13, %0, %cst_12 {dimension_numbers = #tpu.dot_dimension_numbers<[1], [0], [0], [1], [0, 0, 1, 1], [], []>} : vector<112x400xbf16>, vector<400x32xbf16>, vector<112x32xf32> -> vector<112x32xf32>
    %15 = arith.maximumf %11, %14 : vector<112x32xf32>
    %c0_13 = arith.constant 0 : index
    %c0_14 = arith.constant 0 : index
    %16 = vector.load %arg3[%c0_13, %c0_14] : memref<1x32xf32, #tpu.memory_space<vmem>>, vector<1x32xf32>
    %17 = vector.broadcast %16 : vector<1x32xf32> to vector<112x32xf32>
    %18 = arith.addf %15, %17 : vector<112x32xf32>
    %cst_15 = arith.constant 0.000000e+00 : f32
    %19 = vector.broadcast %cst_15 : f32 to vector<112x32xf32>
    %20 = arith.maximumf %18, %19 : vector<112x32xf32>
    %21 = arith.truncf %20 : vector<112x32xf32> to vector<112x32xbf16>
    %c0_16 = arith.constant 0 : index
    %c0_17 = arith.constant 0 : index
    %22 = vector.load %arg4[%c0_16, %c0_17] : memref<112x32xbf16, #tpu.memory_space<vmem>>, vector<112x32xbf16>
    tpu.vector_store %arg4[%c0_16, %c0_17], %21 {strides = array<i32>} : memref<112x32xbf16, #tpu.memory_space<vmem>>, vector<112x32xbf16>,
    return
  }
  func.func @transform_0(%arg0: i32) -> (i32, i32, i32) {
    %c0_i32 = arith.constant 0 : i32
    %c0_i32_0 = arith.constant 0 : i32
    %c0_i32_1 = arith.constant 0 : i32
    return %c0_i32, %arg0, %c0_i32_0 : i32, i32, i32
  }
  func.func @transform_1(%arg0: i32) -> (i32, i32) {
    %c0_i32 = arith.constant 0 : i32
    %c0_i32_0 = arith.constant 0 : i32
    %c0_i32_1 = arith.constant 0 : i32
    return %c0_i32, %c0_i32_0 : i32, i32
  }
  func.func @transform_2(%arg0: i32) -> (i32, i32) {
    %c0_i32 = arith.constant 0 : i32
    %c0_i32_0 = arith.constant 0 : i32
    %c0_i32_1 = arith.constant 0 : i32
    return %c0_i32, %c0_i32_0 : i32, i32
  }
  func.func @transform_3(%arg0: i32) -> (i32, i32) {
    %c0_i32 = arith.constant 0 : i32
    %c0_i32_0 = arith.constant 0 : i32
    return %arg0, %c0_i32 : i32, i32
  }
}

module attributes {stable_mosaic.version = 11 : i64} {
  func.func @_matmul_bias_kernel(%arg0: i32, %arg1: memref<16x1568xbf16, #tpu.memory_space<vmem>>, %arg2: memref<1568x512xbf16, #tpu.memory_space<vmem>>, %arg3: memref<1x512xf32, #tpu.memory_space<vmem>>, %arg4: memref<16x512xbf16, #tpu.memory_space<vmem>>) attributes {dimension_semantics = [#tpu.dimension_semantics<parallel>], iteration_bounds = array<i64: 1>, scalar_prefetch = 0 : i64, scratch_operands = 0 : i64, tpu.core_type = #tpu.core_type<tc>, window_params = [{transform_indices = @transform_0, window_bounds = array<i64: 16, 1568>}, {pipeline_mode = #tpu.pipeline_mode<synchronous>, transform_indices = @transform_1, window_bounds = array<i64: 1568, 512>}, {pipeline_mode = #tpu.pipeline_mode<synchronous>, transform_indices = @transform_2, window_bounds = array<i64: 1, 512>}, {transform_indices = @transform_3, window_bounds = array<i64: 16, 512>}]} {
    %c0 = arith.constant 0 : index
    %c0_0 = arith.constant 0 : index
    %0 = vector.load %arg1[%c0, %c0_0] : memref<16x1568xbf16, #tpu.memory_space<vmem>>, vector<16x1568xbf16>
    %c0_1 = arith.constant 0 : index
    %c0_2 = arith.constant 0 : index
    %1 = vector.load %arg2[%c0_1, %c0_2] : memref<1568x512xbf16, #tpu.memory_space<vmem>>, vector<1568x512xbf16>
    %cst = arith.constant dense<0.000000e+00> : vector<16x512xf32>
    %2 = tpu.matmul %0, %1, %cst {dimension_numbers = #tpu.dot_dimension_numbers<[1], [0], [0], [1], [0, 0, 1, 1], [], []>} : vector<16x1568xbf16>, vector<1568x512xbf16>, vector<16x512xf32> -> vector<16x512xf32>
    %c0_3 = arith.constant 0 : index
    %c0_4 = arith.constant 0 : index
    %3 = vector.load %arg3[%c0_3, %c0_4] : memref<1x512xf32, #tpu.memory_space<vmem>>, vector<1x512xf32>
    %4 = vector.broadcast %3 : vector<1x512xf32> to vector<16x512xf32>
    %5 = arith.addf %2, %4 : vector<16x512xf32>
    %cst_5 = arith.constant 0.000000e+00 : f32
    %6 = vector.broadcast %cst_5 : f32 to vector<16x512xf32>
    %7 = arith.maximumf %5, %6 : vector<16x512xf32>
    %8 = arith.truncf %7 : vector<16x512xf32> to vector<16x512xbf16>
    %c0_6 = arith.constant 0 : index
    %c0_7 = arith.constant 0 : index
    %9 = vector.load %arg4[%c0_6, %c0_7] : memref<16x512xbf16, #tpu.memory_space<vmem>>, vector<16x512xbf16>
    tpu.vector_store %arg4[%c0_6, %c0_7], %8 {strides = array<i32>} : memref<16x512xbf16, #tpu.memory_space<vmem>>, vector<16x512xbf16>,
    return
  }
  func.func @transform_0(%arg0: i32) -> (i32, i32) {
    %c0_i32 = arith.constant 0 : i32
    %c0_i32_0 = arith.constant 0 : i32
    return %arg0, %c0_i32 : i32, i32
  }
  func.func @transform_1(%arg0: i32) -> (i32, i32) {
    %c0_i32 = arith.constant 0 : i32
    %c0_i32_0 = arith.constant 0 : i32
    %c0_i32_1 = arith.constant 0 : i32
    return %c0_i32, %c0_i32_0 : i32, i32
  }
  func.func @transform_2(%arg0: i32) -> (i32, i32) {
    %c0_i32 = arith.constant 0 : i32
    %c0_i32_0 = arith.constant 0 : i32
    %c0_i32_1 = arith.constant 0 : i32
    return %c0_i32, %c0_i32_0 : i32, i32
  }
  func.func @transform_3(%arg0: i32) -> (i32, i32) {
    %c0_i32 = arith.constant 0 : i32
    %c0_i32_0 = arith.constant 0 : i32
    return %arg0, %c0_i32 : i32, i32
  }
}

module attributes {stable_mosaic.version = 11 : i64} {
  func.func @_matmul_bias_kernel(%arg0: i32, %arg1: memref<16x512xbf16, #tpu.memory_space<vmem>>, %arg2: memref<512x128xbf16, #tpu.memory_space<vmem>>, %arg3: memref<1x128xf32, #tpu.memory_space<vmem>>, %arg4: memref<16x128xf32, #tpu.memory_space<vmem>>) attributes {dimension_semantics = [#tpu.dimension_semantics<parallel>], iteration_bounds = array<i64: 1>, scalar_prefetch = 0 : i64, scratch_operands = 0 : i64, tpu.core_type = #tpu.core_type<tc>, window_params = [{transform_indices = @transform_0, window_bounds = array<i64: 16, 512>}, {pipeline_mode = #tpu.pipeline_mode<synchronous>, transform_indices = @transform_1, window_bounds = array<i64: 512, 128>}, {pipeline_mode = #tpu.pipeline_mode<synchronous>, transform_indices = @transform_2, window_bounds = array<i64: 1, 128>}, {transform_indices = @transform_3, window_bounds = array<i64: 16, 128>}]} {
    %c0 = arith.constant 0 : index
    %c0_0 = arith.constant 0 : index
    %0 = vector.load %arg1[%c0, %c0_0] : memref<16x512xbf16, #tpu.memory_space<vmem>>, vector<16x512xbf16>
    %c0_1 = arith.constant 0 : index
    %c0_2 = arith.constant 0 : index
    %1 = vector.load %arg2[%c0_1, %c0_2] : memref<512x128xbf16, #tpu.memory_space<vmem>>, vector<512x128xbf16>
    %cst = arith.constant dense<0.000000e+00> : vector<16x128xf32>
    %2 = tpu.matmul %0, %1, %cst {dimension_numbers = #tpu.dot_dimension_numbers<[1], [0], [0], [1], [0, 0, 1, 1], [], []>} : vector<16x512xbf16>, vector<512x128xbf16>, vector<16x128xf32> -> vector<16x128xf32>
    %c0_3 = arith.constant 0 : index
    %c0_4 = arith.constant 0 : index
    %3 = vector.load %arg3[%c0_3, %c0_4] : memref<1x128xf32, #tpu.memory_space<vmem>>, vector<1x128xf32>
    %4 = vector.broadcast %3 : vector<1x128xf32> to vector<16x128xf32>
    %5 = arith.addf %2, %4 : vector<16x128xf32>
    %c0_5 = arith.constant 0 : index
    %c0_6 = arith.constant 0 : index
    %6 = vector.load %arg4[%c0_5, %c0_6] : memref<16x128xf32, #tpu.memory_space<vmem>>, vector<16x128xf32>
    tpu.vector_store %arg4[%c0_5, %c0_6], %5 {strides = array<i32>} : memref<16x128xf32, #tpu.memory_space<vmem>>, vector<16x128xf32>,
    return
  }
  func.func @transform_0(%arg0: i32) -> (i32, i32) {
    %c0_i32 = arith.constant 0 : i32
    %c0_i32_0 = arith.constant 0 : i32
    return %arg0, %c0_i32 : i32, i32
  }
  func.func @transform_1(%arg0: i32) -> (i32, i32) {
    %c0_i32 = arith.constant 0 : i32
    %c0_i32_0 = arith.constant 0 : i32
    %c0_i32_1 = arith.constant 0 : i32
    return %c0_i32, %c0_i32_0 : i32, i32
  }
  func.func @transform_2(%arg0: i32) -> (i32, i32) {
    %c0_i32 = arith.constant 0 : i32
    %c0_i32_0 = arith.constant 0 : i32
    %c0_i32_1 = arith.constant 0 : i32
    return %c0_i32, %c0_i32_0 : i32, i32
  }
  func.func @transform_3(%arg0: i32) -> (i32, i32) {
    %c0_i32 = arith.constant 0 : i32
    %c0_i32_0 = arith.constant 0 : i32
    return %arg0, %c0_i32 : i32, i32
  }
}

</mosaic_0001>

<llo_original>
// kernel: mnist_conv_forward.4
$region0: #{mnist_conv_forward.4}
  #allocation0 [shape = 'u32[]', space=smem, size = 0x4, offset = 0x4, fixed_abs, tag = 'smem constant byte address 0x4 - core index']
  #allocation1 [shape = 'u32[72,128]{1,0:T(1,128)}', space=vmem, size = 0x9000, scoped, tag = 'internal scratch']
  %s0 = inlined_call_operand.vmem [shape: bf16[4,400,25], index: 0, kind: input, shape index: {}]
  %s1 = inlined_call_operand.vmem [shape: bf16[25,16], index: 1, kind: input, shape index: {}]
  %s2 = inlined_call_operand.vmem [shape: f32[1,16], index: 2, kind: input, shape index: {}]
  %s3 = inlined_call_operand.vmem [shape: bf16[400,16], index: 3, kind: output, shape index: {}]
  %s4 = sld [smem:[#allocation0]]
  $region22: #{mnist_conv_forward.4} parent=0
    _
  %s6 = ssub.s32 1, %s4
  %s7 = scalar_select 0, %s6, %s4
  // Predicated region
  $region2: #{mnist_conv_forward.4} parent=0 // pred_check
    _
  $region3: #{mnist_conv_forward.4} parent=0 // pred_check_branch
    %9 = sbr.rel (0) target = $region5
  $region4: #{mnist_conv_forward.4} parent=0 // pred_region
    _
  $region5: #{mnist_conv_forward.4} parent=0 // pred_fallthru
    _
  // Predicated region
  $region6: #{mnist_conv_forward.4} parent=0 // pred_check
    _
  $region7: #{mnist_conv_forward.4} parent=0 // pred_check_branch
    %11 = sbr.rel (0) target = $region9
  $region8: #{mnist_conv_forward.4} parent=0 // pred_region
    _
  $region9: #{mnist_conv_forward.4} parent=0 // pred_fallthru
    _
  // Predicated region
  $region10: #{mnist_conv_forward.4} parent=0 // pred_check
    _
  $region11: #{mnist_conv_forward.4} parent=0 // pred_check_branch
    %13 = sbr.rel (0) target = $region13
  $region12: #{mnist_conv_forward.4} parent=0 // pred_region
    _
  $region13: #{mnist_conv_forward.4} parent=0 // pred_fallthru
    _
  %v15 = vld [vmem:[%s1] sm:$0xf]
  %v16 = vld [vmem:[%s1 + $0x4] sm:$0xf]
  %v17 = vld [vmem:[%s1 + $0x8] sm:$0xf]
  %v18 = vld [vmem:[%s1 + $0xc] sm:$0x1]
  %v19 = vld [vmem:[%s0] sm:$0xf]
  %v20 = vld [vmem:[%s0 + $0x4] sm:$0xf]
  %v21 = vld [vmem:[%s0 + $0x8] sm:$0xf]
  %v22 = vld [vmem:[%s0 + $0xc] sm:$0xf]
  %v23 = vld [vmem:[%s0 + $0x10] sm:$0xf]
  %v24 = vld [vmem:[%s0 + $0x14] sm:$0xf]
  %v25 = vld [vmem:[%s0 + $0x18] sm:$0xf]
  %v26 = vld [vmem:[%s0 + $0x1c] sm:$0xf]
  %v27 = vld [vmem:[%s0 + $0x20] sm:$0xf]
  %v28 = vld [vmem:[%s0 + $0x24] sm:$0xf]
  %v29 = vld [vmem:[%s0 + $0x28] sm:$0xf]
  %v30 = vld [vmem:[%s0 + $0x2c] sm:$0xf]
  %v31 = vld [vmem:[%s0 + $0x30] sm:$0xf]
  %v32 = vld [vmem:[%s0 + $0x34] sm:$0xf]
  %v33 = vld [vmem:[%s0 + $0x38] sm:$0xf]
  %v34 = vld [vmem:[%s0 + $0x3c] sm:$0xf]
  %v35 = vld [vmem:[%s0 + $0x40] sm:$0xf]
  %v36 = vld [vmem:[%s0 + $0x44] sm:$0xf]
  %v37 = vld [vmem:[%s0 + $0x48] sm:$0xf]
  %v38 = vld [vmem:[%s0 + $0x4c] sm:$0xf]
  %v39 = vld [vmem:[%s0 + $0x50] sm:$0xf]
  %v40 = vld [vmem:[%s0 + $0x54] sm:$0xf]
  %v41 = vld [vmem:[%s0 + $0x58] sm:$0xf]
  %v42 = vld [vmem:[%s0 + $0x5c] sm:$0xf]
  %v43 = vld [vmem:[%s0 + $0x60] sm:$0xf]
  %v44 = vld [vmem:[%s0 + $0x64] sm:$0xf]
  %v45 = vld [vmem:[%s0 + $0x68] sm:$0xf]
  %v46 = vld [vmem:[%s0 + $0x6c] sm:$0xf]
  %v47 = vld [vmem:[%s0 + $0x70] sm:$0xf]
  %v48 = vld [vmem:[%s0 + $0x74] sm:$0xf]
  %v49 = vld [vmem:[%s0 + $0x78] sm:$0xf]
  %v50 = vld [vmem:[%s0 + $0x7c] sm:$0xf]
  %v51 = vld [vmem:[%s0 + $0x80] sm:$0xf]
  %v52 = vld [vmem:[%s0 + $0x84] sm:$0xf]
  %v53 = vld [vmem:[%s0 + $0x88] sm:$0xf]
  %v54 = vld [vmem:[%s0 + $0x8c] sm:$0xf]
  %v55 = vld [vmem:[%s0 + $0x90] sm:$0xf]
  %v56 = vld [vmem:[%s0 + $0x94] sm:$0xf]
  %v57 = vld [vmem:[%s0 + $0x98] sm:$0xf]
  %v58 = vld [vmem:[%s0 + $0x9c] sm:$0xf]
  %v59 = vld [vmem:[%s0 + $0xa0] sm:$0xf]
  %v60 = vld [vmem:[%s0 + $0xa4] sm:$0xf]
  %v61 = vld [vmem:[%s0 + $0xa8] sm:$0xf]
  %v62 = vld [vmem:[%s0 + $0xac] sm:$0xf]
  %v63 = vld [vmem:[%s0 + $0xb0] sm:$0xf]
  %v64 = vld [vmem:[%s0 + $0xb4] sm:$0xf]
  %v65 = vld [vmem:[%s0 + $0xb8] sm:$0xf]
  %v66 = vld [vmem:[%s0 + $0xbc] sm:$0xf]
  %v67 = vld [vmem:[%s0 + $0xc0] sm:$0xf]
  %v68 = vld [vmem:[%s0 + $0xc4] sm:$0xf]
  %v119 = vunpack.c.l.b16 %v19
  %v120 = vunpack.c.l.b16 %v20
  %v121 = vunpack.c.l.b16 %v21
  %v122 = vunpack.c.l.b16 %v22
  %v123 = vunpack.c.l.b16 %v23
  %v124 = vunpack.c.l.b16 %v24
  %v125 = vunpack.c.l.b16 %v25
  %v126 = vunpack.c.l.b16 %v26
  %v127 = vunpack.c.l.b16 %v27
  %v128 = vunpack.c.l.b16 %v28
  %v129 = vunpack.c.l.b16 %v29
  %v130 = vunpack.c.l.b16 %v30
  %v131 = vunpack.c.l.b16 %v31
  %v132 = vunpack.c.l.b16 %v32
  %v133 = vunpack.c.l.b16 %v33
  %v134 = vunpack.c.l.b16 %v34
  %v135 = vunpack.c.l.b16 %v35
  %v136 = vunpack.c.l.b16 %v36
  %v137 = vunpack.c.l.b16 %v37
  %v138 = vunpack.c.l.b16 %v38
  %v139 = vunpack.c.l.b16 %v39
  %v140 = vunpack.c.l.b16 %v40
  %v141 = vunpack.c.l.b16 %v41
  %v142 = vunpack.c.l.b16 %v42
  %v143 = vunpack.c.l.b16 %v43
  %v144 = vunpack.c.l.b16 %v44
  %v145 = vunpack.c.l.b16 %v45
  %v146 = vunpack.c.l.b16 %v46
  %v147 = vunpack.c.l.b16 %v47
  %v148 = vunpack.c.l.b16 %v48
  %v149 = vunpack.c.l.b16 %v49
  %v150 = vunpack.c.l.b16 %v50
  %v151 = vunpack.c.l.b16 %v51
  %v152 = vunpack.c.l.b16 %v52
  %v153 = vunpack.c.l.b16 %v53
  %v154 = vunpack.c.l.b16 %v54
  %v155 = vunpack.c.l.b16 %v55
  %v156 = vunpack.c.l.b16 %v56
  %v157 = vunpack.c.l.b16 %v57
  %v158 = vunpack.c.l.b16 %v58
  %v159 = vunpack.c.l.b16 %v59
  %v160 = vunpack.c.l.b16 %v60
  %v161 = vunpack.c.l.b16 %v61
  %v162 = vunpack.c.l.b16 %v62
  %v163 = vunpack.c.l.b16 %v63
  %v164 = vunpack.c.l.b16 %v64
  %v165 = vunpack.c.l.b16 %v65
  %v166 = vunpack.c.l.b16 %v66
  %v167 = vunpack.c.l.b16 %v67
  %v168 = vunpack.c.l.b16 %v68
  %v169 = vpack.c.b16 %v120, %v119
  %v170 = vpack.c.b16 %v122, %v121
  %v171 = vpack.c.b16 %v124, %v123
  %v172 = vpack.c.b16 %v126, %v125
  %v173 = vpack.c.b16 %v128, %v127
  %v174 = vpack.c.b16 %v130, %v129
  %v175 = vpack.c.b16 %v132, %v131
  %v176 = vpack.c.b16 %v134, %v133
  %v177 = vpack.c.b16 %v136, %v135
  %v178 = vpack.c.b16 %v138, %v137
  %v179 = vpack.c.b16 %v140, %v139
  %v180 = vpack.c.b16 %v142, %v141
  %v181 = vpack.c.b16 %v144, %v143
  %v182 = vpack.c.b16 %v146, %v145
  %v183 = vpack.c.b16 %v148, %v147
  %v184 = vpack.c.b16 %v150, %v149
  %v185 = vpack.c.b16 %v152, %v151
  %v186 = vpack.c.b16 %v154, %v153
  %v187 = vpack.c.b16 %v156, %v155
  %v188 = vpack.c.b16 %v158, %v157
  %v189 = vpack.c.b16 %v160, %v159
  %v190 = vpack.c.b16 %v162, %v161
  %v191 = vpack.c.b16 %v164, %v163
  %v192 = vpack.c.b16 %v166, %v165
  %v193 = vpack.c.b16 %v168, %v167
  %v198 = vunpack.c.l.b16 %v15
  %v199 = vunpack.c.l.b16 %v16
  %v200 = vunpack.c.l.b16 %v17
  %v201 = vunpack.c.l.b16 %v18
  %v202 = vpack.c.b16 %v199, %v198
  %v203 = vpack.c.b16 %v201, %v200
  %vm205 = vcmask 203776
  %v207 = vsel %vm205, %v169, 0
  %v210 = vsel %vm205, %v170, 0
  %v213 = vsel %vm205, %v171, 0
  %v216 = vsel %vm205, %v172, 0
  %v219 = vsel %vm205, %v173, 0
  %v222 = vsel %vm205, %v174, 0
  %v225 = vsel %vm205, %v175, 0
  %v228 = vsel %vm205, %v176, 0
  %v231 = vsel %vm205, %v177, 0
  %v234 = vsel %vm205, %v178, 0
  %v237 = vsel %vm205, %v179, 0
  %v240 = vsel %vm205, %v180, 0
  %v243 = vsel %vm205, %v181, 0
  %v246 = vsel %vm205, %v182, 0
  %v249 = vsel %vm205, %v183, 0
  %v252 = vsel %vm205, %v184, 0
  %v255 = vsel %vm205, %v185, 0
  %v258 = vsel %vm205, %v186, 0
  %v261 = vsel %vm205, %v187, 0
  %v264 = vsel %vm205, %v188, 0
  %v267 = vsel %vm205, %v189, 0
  %v270 = vsel %vm205, %v190, 0
  %v273 = vsel %vm205, %v191, 0
  %v276 = vsel %vm205, %v192, 0
  %v279 = vsel %vm205, %v193, 0
  %vm281 = vcmask 1043456
  %vm282 = vcmask 1044480
  %v283 = vsel %vm281, 4294967295, 65535
  %v284 = vsel %vm282, %v283, 0
  %v286 = vand.u32 %v203, %v284
  %288 = vmatpush.bf16.msra.mxu0 0
  %289 = vmatpush.bf16.msra.mxu0 0
  %290 = vmatpush.bf16.msra.mxu0 0
  %291 = vmatpush.bf16.msra.mxu0 0
  %292 = vmatpush.bf16.msra.mxu0 0
  %293 = vmatpush.bf16.msra.mxu0 0
  %294 = vmatpush.bf16.msra.mxu0 %v286
  %295 = vmatpush.bf16.msra.mxu0 %v202
  %296 = vmatmul.bf16.gmra.mxu0 %v207
  %v297 = vpop.f32.mrf.mxu0
  %v298 = vadd.f32 0.0, %v297
  %v299 = vpop.f32.mrf.mxu0
  %v300 = vadd.f32 0.0, %v299
  %301 = vmatmul.bf16.gmra.mxu0 %v210
  %v302 = vpop.f32.mrf.mxu0
  %v303 = vadd.f32 0.0, %v302
  %v304 = vpop.f32.mrf.mxu0
  %v305 = vadd.f32 0.0, %v304
  %306 = vmatmul.bf16.gmra.mxu0 %v213
  %v307 = vpop.f32.mrf.mxu0
  %v308 = vadd.f32 0.0, %v307
  %v309 = vpop.f32.mrf.mxu0
  %v310 = vadd.f32 0.0, %v309
  %311 = vmatmul.bf16.gmra.mxu0 %v216
  %v312 = vpop.f32.mrf.mxu0
  %v313 = vadd.f32 0.0, %v312
  %v314 = vpop.f32.mrf.mxu0
  %v315 = vadd.f32 0.0, %v314
  %316 = vmatmul.bf16.gmra.mxu0 %v219
  %v317 = vpop.f32.mrf.mxu0
  %v318 = vadd.f32 0.0, %v317
  %v319 = vpop.f32.mrf.mxu0
  %v320 = vadd.f32 0.0, %v319
  %321 = vmatmul.bf16.gmra.mxu0 %v222
  %v322 = vpop.f32.mrf.mxu0
  %v323 = vadd.f32 0.0, %v322
  %v324 = vpop.f32.mrf.mxu0
  %v325 = vadd.f32 0.0, %v324
  %326 = vmatmul.bf16.gmra.mxu0 %v225
  %v327 = vpop.f32.mrf.mxu0
  %v328 = vadd.f32 0.0, %v327
  %v329 = vpop.f32.mrf.mxu0
  %v330 = vadd.f32 0.0, %v329
  %331 = vmatmul.bf16.gmra.mxu0 %v228
  %v332 = vpop.f32.mrf.mxu0
  %v333 = vadd.f32 0.0, %v332
  %v334 = vpop.f32.mrf.mxu0
  %v335 = vadd.f32 0.0, %v334
  %336 = vmatmul.bf16.gmra.mxu0 %v231
  %v337 = vpop.f32.mrf.mxu0
  %v338 = vadd.f32 0.0, %v337
  %v339 = vpop.f32.mrf.mxu0
  %v340 = vadd.f32 0.0, %v339
  %341 = vmatmul.bf16.gmra.mxu0 %v234
  %v342 = vpop.f32.mrf.mxu0
  %v343 = vadd.f32 0.0, %v342
  %v344 = vpop.f32.mrf.mxu0
  %v345 = vadd.f32 0.0, %v344
  %346 = vmatmul.bf16.gmra.mxu0 %v237
  %v347 = vpop.f32.mrf.mxu0
  %v348 = vadd.f32 0.0, %v347
  %v349 = vpop.f32.mrf.mxu0
  %v350 = vadd.f32 0.0, %v349
  %351 = vmatmul.bf16.gmra.mxu0 %v240
  %v352 = vpop.f32.mrf.mxu0
  %v353 = vadd.f32 0.0, %v352
  %v354 = vpop.f32.mrf.mxu0
  %v355 = vadd.f32 0.0, %v354
  %356 = vmatmul.bf16.gmra.mxu0 %v243
  %v357 = vpop.f32.mrf.mxu0
  %v358 = vadd.f32 0.0, %v357
  %v359 = vpop.f32.mrf.mxu0
  %v360 = vadd.f32 0.0, %v359
  %361 = vmatmul.bf16.gmra.mxu0 %v246
  %v362 = vpop.f32.mrf.mxu0
  %v363 = vadd.f32 0.0, %v362
  %v364 = vpop.f32.mrf.mxu0
  %v365 = vadd.f32 0.0, %v364
  %366 = vmatmul.bf16.gmra.mxu0 %v249
  %v367 = vpop.f32.mrf.mxu0
  %v368 = vadd.f32 0.0, %v367
  %v369 = vpop.f32.mrf.mxu0
  %v370 = vadd.f32 0.0, %v369
  %371 = vmatmul.bf16.gmra.mxu0 %v252
  %v372 = vpop.f32.mrf.mxu0
  %v373 = vadd.f32 0.0, %v372
  %v374 = vpop.f32.mrf.mxu0
  %v375 = vadd.f32 0.0, %v374
  %376 = vmatmul.bf16.gmra.mxu0 %v255
  %v377 = vpop.f32.mrf.mxu0
  %v378 = vadd.f32 0.0, %v377
  %v379 = vpop.f32.mrf.mxu0
  %v380 = vadd.f32 0.0, %v379
  %381 = vmatmul.bf16.gmra.mxu0 %v258
  %v382 = vpop.f32.mrf.mxu0
  %v383 = vadd.f32 0.0, %v382
  %v384 = vpop.f32.mrf.mxu0
  %v385 = vadd.f32 0.0, %v384
  %386 = vmatmul.bf16.gmra.mxu0 %v261
  %v387 = vpop.f32.mrf.mxu0
  %v388 = vadd.f32 0.0, %v387
  %v389 = vpop.f32.mrf.mxu0
  %v390 = vadd.f32 0.0, %v389
  %391 = vmatmul.bf16.gmra.mxu0 %v264
  %v392 = vpop.f32.mrf.mxu0
  %v393 = vadd.f32 0.0, %v392
  %v394 = vpop.f32.mrf.mxu0
  %v395 = vadd.f32 0.0, %v394
  %396 = vmatmul.bf16.gmra.mxu0 %v267
  %v397 = vpop.f32.mrf.mxu0
  %v398 = vadd.f32 0.0, %v397
  %v399 = vpop.f32.mrf.mxu0
  %v400 = vadd.f32 0.0, %v399
  %401 = vmatmul.bf16.gmra.mxu0 %v270
  %v402 = vpop.f32.mrf.mxu0
  %v403 = vadd.f32 0.0, %v402
  %v404 = vpop.f32.mrf.mxu0
  %v405 = vadd.f32 0.0, %v404
  %406 = vmatmul.bf16.gmra.mxu0 %v273
  %v407 = vpop.f32.mrf.mxu0
  %v408 = vadd.f32 0.0, %v407
  %v409 = vpop.f32.mrf.mxu0
  %v410 = vadd.f32 0.0, %v409
  %411 = vmatmul.bf16.gmra.mxu0 %v276
  %v412 = vpop.f32.mrf.mxu0
  %v413 = vadd.f32 0.0, %v412
  %v414 = vpop.f32.mrf.mxu0
  %v415 = vadd.f32 0.0, %v414
  %416 = vmatmul.bf16.gmra.mxu0 %v279
  %v417 = vpop.f32.mrf.mxu0
  %v418 = vadd.f32 0.0, %v417
  %v419 = vpop.f32.mrf.mxu0
  %v420 = vadd.f32 0.0, %v419
  %421 = vdwg.mxu0
  %s422 = scalar_lea.vmem %s0, 200
  %v423 = vld [vmem:[%s422] sm:$0xf]
  %v424 = vld [vmem:[%s422 + $0x4] sm:$0xf]
  %v425 = vld [vmem:[%s422 + $0x8] sm:$0xf]
  %v426 = vld [vmem:[%s422 + $0xc] sm:$0xf]
  %v427 = vld [vmem:[%s422 + $0x10] sm:$0xf]
  %v428 = vld [vmem:[%s422 + $0x14] sm:$0xf]
  %v429 = vld [vmem:[%s422 + $0x18] sm:$0xf]
  %v430 = vld [vmem:[%s422 + $0x1c] sm:$0xf]
  %v431 = vld [vmem:[%s422 + $0x20] sm:$0xf]
  %v432 = vld [vmem:[%s422 + $0x24] sm:$0xf]
  %v433 = vld [vmem:[%s422 + $0x28] sm:$0xf]
  %v434 = vld [vmem:[%s422 + $0x2c] sm:$0xf]
  %v435 = vld [vmem:[%s422 + $0x30] sm:$0xf]
  %v436 = vld [vmem:[%s422 + $0x34] sm:$0xf]
  %v437 = vld [vmem:[%s422 + $0x38] sm:$0xf]
  %v438 = vld [vmem:[%s422 + $0x3c] sm:$0xf]
  %v439 = vld [vmem:[%s422 + $0x40] sm:$0xf]
  %v440 = vld [vmem:[%s422 + $0x44] sm:$0xf]
  %v441 = vld [vmem:[%s422 + $0x48] sm:$0xf]
  %v442 = vld [vmem:[%s422 + $0x4c] sm:$0xf]
  %v443 = vld [vmem:[%s422 + $0x50] sm:$0xf]
  %v444 = vld [vmem:[%s422 + $0x54] sm:$0xf]
  %v445 = vld [vmem:[%s422 + $0x58] sm:$0xf]
  %v446 = vld [vmem:[%s422 + $0x5c] sm:$0xf]
  %v447 = vld [vmem:[%s422 + $0x60] sm:$0xf]
  %v448 = vld [vmem:[%s422 + $0x64] sm:$0xf]
  %v449 = vld [vmem:[%s422 + $0x68] sm:$0xf]
  %v450 = vld [vmem:[%s422 + $0x6c] sm:$0xf]
  %v451 = vld [vmem:[%s422 + $0x70] sm:$0xf]
  %v452 = vld [vmem:[%s422 + $0x74] sm:$0xf]
  %v453 = vld [vmem:[%s422 + $0x78] sm:$0xf]
  %v454 = vld [vmem:[%s422 + $0x7c] sm:$0xf]
  %v455 = vld [vmem:[%s422 + $0x80] sm:$0xf]
  %v456 = vld [vmem:[%s422 + $0x84] sm:$0xf]
  %v457 = vld [vmem:[%s422 + $0x88] sm:$0xf]
  %v458 = vld [vmem:[%s422 + $0x8c] sm:$0xf]
  %v459 = vld [vmem:[%s422 + $0x90] sm:$0xf]
  %v460 = vld [vmem:[%s422 + $0x94] sm:$0xf]
  %v461 = vld [vmem:[%s422 + $0x98] sm:$0xf]
  %v462 = vld [vmem:[%s422 + $0x9c] sm:$0xf]
  %v463 = vld [vmem:[%s422 + $0xa0] sm:$0xf]
  %v464 = vld [vmem:[%s422 + $0xa4] sm:$0xf]
  %v465 = vld [vmem:[%s422 + $0xa8] sm:$0xf]
  %v466 = vld [vmem:[%s422 + $0xac] sm:$0xf]
  %v467 = vld [vmem:[%s422 + $0xb0] sm:$0xf]
  %v468 = vld [vmem:[%s422 + $0xb4] sm:$0xf]
  %v469 = vld [vmem:[%s422 + $0xb8] sm:$0xf]
  %v470 = vld [vmem:[%s422 + $0xbc] sm:$0xf]
  %v471 = vld [vmem:[%s422 + $0xc0] sm:$0xf]
  %v472 = vld [vmem:[%s422 + $0xc4] sm:$0xf]
  %v523 = vunpack.c.l.b16 %v423
  %v524 = vunpack.c.l.b16 %v424
  %v525 = vunpack.c.l.b16 %v425
  %v526 = vunpack.c.l.b16 %v426
  %v527 = vunpack.c.l.b16 %v427
  %v528 = vunpack.c.l.b16 %v428
  %v529 = vunpack.c.l.b16 %v429
  %v530 = vunpack.c.l.b16 %v430
  %v531 = vunpack.c.l.b16 %v431
  %v532 = vunpack.c.l.b16 %v432
  %v533 = vunpack.c.l.b16 %v433
  %v534 = vunpack.c.l.b16 %v434
  %v535 = vunpack.c.l.b16 %v435
  %v536 = vunpack.c.l.b16 %v436
  %v537 = vunpack.c.l.b16 %v437
  %v538 = vunpack.c.l.b16 %v438
  %v539 = vunpack.c.l.b16 %v439
  %v540 = vunpack.c.l.b16 %v440
  %v541 = vunpack.c.l.b16 %v441
  %v542 = vunpack.c.l.b16 %v442
  %v543 = vunpack.c.l.b16 %v443
  %v544 = vunpack.c.l.b16 %v444
  %v545 = vunpack.c.l.b16 %v445
  %v546 = vunpack.c.l.b16 %v446
  %v547 = vunpack.c.l.b16 %v447
  %v548 = vunpack.c.l.b16 %v448
  %v549 = vunpack.c.l.b16 %v449
  %v550 = vunpack.c.l.b16 %v450
  %v551 = vunpack.c.l.b16 %v451
  %v552 = vunpack.c.l.b16 %v452
  %v553 = vunpack.c.l.b16 %v453
  %v554 = vunpack.c.l.b16 %v454
  %v555 = vunpack.c.l.b16 %v455
  %v556 = vunpack.c.l.b16 %v456
  %v557 = vunpack.c.l.b16 %v457
  %v558 = vunpack.c.l.b16 %v458
  %v559 = vunpack.c.l.b16 %v459
  %v560 = vunpack.c.l.b16 %v460
  %v561 = vunpack.c.l.b16 %v461
  %v562 = vunpack.c.l.b16 %v462
  %v563 = vunpack.c.l.b16 %v463
  %v564 = vunpack.c.l.b16 %v464
  %v565 = vunpack.c.l.b16 %v465
  %v566 = vunpack.c.l.b16 %v466
  %v567 = vunpack.c.l.b16 %v467
  %v568 = vunpack.c.l.b16 %v468
  %v569 = vunpack.c.l.b16 %v469
  %v570 = vunpack.c.l.b16 %v470
  %v571 = vunpack.c.l.b16 %v471
  %v572 = vunpack.c.l.b16 %v472
  %v573 = vpack.c.b16 %v524, %v523
  %v574 = vpack.c.b16 %v526, %v525
  %v575 = vpack.c.b16 %v528, %v527
  %v576 = vpack.c.b16 %v530, %v529
  %v577 = vpack.c.b16 %v532, %v531
  %v578 = vpack.c.b16 %v534, %v533
  %v579 = vpack.c.b16 %v536, %v535
  %v580 = vpack.c.b16 %v538, %v537
  %v581 = vpack.c.b16 %v540, %v539
  %v582 = vpack.c.b16 %v542, %v541
  %v583 = vpack.c.b16 %v544, %v543
  %v584 = vpack.c.b16 %v546, %v545
  %v585 = vpack.c.b16 %v548, %v547
  %v586 = vpack.c.b16 %v550, %v549
  %v587 = vpack.c.b16 %v552, %v551
  %v588 = vpack.c.b16 %v554, %v553
  %v589 = vpack.c.b16 %v556, %v555
  %v590 = vpack.c.b16 %v558, %v557
  %v591 = vpack.c.b16 %v560, %v559
  %v592 = vpack.c.b16 %v562, %v561
  %v593 = vpack.c.b16 %v564, %v563
  %v594 = vpack.c.b16 %v566, %v565
  %v595 = vpack.c.b16 %v568, %v567
  %v596 = vpack.c.b16 %v570, %v569
  %v597 = vpack.c.b16 %v572, %v571
  %v599 = vsel %vm205, %v573, 0
  %v602 = vsel %vm205, %v574, 0
  %v605 = vsel %vm205, %v575, 0
  %v608 = vsel %vm205, %v576, 0
  %v611 = vsel %vm205, %v577, 0
  %v614 = vsel %vm205, %v578, 0
  %v617 = vsel %vm205, %v579, 0
  %v620 = vsel %vm205, %v580, 0
  %v623 = vsel %vm205, %v581, 0
  %v626 = vsel %vm205, %v582, 0
  %v629 = vsel %vm205, %v583, 0
  %v632 = vsel %vm205, %v584, 0
  %v635 = vsel %vm205, %v585, 0
  %v638 = vsel %vm205, %v586, 0
  %v641 = vsel %vm205, %v587, 0
  %v644 = vsel %vm205, %v588, 0
  %v647 = vsel %vm205, %v589, 0
  %v650 = vsel %vm205, %v590, 0
  %v653 = vsel %vm205, %v591, 0
  %v656 = vsel %vm205, %v592, 0
  %v659 = vsel %vm205, %v593, 0
  %v662 = vsel %vm205, %v594, 0
  %v665 = vsel %vm205, %v595, 0
  %v668 = vsel %vm205, %v596, 0
  %v671 = vsel %vm205, %v597, 0
  %673 = vmatpush.bf16.msra.mxu0 0
  %674 = vmatpush.bf16.msra.mxu0 0
  %675 = vmatpush.bf16.msra.mxu0 0
  %676 = vmatpush.bf16.msra.mxu0 0
  %677 = vmatpush.bf16.msra.mxu0 0
  %678 = vmatpush.bf16.msra.mxu0 0
  %679 = vmatpush.bf16.msra.mxu0 %v286
  %680 = vmatpush.bf16.msra.mxu0 %v202
  %681 = vmatmul.bf16.gmra.mxu0 %v599
  %v682 = vpop.f32.mrf.mxu0
  %v683 = vadd.f32 0.0, %v682
  %v684 = vpop.f32.mrf.mxu0
  %v685 = vadd.f32 0.0, %v684
  %686 = vmatmul.bf16.gmra.mxu0 %v602
  %v687 = vpop.f32.mrf.mxu0
  %v688 = vadd.f32 0.0, %v687
  %v689 = vpop.f32.mrf.mxu0
  %v690 = vadd.f32 0.0, %v689
  %691 = vmatmul.bf16.gmra.mxu0 %v605
  %v692 = vpop.f32.mrf.mxu0
  %v693 = vadd.f32 0.0, %v692
  %v694 = vpop.f32.mrf.mxu0
  %v695 = vadd.f32 0.0, %v694
  %696 = vmatmul.bf16.gmra.mxu0 %v608
  %v697 = vpop.f32.mrf.mxu0
  %v698 = vadd.f32 0.0, %v697
  %v699 = vpop.f32.mrf.mxu0
  %v700 = vadd.f32 0.0, %v699
  %701 = vmatmul.bf16.gmra.mxu0 %v611
  %v702 = vpop.f32.mrf.mxu0
  %v703 = vadd.f32 0.0, %v702
  %v704 = vpop.f32.mrf.mxu0
  %v705 = vadd.f32 0.0, %v704
  %706 = vmatmul.bf16.gmra.mxu0 %v614
  %v707 = vpop.f32.mrf.mxu0
  %v708 = vadd.f32 0.0, %v707
  %v709 = vpop.f32.mrf.mxu0
  %v710 = vadd.f32 0.0, %v709
  %711 = vmatmul.bf16.gmra.mxu0 %v617
  %v712 = vpop.f32.mrf.mxu0
  %v713 = vadd.f32 0.0, %v712
  %v714 = vpop.f32.mrf.mxu0
  %v715 = vadd.f32 0.0, %v714
  %716 = vmatmul.bf16.gmra.mxu0 %v620
  %v717 = vpop.f32.mrf.mxu0
  %v718 = vadd.f32 0.0, %v717
  %v719 = vpop.f32.mrf.mxu0
  %v720 = vadd.f32 0.0, %v719
  %721 = vmatmul.bf16.gmra.mxu0 %v623
  %v722 = vpop.f32.mrf.mxu0
  %v723 = vadd.f32 0.0, %v722
  %v724 = vpop.f32.mrf.mxu0
  %v725 = vadd.f32 0.0, %v724
  %726 = vmatmul.bf16.gmra.mxu0 %v626
  %v727 = vpop.f32.mrf.mxu0
  %v728 = vadd.f32 0.0, %v727
  %v729 = vpop.f32.mrf.mxu0
  %v730 = vadd.f32 0.0, %v729
  %731 = vmatmul.bf16.gmra.mxu0 %v629
  %v732 = vpop.f32.mrf.mxu0
  %v733 = vadd.f32 0.0, %v732
  %v734 = vpop.f32.mrf.mxu0
  %v735 = vadd.f32 0.0, %v734
  %736 = vmatmul.bf16.gmra.mxu0 %v632
  %v737 = vpop.f32.mrf.mxu0
  %v738 = vadd.f32 0.0, %v737
  %v739 = vpop.f32.mrf.mxu0
  %v740 = vadd.f32 0.0, %v739
  %741 = vmatmul.bf16.gmra.mxu0 %v635
  %v742 = vpop.f32.mrf.mxu0
  %v743 = vadd.f32 0.0, %v742
  %v744 = vpop.f32.mrf.mxu0
  %v745 = vadd.f32 0.0, %v744
  %746 = vmatmul.bf16.gmra.mxu0 %v638
  %v747 = vpop.f32.mrf.mxu0
  %v748 = vadd.f32 0.0, %v747
  %v749 = vpop.f32.mrf.mxu0
  %v750 = vadd.f32 0.0, %v749
  %751 = vmatmul.bf16.gmra.mxu0 %v641
  %v752 = vpop.f32.mrf.mxu0
  %v753 = vadd.f32 0.0, %v752
  %v754 = vpop.f32.mrf.mxu0
  %v755 = vadd.f32 0.0, %v754
  %756 = vmatmul.bf16.gmra.mxu0 %v644
  %v757 = vpop.f32.mrf.mxu0
  %v758 = vadd.f32 0.0, %v757
  %v759 = vpop.f32.mrf.mxu0
  %v760 = vadd.f32 0.0, %v759
  %761 = vmatmul.bf16.gmra.mxu0 %v647
  %v762 = vpop.f32.mrf.mxu0
  %v763 = vadd.f32 0.0, %v762
  %v764 = vpop.f32.mrf.mxu0
  %v765 = vadd.f32 0.0, %v764
  %766 = vmatmul.bf16.gmra.mxu0 %v650
  %v767 = vpop.f32.mrf.mxu0
  %v768 = vadd.f32 0.0, %v767
  %v769 = vpop.f32.mrf.mxu0
  %v770 = vadd.f32 0.0, %v769
  %771 = vmatmul.bf16.gmra.mxu0 %v653
  %v772 = vpop.f32.mrf.mxu0
  %v773 = vadd.f32 0.0, %v772
  %v774 = vpop.f32.mrf.mxu0
  %v775 = vadd.f32 0.0, %v774
  %776 = vmatmul.bf16.gmra.mxu0 %v656
  %v777 = vpop.f32.mrf.mxu0
  %v778 = vadd.f32 0.0, %v777
  %v779 = vpop.f32.mrf.mxu0
  %v780 = vadd.f32 0.0, %v779
  %781 = vmatmul.bf16.gmra.mxu0 %v659
  %v782 = vpop.f32.mrf.mxu0
  %v783 = vadd.f32 0.0, %v782
  %v784 = vpop.f32.mrf.mxu0
  %v785 = vadd.f32 0.0, %v784
  %786 = vmatmul.bf16.gmra.mxu0 %v662
  %v787 = vpop.f32.mrf.mxu0
  %v788 = vadd.f32 0.0, %v787
  %v789 = vpop.f32.mrf.mxu0
  %v790 = vadd.f32 0.0, %v789
  %791 = vmatmul.bf16.gmra.mxu0 %v665
  %v792 = vpop.f32.mrf.mxu0
  %v793 = vadd.f32 0.0, %v792
  %v794 = vpop.f32.mrf.mxu0
  %v795 = vadd.f32 0.0, %v794
  %796 = vmatmul.bf16.gmra.mxu0 %v668
  %v797 = vpop.f32.mrf.mxu0
  %v798 = vadd.f32 0.0, %v797
  %v799 = vpop.f32.mrf.mxu0
  %v800 = vadd.f32 0.0, %v799
  %801 = vmatmul.bf16.gmra.mxu0 %v671
  %v802 = vpop.f32.mrf.mxu0
  %v803 = vadd.f32 0.0, %v802
  %v804 = vpop.f32.mrf.mxu0
  %v805 = vadd.f32 0.0, %v804
  %806 = vdwg.mxu0
  %v807 = vmax.f32 %v298, %v683
  %v808 = vmax.f32 %v300, %v685
  %v809 = vmax.f32 %v303, %v688
  %v810 = vmax.f32 %v305, %v690
  %v811 = vmax.f32 %v308, %v693
  %v812 = vmax.f32 %v310, %v695
  %v813 = vmax.f32 %v313, %v698
  %v814 = vmax.f32 %v315, %v700
  %v815 = vmax.f32 %v318, %v703
  %v816 = vmax.f32 %v320, %v705
  %v817 = vmax.f32 %v323, %v708
  %v818 = vmax.f32 %v325, %v710
  %v819 = vmax.f32 %v328, %v713
  %v820 = vmax.f32 %v330, %v715
  %v821 = vmax.f32 %v333, %v718
  %v822 = vmax.f32 %v335, %v720
  %v823 = vmax.f32 %v338, %v723
  %v824 = vmax.f32 %v340, %v725
  %v825 = vmax.f32 %v343, %v728
  %v826 = vmax.f32 %v345, %v730
  %v827 = vmax.f32 %v348, %v733
  %v828 = vmax.f32 %v350, %v735
  %v829 = vmax.f32 %v353, %v738
  %v830 = vmax.f32 %v355, %v740
  %v831 = vmax.f32 %v358, %v743
  %v832 = vmax.f32 %v360, %v745
  %v833 = vmax.f32 %v363, %v748
  %v834 = vmax.f32 %v365, %v750
  %v835 = vmax.f32 %v368, %v753
  %v836 = vmax.f32 %v370, %v755
  %v837 = vmax.f32 %v373, %v758
  %v838 = vmax.f32 %v375, %v760
  %v839 = vmax.f32 %v378, %v763
  %v840 = vmax.f32 %v380, %v765
  %v841 = vmax.f32 %v383, %v768
  %v842 = vmax.f32 %v385, %v770
  %v843 = vmax.f32 %v388, %v773
  %v844 = vmax.f32 %v390, %v775
  %v845 = vmax.f32 %v393, %v778
  %v846 = vmax.f32 %v395, %v780
  %v847 = vmax.f32 %v398, %v783
  %v848 = vmax.f32 %v400, %v785
  %v849 = vmax.f32 %v403, %v788
  %v850 = vmax.f32 %v405, %v790
  %v851 = vmax.f32 %v408, %v793
  %v852 = vmax.f32 %v410, %v795
  %v853 = vmax.f32 %v413, %v798
  %v854 = vmax.f32 %v415, %v800
  %v855 = vmax.f32 %v418, %v803
  %v856 = vmax.f32 %v420, %v805
  %s857 = scalar_lea.vmem %s0, 400
  %v858 = vld [vmem:[%s857] sm:$0xf]
  %v859 = vld [vmem:[%s857 + $0x4] sm:$0xf]
  %v860 = vld [vmem:[%s857 + $0x8] sm:$0xf]
  %v861 = vld [vmem:[%s857 + $0xc] sm:$0xf]
  %v862 = vld [vmem:[%s857 + $0x10] sm:$0xf]
  %v863 = vld [vmem:[%s857 + $0x14] sm:$0xf]
  %v864 = vld [vmem:[%s857 + $0x18] sm:$0xf]
  %v865 = vld [vmem:[%s857 + $0x1c] sm:$0xf]
  %v866 = vld [vmem:[%s857 + $0x20] sm:$0xf]
  %v867 = vld [vmem:[%s857 + $0x24] sm:$0xf]
  %v868 = vld [vmem:[%s857 + $0x28] sm:$0xf]
  %v869 = vld [vmem:[%s857 + $0x2c] sm:$0xf]
  %v870 = vld [vmem:[%s857 + $0x30] sm:$0xf]
  %v871 = vld [vmem:[%s857 + $0x34] sm:$0xf]
  %v872 = vld [vmem:[%s857 + $0x38] sm:$0xf]
  %v873 = vld [vmem:[%s857 + $0x3c] sm:$0xf]
  %v874 = vld [vmem:[%s857 + $0x40] sm:$0xf]
  %v875 = vld [vmem:[%s857 + $0x44] sm:$0xf]
  %v876 = vld [vmem:[%s857 + $0x48] sm:$0xf]
  %v877 = vld [vmem:[%s857 + $0x4c] sm:$0xf]
  %v878 = vld [vmem:[%s857 + $0x50] sm:$0xf]
  %v879 = vld [vmem:[%s857 + $0x54] sm:$0xf]
  %v880 = vld [vmem:[%s857 + $0x58] sm:$0xf]
  %v881 = vld [vmem:[%s857 + $0x5c] sm:$0xf]
  %v882 = vld [vmem:[%s857 + $0x60] sm:$0xf]
  %v883 = vld [vmem:[%s857 + $0x64] sm:$0xf]
  %v884 = vld [vmem:[%s857 + $0x68] sm:$0xf]
  %v885 = vld [vmem:[%s857 + $0x6c] sm:$0xf]
  %v886 = vld [vmem:[%s857 + $0x70] sm:$0xf]
  %v887 = vld [vmem:[%s857 + $0x74] sm:$0xf]
  %v888 = vld [vmem:[%s857 + $0x78] sm:$0xf]
  %v889 = vld [vmem:[%s857 + $0x7c] sm:$0xf]
  %v890 = vld [vmem:[%s857 + $0x80] sm:$0xf]
  %v891 = vld [vmem:[%s857 + $0x84] sm:$0xf]
  %v892 = vld [vmem:[%s857 + $0x88] sm:$0xf]
  %v893 = vld [vmem:[%s857 + $0x8c] sm:$0xf]
  %v894 = vld [vmem:[%s857 + $0x90] sm:$0xf]
  %v895 = vld [vmem:[%s857 + $0x94] sm:$0xf]
  %v896 = vld [vmem:[%s857 + $0x98] sm:$0xf]
  %v897 = vld [vmem:[%s857 + $0x9c] sm:$0xf]
  %v898 = vld [vmem:[%s857 + $0xa0] sm:$0xf]
  %v899 = vld [vmem:[%s857 + $0xa4] sm:$0xf]
  %v900 = vld [vmem:[%s857 + $0xa8] sm:$0xf]
  %v901 = vld [vmem:[%s857 + $0xac] sm:$0xf]
  %v902 = vld [vmem:[%s857 + $0xb0] sm:$0xf]
  %v903 = vld [vmem:[%s857 + $0xb4] sm:$0xf]
  %v904 = vld [vmem:[%s857 + $0xb8] sm:$0xf]
  %v905 = vld [vmem:[%s857 + $0xbc] sm:$0xf]
  %v906 = vld [vmem:[%s857 + $0xc0] sm:$0xf]
  %v907 = vld [vmem:[%s857 + $0xc4] sm:$0xf]
  %v958 = vunpack.c.l.b16 %v858
  %v959 = vunpack.c.l.b16 %v859
  %v960 = vunpack.c.l.b16 %v860
  %v961 = vunpack.c.l.b16 %v861
  %v962 = vunpack.c.l.b16 %v862
  %v963 = vunpack.c.l.b16 %v863
  %v964 = vunpack.c.l.b16 %v864
  %v965 = vunpack.c.l.b16 %v865
  %v966 = vunpack.c.l.b16 %v866
  %v967 = vunpack.c.l.b16 %v867
  %v968 = vunpack.c.l.b16 %v868
  %v969 = vunpack.c.l.b16 %v869
  %v970 = vunpack.c.l.b16 %v870
  %v971 = vunpack.c.l.b16 %v871
  %v972 = vunpack.c.l.b16 %v872
  %v973 = vunpack.c.l.b16 %v873
  %v974 = vunpack.c.l.b16 %v874
  %v975 = vunpack.c.l.b16 %v875
  %v976 = vunpack.c.l.b16 %v876
  %v977 = vunpack.c.l.b16 %v877
  %v978 = vunpack.c.l.b16 %v878
  %v979 = vunpack.c.l.b16 %v879
  %v980 = vunpack.c.l.b16 %v880
  %v981 = vunpack.c.l.b16 %v881
  %v982 = vunpack.c.l.b16 %v882
  %v983 = vunpack.c.l.b16 %v883
  %v984 = vunpack.c.l.b16 %v884
  %v985 = vunpack.c.l.b16 %v885
  %v986 = vunpack.c.l.b16 %v886
  %v987 = vunpack.c.l.b16 %v887
  %v988 = vunpack.c.l.b16 %v888
  %v989 = vunpack.c.l.b16 %v889
  %v990 = vunpack.c.l.b16 %v890
  %v991 = vunpack.c.l.b16 %v891
  %v992 = vunpack.c.l.b16 %v892
  %v993 = vunpack.c.l.b16 %v893
  %v994 = vunpack.c.l.b16 %v894
  %v995 = vunpack.c.l.b16 %v895
  %v996 = vunpack.c.l.b16 %v896
  %v997 = vunpack.c.l.b16 %v897
  %v998 = vunpack.c.l.b16 %v898
  %v999 = vunpack.c.l.b16 %v899
  %v1000 = vunpack.c.l.b16 %v900
  %v1001 = vunpack.c.l.b16 %v901
  %v1002 = vunpack.c.l.b16 %v902
  %v1003 = vunpack.c.l.b16 %v903
  %v1004 = vunpack.c.l.b16 %v904
  %v1005 = vunpack.c.l.b16 %v905
  %v1006 = vunpack.c.l.b16 %v906
  %v1007 = vunpack.c.l.b16 %v907
  %v1008 = vpack.c.b16 %v959, %v958
  %v1009 = vpack.c.b16 %v961, %v960
  %v1010 = vpack.c.b16 %v963, %v962
  %v1011 = vpack.c.b16 %v965, %v964
  %v1012 = vpack.c.b16 %v967, %v966
  %v1013 = vpack.c.b16 %v969, %v968
  %v1014 = vpack.c.b16 %v971, %v970
  %v1015 = vpack.c.b16 %v973, %v972
  %v1016 = vpack.c.b16 %v975, %v974
  %v1017 = vpack.c.b16 %v977, %v976
  %v1018 = vpack.c.b16 %v979, %v978
  %v1019 = vpack.c.b16 %v981, %v980
  %v1020 = vpack.c.b16 %v983, %v982
  %v1021 = vpack.c.b16 %v985, %v984
  %v1022 = vpack.c.b16 %v987, %v986
  %v1023 = vpack.c.b16 %v989, %v988
  %v1024 = vpack.c.b16 %v991, %v990
  %v1025 = vpack.c.b16 %v993, %v992
  %v1026 = vpack.c.b16 %v995, %v994
  %v1027 = vpack.c.b16 %v997, %v996
  %v1028 = vpack.c.b16 %v999, %v998
  %v1029 = vpack.c.b16 %v1001, %v1000
  %v1030 = vpack.c.b16 %v1003, %v1002
  %v1031 = vpack.c.b16 %v1005, %v1004
  %v1032 = vpack.c.b16 %v1007, %v1006
  %v1034 = vsel %vm205, %v1008, 0
  %v1037 = vsel %vm205, %v1009, 0
  %v1040 = vsel %vm205, %v1010, 0
  %v1043 = vsel %vm205, %v1011, 0
  %v1046 = vsel %vm205, %v1012, 0
  %v1049 = vsel %vm205, %v1013, 0
  %v1052 = vsel %vm205, %v1014, 0
  %v1055 = vsel %vm205, %v1015, 0
  %v1058 = vsel %vm205, %v1016, 0
  %v1061 = vsel %vm205, %v1017, 0
  %v1064 = vsel %vm205, %v1018, 0
  %v1067 = vsel %vm205, %v1019, 0
  %v1070 = vsel %vm205, %v1020, 0
  %v1073 = vsel %vm205, %v1021, 0
  %v1076 = vsel %vm205, %v1022, 0
  %v1079 = vsel %vm205, %v1023, 0
  %v1082 = vsel %vm205, %v1024, 0
  %v1085 = vsel %vm205, %v1025, 0
  %v1088 = vsel %vm205, %v1026, 0
  %v1091 = vsel %vm205, %v1027, 0
  %v1094 = vsel %vm205, %v1028, 0
  %v1097 = vsel %vm205, %v1029, 0
  %v1100 = vsel %vm205, %v1030, 0
  %v1103 = vsel %vm205, %v1031, 0
  %v1106 = vsel %vm205, %v1032, 0
  %1108 = vmatpush.bf16.msra.mxu0 0
  %1109 = vmatpush.bf16.msra.mxu0 0
  %1110 = vmatpush.bf16.msra.mxu0 0
  %1111 = vmatpush.bf16.msra.mxu0 0
  %1112 = vmatpush.bf16.msra.mxu0 0
  %1113 = vmatpush.bf16.msra.mxu0 0
  %1114 = vmatpush.bf16.msra.mxu0 %v286
  %1115 = vmatpush.bf16.msra.mxu0 %v202
  %1116 = vmatmul.bf16.gmra.mxu0 %v1034
  %v1117 = vpop.f32.mrf.mxu0
  %v1118 = vadd.f32 0.0, %v1117
  %v1119 = vpop.f32.mrf.mxu0
  %v1120 = vadd.f32 0.0, %v1119
  %1121 = vmatmul.bf16.gmra.mxu0 %v1037
  %v1122 = vpop.f32.mrf.mxu0
  %v1123 = vadd.f32 0.0, %v1122
  %v1124 = vpop.f32.mrf.mxu0
  %v1125 = vadd.f32 0.0, %v1124
  %1126 = vmatmul.bf16.gmra.mxu0 %v1040
  %v1127 = vpop.f32.mrf.mxu0
  %v1128 = vadd.f32 0.0, %v1127
  %v1129 = vpop.f32.mrf.mxu0
  %v1130 = vadd.f32 0.0, %v1129
  %1131 = vmatmul.bf16.gmra.mxu0 %v1043
  %v1132 = vpop.f32.mrf.mxu0
  %v1133 = vadd.f32 0.0, %v1132
  %v1134 = vpop.f32.mrf.mxu0
  %v1135 = vadd.f32 0.0, %v1134
  %1136 = vmatmul.bf16.gmra.mxu0 %v1046
  %v1137 = vpop.f32.mrf.mxu0
  %v1138 = vadd.f32 0.0, %v1137
  %v1139 = vpop.f32.mrf.mxu0
  %v1140 = vadd.f32 0.0, %v1139
  %1141 = vmatmul.bf16.gmra.mxu0 %v1049
  %v1142 = vpop.f32.mrf.mxu0
  %v1143 = vadd.f32 0.0, %v1142
  %v1144 = vpop.f32.mrf.mxu0
  %v1145 = vadd.f32 0.0, %v1144
  %1146 = vmatmul.bf16.gmra.mxu0 %v1052
  %v1147 = vpop.f32.mrf.mxu0
  %v1148 = vadd.f32 0.0, %v1147
  %v1149 = vpop.f32.mrf.mxu0
  %v1150 = vadd.f32 0.0, %v1149
  %1151 = vmatmul.bf16.gmra.mxu0 %v1055
  %v1152 = vpop.f32.mrf.mxu0
  %v1153 = vadd.f32 0.0, %v1152
  %v1154 = vpop.f32.mrf.mxu0
  %v1155 = vadd.f32 0.0, %v1154
  %1156 = vmatmul.bf16.gmra.mxu0 %v1058
  %v1157 = vpop.f32.mrf.mxu0
  %v1158 = vadd.f32 0.0, %v1157
  %v1159 = vpop.f32.mrf.mxu0
  %v1160 = vadd.f32 0.0, %v1159
  %1161 = vmatmul.bf16.gmra.mxu0 %v1061
  %v1162 = vpop.f32.mrf.mxu0
  %v1163 = vadd.f32 0.0, %v1162
  %v1164 = vpop.f32.mrf.mxu0
  %v1165 = vadd.f32 0.0, %v1164
  %1166 = vmatmul.bf16.gmra.mxu0 %v1064
  %v1167 = vpop.f32.mrf.mxu0
  %v1168 = vadd.f32 0.0, %v1167
  %v1169 = vpop.f32.mrf.mxu0
  %v1170 = vadd.f32 0.0, %v1169
  %1171 = vmatmul.bf16.gmra.mxu0 %v1067
  %v1172 = vpop.f32.mrf.mxu0
  %v1173 = vadd.f32 0.0, %v1172
  %v1174 = vpop.f32.mrf.mxu0
  %v1175 = vadd.f32 0.0, %v1174
  %1176 = vmatmul.bf16.gmra.mxu0 %v1070
  %v1177 = vpop.f32.mrf.mxu0
  %v1178 = vadd.f32 0.0, %v1177
  %v1179 = vpop.f32.mrf.mxu0
  %v1180 = vadd.f32 0.0, %v1179
  %1181 = vmatmul.bf16.gmra.mxu0 %v1073
  %v1182 = vpop.f32.mrf.mxu0
  %v1183 = vadd.f32 0.0, %v1182
  %v1184 = vpop.f32.mrf.mxu0
  %v1185 = vadd.f32 0.0, %v1184
  %1186 = vmatmul.bf16.gmra.mxu0 %v1076
  %v1187 = vpop.f32.mrf.mxu0
  %v1188 = vadd.f32 0.0, %v1187
  %v1189 = vpop.f32.mrf.mxu0
  %v1190 = vadd.f32 0.0, %v1189
  %1191 = vmatmul.bf16.gmra.mxu0 %v1079
  %v1192 = vpop.f32.mrf.mxu0
  %v1193 = vadd.f32 0.0, %v1192
  %v1194 = vpop.f32.mrf.mxu0
  %v1195 = vadd.f32 0.0, %v1194
  %1196 = vmatmul.bf16.gmra.mxu0 %v1082
  %v1197 = vpop.f32.mrf.mxu0
  %v1198 = vadd.f32 0.0, %v1197
  %v1199 = vpop.f32.mrf.mxu0
  %v1200 = vadd.f32 0.0, %v1199
  %1201 = vmatmul.bf16.gmra.mxu0 %v1085
  %v1202 = vpop.f32.mrf.mxu0
  %v1203 = vadd.f32 0.0, %v1202
  %v1204 = vpop.f32.mrf.mxu0
  %v1205 = vadd.f32 0.0, %v1204
  %1206 = vmatmul.bf16.gmra.mxu0 %v1088
  %v1207 = vpop.f32.mrf.mxu0
  %v1208 = vadd.f32 0.0, %v1207
  %v1209 = vpop.f32.mrf.mxu0
  %v1210 = vadd.f32 0.0, %v1209
  %1211 = vmatmul.bf16.gmra.mxu0 %v1091
  %v1212 = vpop.f32.mrf.mxu0
  %v1213 = vadd.f32 0.0, %v1212
  %v1214 = vpop.f32.mrf.mxu0
  %v1215 = vadd.f32 0.0, %v1214
  %1216 = vmatmul.bf16.gmra.mxu0 %v1094
  %v1217 = vpop.f32.mrf.mxu0
  %v1218 = vadd.f32 0.0, %v1217
  %v1219 = vpop.f32.mrf.mxu0
  %v1220 = vadd.f32 0.0, %v1219
  %1221 = vmatmul.bf16.gmra.mxu0 %v1097
  %v1222 = vpop.f32.mrf.mxu0
  %v1223 = vadd.f32 0.0, %v1222
  %v1224 = vpop.f32.mrf.mxu0
  %v1225 = vadd.f32 0.0, %v1224
  %1226 = vmatmul.bf16.gmra.mxu0 %v1100
  %v1227 = vpop.f32.mrf.mxu0
  %v1228 = vadd.f32 0.0, %v1227
  %v1229 = vpop.f32.mrf.mxu0
  %v1230 = vadd.f32 0.0, %v1229
  %1231 = vmatmul.bf16.gmra.mxu0 %v1103
  %v1232 = vpop.f32.mrf.mxu0
  %v1233 = vadd.f32 0.0, %v1232
  %v1234 = vpop.f32.mrf.mxu0
  %v1235 = vadd.f32 0.0, %v1234
  %1236 = vmatmul.bf16.gmra.mxu0 %v1106
  %v1237 = vpop.f32.mrf.mxu0
  %v1238 = vadd.f32 0.0, %v1237
  %v1239 = vpop.f32.mrf.mxu0
  %v1240 = vadd.f32 0.0, %v1239
  %1241 = vdwg.mxu0
  %v1242 = vmax.f32 %v807, %v1118
  %v1243 = vmax.f32 %v808, %v1120
  %v1244 = vmax.f32 %v809, %v1123
  %v1245 = vmax.f32 %v810, %v1125
  %v1246 = vmax.f32 %v811, %v1128
  %v1247 = vmax.f32 %v812, %v1130
  %v1248 = vmax.f32 %v813, %v1133
  %v1249 = vmax.f32 %v814, %v1135
  %v1250 = vmax.f32 %v815, %v1138
  %v1251 = vmax.f32 %v816, %v1140
  %v1252 = vmax.f32 %v817, %v1143
  %v1253 = vmax.f32 %v818, %v1145
  %v1254 = vmax.f32 %v819, %v1148
  %v1255 = vmax.f32 %v820, %v1150
  %v1256 = vmax.f32 %v821, %v1153
  %v1257 = vmax.f32 %v822, %v1155
  %v1258 = vmax.f32 %v823, %v1158
  %v1259 = vmax.f32 %v824, %v1160
  %v1260 = vmax.f32 %v825, %v1163
  %v1261 = vmax.f32 %v826, %v1165
  %v1262 = vmax.f32 %v827, %v1168
  %v1263 = vmax.f32 %v828, %v1170
  %v1264 = vmax.f32 %v829, %v1173
  %v1265 = vmax.f32 %v830, %v1175
  %v1266 = vmax.f32 %v831, %v1178
  %v1267 = vmax.f32 %v832, %v1180
  %v1268 = vmax.f32 %v833, %v1183
  %v1269 = vmax.f32 %v834, %v1185
  %v1270 = vmax.f32 %v835, %v1188
  %v1271 = vmax.f32 %v836, %v1190
  %v1272 = vmax.f32 %v837, %v1193
  %v1273 = vmax.f32 %v838, %v1195
  %v1274 = vmax.f32 %v839, %v1198
  %v1275 = vmax.f32 %v840, %v1200
  %v1276 = vmax.f32 %v841, %v1203
  %v1277 = vmax.f32 %v842, %v1205
  %v1278 = vmax.f32 %v843, %v1208
  %v1279 = vmax.f32 %v844, %v1210
  %v1280 = vmax.f32 %v845, %v1213
  %v1281 = vmax.f32 %v846, %v1215
  %v1282 = vmax.f32 %v847, %v1218
  %v1283 = vmax.f32 %v848, %v1220
  %v1284 = vmax.f32 %v849, %v1223
  %v1285 = vmax.f32 %v850, %v1225
  %v1286 = vmax.f32 %v851, %v1228
  %v1287 = vmax.f32 %v852, %v1230
  %v1288 = vmax.f32 %v853, %v1233
  %v1289 = vmax.f32 %v854, %v1235
  %v1290 = vmax.f32 %v855, %v1238
  %v1291 = vmax.f32 %v856, %v1240
  %s1292 = scalar_lea.vmem %s0, 600
  %v1293 = vld [vmem:[%s1292] sm:$0xf]
  %v1294 = vld [vmem:[%s1292 + $0x4] sm:$0xf]
  %v1295 = vld [vmem:[%s1292 + $0x8] sm:$0xf]
  %v1296 = vld [vmem:[%s1292 + $0xc] sm:$0xf]
  %v1297 = vld [vmem:[%s1292 + $0x10] sm:$0xf]
  %v1298 = vld [vmem:[%s1292 + $0x14] sm:$0xf]
  %v1299 = vld [vmem:[%s1292 + $0x18] sm:$0xf]
  %v1300 = vld [vmem:[%s1292 + $0x1c] sm:$0xf]
  %v1301 = vld [vmem:[%s1292 + $0x20] sm:$0xf]
  %v1302 = vld [vmem:[%s1292 + $0x24] sm:$0xf]
  %v1303 = vld [vmem:[%s1292 + $0x28] sm:$0xf]
  %v1304 = vld [vmem:[%s1292 + $0x2c] sm:$0xf]
  %v1305 = vld [vmem:[%s1292 + $0x30] sm:$0xf]
  %v1306 = vld [vmem:[%s1292 + $0x34] sm:$0xf]
  %v1307 = vld [vmem:[%s1292 + $0x38] sm:$0xf]
  %v1308 = vld [vmem:[%s1292 + $0x3c] sm:$0xf]
  %v1309 = vld [vmem:[%s1292 + $0x40] sm:$0xf]
  %v1310 = vld [vmem:[%s1292 + $0x44] sm:$0xf]
  %v1311 = vld [vmem:[%s1292 + $0x48] sm:$0xf]
  %v1312 = vld [vmem:[%s1292 + $0x4c] sm:$0xf]
  %v1313 = vld [vmem:[%s1292 + $0x50] sm:$0xf]
  %v1314 = vld [vmem:[%s1292 + $0x54] sm:$0xf]
  %v1315 = vld [vmem:[%s1292 + $0x58] sm:$0xf]
  %v1316 = vld [vmem:[%s1292 + $0x5c] sm:$0xf]
  %v1317 = vld [vmem:[%s1292 + $0x60] sm:$0xf]
  %v1318 = vld [vmem:[%s1292 + $0x64] sm:$0xf]
  %v1319 = vld [vmem:[%s1292 + $0x68] sm:$0xf]
  %v1320 = vld [vmem:[%s1292 + $0x6c] sm:$0xf]
  %v1321 = vld [vmem:[%s1292 + $0x70] sm:$0xf]
  %v1322 = vld [vmem:[%s1292 + $0x74] sm:$0xf]
  %v1323 = vld [vmem:[%s1292 + $0x78] sm:$0xf]
  %v1324 = vld [vmem:[%s1292 + $0x7c] sm:$0xf]
  %v1325 = vld [vmem:[%s1292 + $0x80] sm:$0xf]
  %v1326 = vld [vmem:[%s1292 + $0x84] sm:$0xf]
  %v1327 = vld [vmem:[%s1292 + $0x88] sm:$0xf]
  %v1328 = vld [vmem:[%s1292 + $0x8c] sm:$0xf]
  %v1329 = vld [vmem:[%s1292 + $0x90] sm:$0xf]
  %v1330 = vld [vmem:[%s1292 + $0x94] sm:$0xf]
  %v1331 = vld [vmem:[%s1292 + $0x98] sm:$0xf]
  %v1332 = vld [vmem:[%s1292 + $0x9c] sm:$0xf]
  %v1333 = vld [vmem:[%s1292 + $0xa0] sm:$0xf]
  %v1334 = vld [vmem:[%s1292 + $0xa4] sm:$0xf]
  %v1335 = vld [vmem:[%s1292 + $0xa8] sm:$0xf]
  %v1336 = vld [vmem:[%s1292 + $0xac] sm:$0xf]
  %v1337 = vld [vmem:[%s1292 + $0xb0] sm:$0xf]
  %v1338 = vld [vmem:[%s1292 + $0xb4] sm:$0xf]
  %v1339 = vld [vmem:[%s1292 + $0xb8] sm:$0xf]
  %v1340 = vld [vmem:[%s1292 + $0xbc] sm:$0xf]
  %v1341 = vld [vmem:[%s1292 + $0xc0] sm:$0xf]
  %v1342 = vld [vmem:[%s1292 + $0xc4] sm:$0xf]
  %v1393 = vunpack.c.l.b16 %v1293
  %v1394 = vunpack.c.l.b16 %v1294
  %v1395 = vunpack.c.l.b16 %v1295
  %v1396 = vunpack.c.l.b16 %v1296
  %v1397 = vunpack.c.l.b16 %v1297
  %v1398 = vunpack.c.l.b16 %v1298
  %v1399 = vunpack.c.l.b16 %v1299
  %v1400 = vunpack.c.l.b16 %v1300
  %v1401 = vunpack.c.l.b16 %v1301
  %v1402 = vunpack.c.l.b16 %v1302
  %v1403 = vunpack.c.l.b16 %v1303
  %v1404 = vunpack.c.l.b16 %v1304
  %v1405 = vunpack.c.l.b16 %v1305
  %v1406 = vunpack.c.l.b16 %v1306
  %v1407 = vunpack.c.l.b16 %v1307
  %v1408 = vunpack.c.l.b16 %v1308
  %v1409 = vunpack.c.l.b16 %v1309
  %v1410 = vunpack.c.l.b16 %v1310
  %v1411 = vunpack.c.l.b16 %v1311
  %v1412 = vunpack.c.l.b16 %v1312
  %v1413 = vunpack.c.l.b16 %v1313
  %v1414 = vunpack.c.l.b16 %v1314
  %v1415 = vunpack.c.l.b16 %v1315
  %v1416 = vunpack.c.l.b16 %v1316
  %v1417 = vunpack.c.l.b16 %v1317
  %v1418 = vunpack.c.l.b16 %v1318
  %v1419 = vunpack.c.l.b16 %v1319
  %v1420 = vunpack.c.l.b16 %v1320
  %v1421 = vunpack.c.l.b16 %v1321
  %v1422 = vunpack.c.l.b16 %v1322
  %v1423 = vunpack.c.l.b16 %v1323
  %v1424 = vunpack.c.l.b16 %v1324
  %v1425 = vunpack.c.l.b16 %v1325
  %v1426 = vunpack.c.l.b16 %v1326
  %v1427 = vunpack.c.l.b16 %v1327
  %v1428 = vunpack.c.l.b16 %v1328
  %v1429 = vunpack.c.l.b16 %v1329
  %v1430 = vunpack.c.l.b16 %v1330
  %v1431 = vunpack.c.l.b16 %v1331
  %v1432 = vunpack.c.l.b16 %v1332
  %v1433 = vunpack.c.l.b16 %v1333
  %v1434 = vunpack.c.l.b16 %v1334
  %v1435 = vunpack.c.l.b16 %v1335
  %v1436 = vunpack.c.l.b16 %v1336
  %v1437 = vunpack.c.l.b16 %v1337
  %v1438 = vunpack.c.l.b16 %v1338
  %v1439 = vunpack.c.l.b16 %v1339
  %v1440 = vunpack.c.l.b16 %v1340
  %v1441 = vunpack.c.l.b16 %v1341
  %v1442 = vunpack.c.l.b16 %v1342
  %v1443 = vpack.c.b16 %v1394, %v1393
  %v1444 = vpack.c.b16 %v1396, %v1395
  %v1445 = vpack.c.b16 %v1398, %v1397
  %v1446 = vpack.c.b16 %v1400, %v1399
  %v1447 = vpack.c.b16 %v1402, %v1401
  %v1448 = vpack.c.b16 %v1404, %v1403
  %v1449 = vpack.c.b16 %v1406, %v1405
  %v1450 = vpack.c.b16 %v1408, %v1407
  %v1451 = vpack.c.b16 %v1410, %v1409
  %v1452 = vpack.c.b16 %v1412, %v1411
  %v1453 = vpack.c.b16 %v1414, %v1413
  %v1454 = vpack.c.b16 %v1416, %v1415
  %v1455 = vpack.c.b16 %v1418, %v1417
  %v1456 = vpack.c.b16 %v1420, %v1419
  %v1457 = vpack.c.b16 %v1422, %v1421
  %v1458 = vpack.c.b16 %v1424, %v1423
  %v1459 = vpack.c.b16 %v1426, %v1425
  %v1460 = vpack.c.b16 %v1428, %v1427
  %v1461 = vpack.c.b16 %v1430, %v1429
  %v1462 = vpack.c.b16 %v1432, %v1431
  %v1463 = vpack.c.b16 %v1434, %v1433
  %v1464 = vpack.c.b16 %v1436, %v1435
  %v1465 = vpack.c.b16 %v1438, %v1437
  %v1466 = vpack.c.b16 %v1440, %v1439
  %v1467 = vpack.c.b16 %v1442, %v1441
  %v1469 = vsel %vm205, %v1443, 0
  %v1472 = vsel %vm205, %v1444, 0
  %v1475 = vsel %vm205, %v1445, 0
  %v1478 = vsel %vm205, %v1446, 0
  %v1481 = vsel %vm205, %v1447, 0
  %v1484 = vsel %vm205, %v1448, 0
  %v1487 = vsel %vm205, %v1449, 0
  %v1490 = vsel %vm205, %v1450, 0
  %v1493 = vsel %vm205, %v1451, 0
  %v1496 = vsel %vm205, %v1452, 0
  %v1499 = vsel %vm205, %v1453, 0
  %v1502 = vsel %vm205, %v1454, 0
  %v1505 = vsel %vm205, %v1455, 0
  %v1508 = vsel %vm205, %v1456, 0
  %v1511 = vsel %vm205, %v1457, 0
  %v1514 = vsel %vm205, %v1458, 0
  %v1517 = vsel %vm205, %v1459, 0
  %v1520 = vsel %vm205, %v1460, 0
  %v1523 = vsel %vm205, %v1461, 0
  %v1526 = vsel %vm205, %v1462, 0
  %v1529 = vsel %vm205, %v1463, 0
  %v1532 = vsel %vm205, %v1464, 0
  %v1535 = vsel %vm205, %v1465, 0
  %v1538 = vsel %vm205, %v1466, 0
  %v1541 = vsel %vm205, %v1467, 0
  %1543 = vmatpush.bf16.msra.mxu0 0
  %1544 = vmatpush.bf16.msra.mxu0 0
  %1545 = vmatpush.bf16.msra.mxu0 0
  %1546 = vmatpush.bf16.msra.mxu0 0
  %1547 = vmatpush.bf16.msra.mxu0 0
  %1548 = vmatpush.bf16.msra.mxu0 0
  %1549 = vmatpush.bf16.msra.mxu0 %v286
  %1550 = vmatpush.bf16.msra.mxu0 %v202
  %1551 = vmatmul.bf16.gmra.mxu0 %v1469
  %v1552 = vpop.f32.mrf.mxu0
  %v1553 = vadd.f32 0.0, %v1552
  %v1554 = vpop.f32.mrf.mxu0
  %v1555 = vadd.f32 0.0, %v1554
  %1556 = vmatmul.bf16.gmra.mxu0 %v1472
  %v1557 = vpop.f32.mrf.mxu0
  %v1558 = vadd.f32 0.0, %v1557
  %v1559 = vpop.f32.mrf.mxu0
  %v1560 = vadd.f32 0.0, %v1559
  %1561 = vmatmul.bf16.gmra.mxu0 %v1475
  %v1562 = vpop.f32.mrf.mxu0
  %v1563 = vadd.f32 0.0, %v1562
  %v1564 = vpop.f32.mrf.mxu0
  %v1565 = vadd.f32 0.0, %v1564
  %1566 = vmatmul.bf16.gmra.mxu0 %v1478
  %v1567 = vpop.f32.mrf.mxu0
  %v1568 = vadd.f32 0.0, %v1567
  %v1569 = vpop.f32.mrf.mxu0
  %v1570 = vadd.f32 0.0, %v1569
  %1571 = vmatmul.bf16.gmra.mxu0 %v1481
  %v1572 = vpop.f32.mrf.mxu0
  %v1573 = vadd.f32 0.0, %v1572
  %v1574 = vpop.f32.mrf.mxu0
  %v1575 = vadd.f32 0.0, %v1574
  %1576 = vmatmul.bf16.gmra.mxu0 %v1484
  %v1577 = vpop.f32.mrf.mxu0
  %v1578 = vadd.f32 0.0, %v1577
  %v1579 = vpop.f32.mrf.mxu0
  %v1580 = vadd.f32 0.0, %v1579
  %1581 = vmatmul.bf16.gmra.mxu0 %v1487
  %v1582 = vpop.f32.mrf.mxu0
  %v1583 = vadd.f32 0.0, %v1582
  %v1584 = vpop.f32.mrf.mxu0
  %v1585 = vadd.f32 0.0, %v1584
  %1586 = vmatmul.bf16.gmra.mxu0 %v1490
  %v1587 = vpop.f32.mrf.mxu0
  %v1588 = vadd.f32 0.0, %v1587
  %v1589 = vpop.f32.mrf.mxu0
  %v1590 = vadd.f32 0.0, %v1589
  %1591 = vmatmul.bf16.gmra.mxu0 %v1493
  %v1592 = vpop.f32.mrf.mxu0
  %v1593 = vadd.f32 0.0, %v1592
  %v1594 = vpop.f32.mrf.mxu0
  %v1595 = vadd.f32 0.0, %v1594
  %1596 = vmatmul.bf16.gmra.mxu0 %v1496
  %v1597 = vpop.f32.mrf.mxu0
  %v1598 = vadd.f32 0.0, %v1597
  %v1599 = vpop.f32.mrf.mxu0
  %v1600 = vadd.f32 0.0, %v1599
  %1601 = vmatmul.bf16.gmra.mxu0 %v1499
  %v1602 = vpop.f32.mrf.mxu0
  %v1603 = vadd.f32 0.0, %v1602
  %v1604 = vpop.f32.mrf.mxu0
  %v1605 = vadd.f32 0.0, %v1604
  %1606 = vmatmul.bf16.gmra.mxu0 %v1502
  %v1607 = vpop.f32.mrf.mxu0
  %v1608 = vadd.f32 0.0, %v1607
  %v1609 = vpop.f32.mrf.mxu0
  %v1610 = vadd.f32 0.0, %v1609
  %1611 = vmatmul.bf16.gmra.mxu0 %v1505
  %v1612 = vpop.f32.mrf.mxu0
  %v1613 = vadd.f32 0.0, %v1612
  %v1614 = vpop.f32.mrf.mxu0
  %v1615 = vadd.f32 0.0, %v1614
  %1616 = vmatmul.bf16.gmra.mxu0 %v1508
  %v1617 = vpop.f32.mrf.mxu0
  %v1618 = vadd.f32 0.0, %v1617
  %v1619 = vpop.f32.mrf.mxu0
  %v1620 = vadd.f32 0.0, %v1619
  %1621 = vmatmul.bf16.gmra.mxu0 %v1511
  %v1622 = vpop.f32.mrf.mxu0
  %v1623 = vadd.f32 0.0, %v1622
  %v1624 = vpop.f32.mrf.mxu0
  %v1625 = vadd.f32 0.0, %v1624
  %1626 = vmatmul.bf16.gmra.mxu0 %v1514
  %v1627 = vpop.f32.mrf.mxu0
  %v1628 = vadd.f32 0.0, %v1627
  %v1629 = vpop.f32.mrf.mxu0
  %v1630 = vadd.f32 0.0, %v1629
  %1631 = vmatmul.bf16.gmra.mxu0 %v1517
  %v1632 = vpop.f32.mrf.mxu0
  %v1633 = vadd.f32 0.0, %v1632
  %v1634 = vpop.f32.mrf.mxu0
  %v1635 = vadd.f32 0.0, %v1634
  %1636 = vmatmul.bf16.gmra.mxu0 %v1520
  %v1637 = vpop.f32.mrf.mxu0
  %v1638 = vadd.f32 0.0, %v1637
  %v1639 = vpop.f32.mrf.mxu0
  %v1640 = vadd.f32 0.0, %v1639
  %1641 = vmatmul.bf16.gmra.mxu0 %v1523
  %v1642 = vpop.f32.mrf.mxu0
  %v1643 = vadd.f32 0.0, %v1642
  %v1644 = vpop.f32.mrf.mxu0
  %v1645 = vadd.f32 0.0, %v1644
  %1646 = vmatmul.bf16.gmra.mxu0 %v1526
  %v1647 = vpop.f32.mrf.mxu0
  %v1648 = vadd.f32 0.0, %v1647
  %v1649 = vpop.f32.mrf.mxu0
  %v1650 = vadd.f32 0.0, %v1649
  %1651 = vmatmul.bf16.gmra.mxu0 %v1529
  %v1652 = vpop.f32.mrf.mxu0
  %v1653 = vadd.f32 0.0, %v1652
  %v1654 = vpop.f32.mrf.mxu0
  %v1655 = vadd.f32 0.0, %v1654
  %1656 = vmatmul.bf16.gmra.mxu0 %v1532
  %v1657 = vpop.f32.mrf.mxu0
  %v1658 = vadd.f32 0.0, %v1657
  %v1659 = vpop.f32.mrf.mxu0
  %v1660 = vadd.f32 0.0, %v1659
  %1661 = vmatmul.bf16.gmra.mxu0 %v1535
  %v1662 = vpop.f32.mrf.mxu0
  %v1663 = vadd.f32 0.0, %v1662
  %v1664 = vpop.f32.mrf.mxu0
  %v1665 = vadd.f32 0.0, %v1664
  %1666 = vmatmul.bf16.gmra.mxu0 %v1538
  %v1667 = vpop.f32.mrf.mxu0
  %v1668 = vadd.f32 0.0, %v1667
  %v1669 = vpop.f32.mrf.mxu0
  %v1670 = vadd.f32 0.0, %v1669
  %1671 = vmatmul.bf16.gmra.mxu0 %v1541
  %v1672 = vpop.f32.mrf.mxu0
  %v1673 = vadd.f32 0.0, %v1672
  %v1674 = vpop.f32.mrf.mxu0
  %v1675 = vadd.f32 0.0, %v1674
  %1676 = vdwg.mxu0
  %v1677 = vmax.f32 %v1242, %v1553
  %v1678 = vmax.f32 %v1243, %v1555
  %v1679 = vmax.f32 %v1244, %v1558
  %v1680 = vmax.f32 %v1245, %v1560
  %v1681 = vmax.f32 %v1246, %v1563
  %v1682 = vmax.f32 %v1247, %v1565
  %v1683 = vmax.f32 %v1248, %v1568
  %v1684 = vmax.f32 %v1249, %v1570
  %v1685 = vmax.f32 %v1250, %v1573
  %v1686 = vmax.f32 %v1251, %v1575
  %v1687 = vmax.f32 %v1252, %v1578
  %v1688 = vmax.f32 %v1253, %v1580
  %v1689 = vmax.f32 %v1254, %v1583
  %v1690 = vmax.f32 %v1255, %v1585
  %v1691 = vmax.f32 %v1256, %v1588
  %v1692 = vmax.f32 %v1257, %v1590
  %v1693 = vmax.f32 %v1258, %v1593
  %v1694 = vmax.f32 %v1259, %v1595
  %v1695 = vmax.f32 %v1260, %v1598
  %v1696 = vmax.f32 %v1261, %v1600
  %v1697 = vmax.f32 %v1262, %v1603
  %v1698 = vmax.f32 %v1263, %v1605
  %v1699 = vmax.f32 %v1264, %v1608
  %v1700 = vmax.f32 %v1265, %v1610
  %v1701 = vmax.f32 %v1266, %v1613
  %v1702 = vmax.f32 %v1267, %v1615
  %v1703 = vmax.f32 %v1268, %v1618
  %v1704 = vmax.f32 %v1269, %v1620
  %v1705 = vmax.f32 %v1270, %v1623
  %v1706 = vmax.f32 %v1271, %v1625
  %v1707 = vmax.f32 %v1272, %v1628
  %v1708 = vmax.f32 %v1273, %v1630
  %v1709 = vmax.f32 %v1274, %v1633
  %v1710 = vmax.f32 %v1275, %v1635
  %v1711 = vmax.f32 %v1276, %v1638
  %v1712 = vmax.f32 %v1277, %v1640
  %v1713 = vmax.f32 %v1278, %v1643
  %v1714 = vmax.f32 %v1279, %v1645
  %v1715 = vmax.f32 %v1280, %v1648
  %v1716 = vmax.f32 %v1281, %v1650
  %v1717 = vmax.f32 %v1282, %v1653
  %v1718 = vmax.f32 %v1283, %v1655
  %v1719 = vmax.f32 %v1284, %v1658
  %v1720 = vmax.f32 %v1285, %v1660
  %v1721 = vmax.f32 %v1286, %v1663
  %v1722 = vmax.f32 %v1287, %v1665
  %v1723 = vmax.f32 %v1288, %v1668
  %v1724 = vmax.f32 %v1289, %v1670
  %v1725 = vmax.f32 %v1290, %v1673
  %v1726 = vmax.f32 %v1291, %v1675
  %v1727 = vld [vmem:[%s2] sm:$0x1]
  %v1729 = vperm.slane %v1727, 0
  %v1731 = vadd.f32 %v1677, %v1729
  %v1732 = vadd.f32 %v1678, %v1729
  %v1733 = vadd.f32 %v1679, %v1729
  %v1734 = vadd.f32 %v1680, %v1729
  %v1735 = vadd.f32 %v1681, %v1729
  %v1736 = vadd.f32 %v1682, %v1729
  %v1737 = vadd.f32 %v1683, %v1729
  %v1738 = vadd.f32 %v1684, %v1729
  %v1739 = vadd.f32 %v1685, %v1729
  %v1740 = vadd.f32 %v1686, %v1729
  %v1741 = vadd.f32 %v1687, %v1729
  %v1742 = vadd.f32 %v1688, %v1729
  %v1743 = vadd.f32 %v1689, %v1729
  %v1744 = vadd.f32 %v1690, %v1729
  %v1745 = vadd.f32 %v1691, %v1729
  %v1746 = vadd.f32 %v1692, %v1729
  %v1747 = vadd.f32 %v1693, %v1729
  %v1748 = vadd.f32 %v1694, %v1729
  %v1749 = vadd.f32 %v1695, %v1729
  %v1750 = vadd.f32 %v1696, %v1729
  %v1751 = vadd.f32 %v1697, %v1729
  %v1752 = vadd.f32 %v1698, %v1729
  %v1753 = vadd.f32 %v1699, %v1729
  %v1754 = vadd.f32 %v1700, %v1729
  %v1755 = vadd.f32 %v1701, %v1729
  %v1756 = vadd.f32 %v1702, %v1729
  %v1757 = vadd.f32 %v1703, %v1729
  %v1758 = vadd.f32 %v1704, %v1729
  %v1759 = vadd.f32 %v1705, %v1729
  %v1760 = vadd.f32 %v1706, %v1729
  %v1761 = vadd.f32 %v1707, %v1729
  %v1762 = vadd.f32 %v1708, %v1729
  %v1763 = vadd.f32 %v1709, %v1729
  %v1764 = vadd.f32 %v1710, %v1729
  %v1765 = vadd.f32 %v1711, %v1729
  %v1766 = vadd.f32 %v1712, %v1729
  %v1767 = vadd.f32 %v1713, %v1729
  %v1768 = vadd.f32 %v1714, %v1729
  %v1769 = vadd.f32 %v1715, %v1729
  %v1770 = vadd.f32 %v1716, %v1729
  %v1771 = vadd.f32 %v1717, %v1729
  %v1772 = vadd.f32 %v1718, %v1729
  %v1773 = vadd.f32 %v1719, %v1729
  %v1774 = vadd.f32 %v1720, %v1729
  %v1775 = vadd.f32 %v1721, %v1729
  %v1776 = vadd.f32 %v1722, %v1729
  %v1777 = vadd.f32 %v1723, %v1729
  %v1778 = vadd.f32 %v1724, %v1729
  %v1779 = vadd.f32 %v1725, %v1729
  %v1780 = vadd.f32 %v1726, %v1729
  %v1781 = vmax.f32 %v1731, 0.0
  %v1782 = vmax.f32 %v1732, 0.0
  %v1783 = vmax.f32 %v1733, 0.0
  %v1784 = vmax.f32 %v1734, 0.0
  %v1785 = vmax.f32 %v1735, 0.0
  %v1786 = vmax.f32 %v1736, 0.0
  %v1787 = vmax.f32 %v1737, 0.0
  %v1788 = vmax.f32 %v1738, 0.0
  %v1789 = vmax.f32 %v1739, 0.0
  %v1790 = vmax.f32 %v1740, 0.0
  %v1791 = vmax.f32 %v1741, 0.0
  %v1792 = vmax.f32 %v1742, 0.0
  %v1793 = vmax.f32 %v1743, 0.0
  %v1794 = vmax.f32 %v1744, 0.0
  %v1795 = vmax.f32 %v1745, 0.0
  %v1796 = vmax.f32 %v1746, 0.0
  %v1797 = vmax.f32 %v1747, 0.0
  %v1798 = vmax.f32 %v1748, 0.0
  %v1799 = vmax.f32 %v1749, 0.0
  %v1800 = vmax.f32 %v1750, 0.0
  %v1801 = vmax.f32 %v1751, 0.0
  %v1802 = vmax.f32 %v1752, 0.0
  %v1803 = vmax.f32 %v1753, 0.0
  %v1804 = vmax.f32 %v1754, 0.0
  %v1805 = vmax.f32 %v1755, 0.0
  %v1806 = vmax.f32 %v1756, 0.0
  %v1807 = vmax.f32 %v1757, 0.0
  %v1808 = vmax.f32 %v1758, 0.0
  %v1809 = vmax.f32 %v1759, 0.0
  %v1810 = vmax.f32 %v1760, 0.0
  %v1811 = vmax.f32 %v1761, 0.0
  %v1812 = vmax.f32 %v1762, 0.0
  %v1813 = vmax.f32 %v1763, 0.0
  %v1814 = vmax.f32 %v1764, 0.0
  %v1815 = vmax.f32 %v1765, 0.0
  %v1816 = vmax.f32 %v1766, 0.0
  %v1817 = vmax.f32 %v1767, 0.0
  %v1818 = vmax.f32 %v1768, 0.0
  %v1819 = vmax.f32 %v1769, 0.0
  %v1820 = vmax.f32 %v1770, 0.0
  %v1821 = vmax.f32 %v1771, 0.0
  %v1822 = vmax.f32 %v1772, 0.0
  %v1823 = vmax.f32 %v1773, 0.0
  %v1824 = vmax.f32 %v1774, 0.0
  %v1825 = vmax.f32 %v1775, 0.0
  %v1826 = vmax.f32 %v1776, 0.0
  %v1827 = vmax.f32 %v1777, 0.0
  %v1828 = vmax.f32 %v1778, 0.0
  %v1829 = vmax.f32 %v1779, 0.0
  %v1830 = vmax.f32 %v1780, 0.0
  %v1831 = vpack.c.bf16 %v1781, %v1781
  %v1832 = vpack.c.bf16 %v1782, %v1782
  %v1833 = vpack.c.bf16 %v1783, %v1783
  %v1834 = vpack.c.bf16 %v1784, %v1784
  %v1835 = vpack.c.bf16 %v1785, %v1785
  %v1836 = vpack.c.bf16 %v1786, %v1786
  %v1837 = vpack.c.bf16 %v1787, %v1787
  %v1838 = vpack.c.bf16 %v1788, %v1788
  %v1839 = vpack.c.bf16 %v1789, %v1789
  %v1840 = vpack.c.bf16 %v1790, %v1790
  %v1841 = vpack.c.bf16 %v1791, %v1791
  %v1842 = vpack.c.bf16 %v1792, %v1792
  %v1843 = vpack.c.bf16 %v1793, %v1793
  %v1844 = vpack.c.bf16 %v1794, %v1794
  %v1845 = vpack.c.bf16 %v1795, %v1795
  %v1846 = vpack.c.bf16 %v1796, %v1796
  %v1847 = vpack.c.bf16 %v1797, %v1797
  %v1848 = vpack.c.bf16 %v1798, %v1798
  %v1849 = vpack.c.bf16 %v1799, %v1799
  %v1850 = vpack.c.bf16 %v1800, %v1800
  %v1851 = vpack.c.bf16 %v1801, %v1801
  %v1852 = vpack.c.bf16 %v1802, %v1802
  %v1853 = vpack.c.bf16 %v1803, %v1803
  %v1854 = vpack.c.bf16 %v1804, %v1804
  %v1855 = vpack.c.bf16 %v1805, %v1805
  %v1856 = vpack.c.bf16 %v1806, %v1806
  %v1857 = vpack.c.bf16 %v1807, %v1807
  %v1858 = vpack.c.bf16 %v1808, %v1808
  %v1859 = vpack.c.bf16 %v1809, %v1809
  %v1860 = vpack.c.bf16 %v1810, %v1810
  %v1861 = vpack.c.bf16 %v1811, %v1811
  %v1862 = vpack.c.bf16 %v1812, %v1812
  %v1863 = vpack.c.bf16 %v1813, %v1813
  %v1864 = vpack.c.bf16 %v1814, %v1814
  %v1865 = vpack.c.bf16 %v1815, %v1815
  %v1866 = vpack.c.bf16 %v1816, %v1816
  %v1867 = vpack.c.bf16 %v1817, %v1817
  %v1868 = vpack.c.bf16 %v1818, %v1818
  %v1869 = vpack.c.bf16 %v1819, %v1819
  %v1870 = vpack.c.bf16 %v1820, %v1820
  %v1871 = vpack.c.bf16 %v1821, %v1821
  %v1872 = vpack.c.bf16 %v1822, %v1822
  %v1873 = vpack.c.bf16 %v1823, %v1823
  %v1874 = vpack.c.bf16 %v1824, %v1824
  %v1875 = vpack.c.bf16 %v1825, %v1825
  %v1876 = vpack.c.bf16 %v1826, %v1826
  %v1877 = vpack.c.bf16 %v1827, %v1827
  %v1878 = vpack.c.bf16 %v1828, %v1828
  %v1879 = vpack.c.bf16 %v1829, %v1829
  %v1880 = vpack.c.bf16 %v1830, %v1830
  %vm1881 = vcmask 125952
  %1882 = vst.msk [vmem:[%s3] sm:$0xf] %vm1881, %v1831
  %1883 = vst.msk [vmem:[%s3 + $0x4] sm:$0xf] %vm1881, %v1832
  %1884 = vst.msk [vmem:[%s3 + $0x8] sm:$0xf] %vm1881, %v1833
  %1885 = vst.msk [vmem:[%s3 + $0xc] sm:$0xf] %vm1881, %v1834
  %1886 = vst.msk [vmem:[%s3 + $0x10] sm:$0xf] %vm1881, %v1835
  %1887 = vst.msk [vmem:[%s3 + $0x14] sm:$0xf] %vm1881, %v1836
  %1888 = vst.msk [vmem:[%s3 + $0x18] sm:$0xf] %vm1881, %v1837
  %1889 = vst.msk [vmem:[%s3 + $0x1c] sm:$0xf] %vm1881, %v1838
  %1890 = vst.msk [vmem:[%s3 + $0x20] sm:$0xf] %vm1881, %v1839
  %1891 = vst.msk [vmem:[%s3 + $0x24] sm:$0xf] %vm1881, %v1840
  %1892 = vst.msk [vmem:[%s3 + $0x28] sm:$0xf] %vm1881, %v1841
  %1893 = vst.msk [vmem:[%s3 + $0x2c] sm:$0xf] %vm1881, %v1842
  %1894 = vst.msk [vmem:[%s3 + $0x30] sm:$0xf] %vm1881, %v1843
  %1895 = vst.msk [vmem:[%s3 + $0x34] sm:$0xf] %vm1881, %v1844
  %1896 = vst.msk [vmem:[%s3 + $0x38] sm:$0xf] %vm1881, %v1845
  %1897 = vst.msk [vmem:[%s3 + $0x3c] sm:$0xf] %vm1881, %v1846
  %1898 = vst.msk [vmem:[%s3 + $0x40] sm:$0xf] %vm1881, %v1847
  %1899 = vst.msk [vmem:[%s3 + $0x44] sm:$0xf] %vm1881, %v1848
  %1900 = vst.msk [vmem:[%s3 + $0x48] sm:$0xf] %vm1881, %v1849
  %1901 = vst.msk [vmem:[%s3 + $0x4c] sm:$0xf] %vm1881, %v1850
  %1902 = vst.msk [vmem:[%s3 + $0x50] sm:$0xf] %vm1881, %v1851
  %1903 = vst.msk [vmem:[%s3 + $0x54] sm:$0xf] %vm1881, %v1852
  %1904 = vst.msk [vmem:[%s3 + $0x58] sm:$0xf] %vm1881, %v1853
  %1905 = vst.msk [vmem:[%s3 + $0x5c] sm:$0xf] %vm1881, %v1854
  %1906 = vst.msk [vmem:[%s3 + $0x60] sm:$0xf] %vm1881, %v1855
  %1907 = vst.msk [vmem:[%s3 + $0x64] sm:$0xf] %vm1881, %v1856
  %1908 = vst.msk [vmem:[%s3 + $0x68] sm:$0xf] %vm1881, %v1857
  %1909 = vst.msk [vmem:[%s3 + $0x6c] sm:$0xf] %vm1881, %v1858
  %1910 = vst.msk [vmem:[%s3 + $0x70] sm:$0xf] %vm1881, %v1859
  %1911 = vst.msk [vmem:[%s3 + $0x74] sm:$0xf] %vm1881, %v1860
  %1912 = vst.msk [vmem:[%s3 + $0x78] sm:$0xf] %vm1881, %v1861
  %1913 = vst.msk [vmem:[%s3 + $0x7c] sm:$0xf] %vm1881, %v1862
  %1914 = vst.msk [vmem:[%s3 + $0x80] sm:$0xf] %vm1881, %v1863
  %1915 = vst.msk [vmem:[%s3 + $0x84] sm:$0xf] %vm1881, %v1864
  %1916 = vst.msk [vmem:[%s3 + $0x88] sm:$0xf] %vm1881, %v1865
  %1917 = vst.msk [vmem:[%s3 + $0x8c] sm:$0xf] %vm1881, %v1866
  %1918 = vst.msk [vmem:[%s3 + $0x90] sm:$0xf] %vm1881, %v1867
  %1919 = vst.msk [vmem:[%s3 + $0x94] sm:$0xf] %vm1881, %v1868
  %1920 = vst.msk [vmem:[%s3 + $0x98] sm:$0xf] %vm1881, %v1869
  %1921 = vst.msk [vmem:[%s3 + $0x9c] sm:$0xf] %vm1881, %v1870
  %1922 = vst.msk [vmem:[%s3 + $0xa0] sm:$0xf] %vm1881, %v1871
  %1923 = vst.msk [vmem:[%s3 + $0xa4] sm:$0xf] %vm1881, %v1872
  %1924 = vst.msk [vmem:[%s3 + $0xa8] sm:$0xf] %vm1881, %v1873
  %1925 = vst.msk [vmem:[%s3 + $0xac] sm:$0xf] %vm1881, %v1874
  %1926 = vst.msk [vmem:[%s3 + $0xb0] sm:$0xf] %vm1881, %v1875
  %1927 = vst.msk [vmem:[%s3 + $0xb4] sm:$0xf] %vm1881, %v1876
  %1928 = vst.msk [vmem:[%s3 + $0xb8] sm:$0xf] %vm1881, %v1877
  %1929 = vst.msk [vmem:[%s3 + $0xbc] sm:$0xf] %vm1881, %v1878
  %1930 = vst.msk [vmem:[%s3 + $0xc0] sm:$0xf] %vm1881, %v1879
  %1931 = vst.msk [vmem:[%s3 + $0xc4] sm:$0xf] %vm1881, %v1880
  // Predicated region
  $region14: #{mnist_conv_forward.4} parent=0 // pred_check
    _
  $region15: #{mnist_conv_forward.4} parent=0 // pred_check_branch
    %1933 = sbr.rel (0) target = $region17
  $region16: #{mnist_conv_forward.4} parent=0 // pred_region
    _
  $region17: #{mnist_conv_forward.4} parent=0 // pred_fallthru
    _
  // Predicated region
  $region18: #{mnist_conv_forward.4} parent=0 // pred_check
    _
  $region19: #{mnist_conv_forward.4} parent=0 // pred_check_branch
    %1935 = sbr.rel (0) target = $region21
  $region20: #{mnist_conv_forward.4} parent=0 // pred_region
    _
  $region21: #{mnist_conv_forward.4} parent=0 // pred_fallthru
    _

// kernel: mnist_conv_forward.5
$region0: #{mnist_conv_forward.5}
  #allocation0 [shape = 'u32[]', space=smem, size = 0x4, offset = 0x4, fixed_abs, tag = 'smem constant byte address 0x4 - core index']
  #allocation1 [shape = 'u32[72,128]{1,0:T(1,128)}', space=vmem, size = 0x9000, scoped, tag = 'internal scratch']
  %s0 = inlined_call_operand.vmem [shape: bf16[4,112,400], index: 0, kind: input, shape index: {}]
  %s1 = inlined_call_operand.vmem [shape: bf16[400,32], index: 1, kind: input, shape index: {}]
  %s2 = inlined_call_operand.vmem [shape: f32[1,32], index: 2, kind: input, shape index: {}]
  %s3 = inlined_call_operand.vmem [shape: bf16[112,32], index: 3, kind: output, shape index: {}]
  %s4 = sld [smem:[#allocation0]]
  $region22: #{mnist_conv_forward.5} parent=0
    _
  %s6 = ssub.s32 1, %s4
  %s7 = scalar_select 0, %s6, %s4
  // Predicated region
  $region2: #{mnist_conv_forward.5} parent=0 // pred_check
    _
  $region3: #{mnist_conv_forward.5} parent=0 // pred_check_branch
    %9 = sbr.rel (0) target = $region5
  $region4: #{mnist_conv_forward.5} parent=0 // pred_region
    _
  $region5: #{mnist_conv_forward.5} parent=0 // pred_fallthru
    _
  // Predicated region
  $region6: #{mnist_conv_forward.5} parent=0 // pred_check
    _
  $region7: #{mnist_conv_forward.5} parent=0 // pred_check_branch
    %11 = sbr.rel (0) target = $region9
  $region8: #{mnist_conv_forward.5} parent=0 // pred_region
    _
  $region9: #{mnist_conv_forward.5} parent=0 // pred_fallthru
    _
  // Predicated region
  $region10: #{mnist_conv_forward.5} parent=0 // pred_check
    _
  $region11: #{mnist_conv_forward.5} parent=0 // pred_check_branch
    %13 = sbr.rel (0) target = $region13
  $region12: #{mnist_conv_forward.5} parent=0 // pred_region
    _
  $region13: #{mnist_conv_forward.5} parent=0 // pred_fallthru
    _
  %v15 = vld [vmem:[%s1] sm:$0xf]
  %v16 = vld [vmem:[%s1 + $0x4] sm:$0xf]
  %v17 = vld [vmem:[%s1 + $0x8] sm:$0xf]
  %v18 = vld [vmem:[%s1 + $0xc] sm:$0xf]
  %v19 = vld [vmem:[%s1 + $0x10] sm:$0xf]
  %v20 = vld [vmem:[%s1 + $0x14] sm:$0xf]
  %v21 = vld [vmem:[%s1 + $0x18] sm:$0xf]
  %v22 = vld [vmem:[%s1 + $0x1c] sm:$0xf]
  %v23 = vld [vmem:[%s1 + $0x20] sm:$0xf]
  %v24 = vld [vmem:[%s1 + $0x24] sm:$0xf]
  %v25 = vld [vmem:[%s1 + $0x28] sm:$0xf]
  %v26 = vld [vmem:[%s1 + $0x2c] sm:$0xf]
  %v27 = vld [vmem:[%s1 + $0x30] sm:$0xf]
  %v28 = vld [vmem:[%s1 + $0x34] sm:$0xf]
  %v29 = vld [vmem:[%s1 + $0x38] sm:$0xf]
  %v30 = vld [vmem:[%s1 + $0x3c] sm:$0xf]
  %v31 = vld [vmem:[%s1 + $0x40] sm:$0xf]
  %v32 = vld [vmem:[%s1 + $0x44] sm:$0xf]
  %v33 = vld [vmem:[%s1 + $0x48] sm:$0xf]
  %v34 = vld [vmem:[%s1 + $0x4c] sm:$0xf]
  %v35 = vld [vmem:[%s1 + $0x50] sm:$0xf]
  %v36 = vld [vmem:[%s1 + $0x54] sm:$0xf]
  %v37 = vld [vmem:[%s1 + $0x58] sm:$0xf]
  %v38 = vld [vmem:[%s1 + $0x5c] sm:$0xf]
  %v39 = vld [vmem:[%s1 + $0x60] sm:$0xf]
  %v40 = vld [vmem:[%s1 + $0x64] sm:$0xf]
  %v41 = vld [vmem:[%s1 + $0x68] sm:$0xf]
  %v42 = vld [vmem:[%s1 + $0x6c] sm:$0xf]
  %v43 = vld [vmem:[%s1 + $0x70] sm:$0xf]
  %v44 = vld [vmem:[%s1 + $0x74] sm:$0xf]
  %v45 = vld [vmem:[%s1 + $0x78] sm:$0xf]
  %v46 = vld [vmem:[%s1 + $0x7c] sm:$0xf]
  %v47 = vld [vmem:[%s1 + $0x80] sm:$0xf]
  %v48 = vld [vmem:[%s1 + $0x84] sm:$0xf]
  %v49 = vld [vmem:[%s1 + $0x88] sm:$0xf]
  %v50 = vld [vmem:[%s1 + $0x8c] sm:$0xf]
  %v51 = vld [vmem:[%s1 + $0x90] sm:$0xf]
  %v52 = vld [vmem:[%s1 + $0x94] sm:$0xf]
  %v53 = vld [vmem:[%s1 + $0x98] sm:$0xf]
  %v54 = vld [vmem:[%s1 + $0x9c] sm:$0xf]
  %v55 = vld [vmem:[%s1 + $0xa0] sm:$0xf]
  %v56 = vld [vmem:[%s1 + $0xa4] sm:$0xf]
  %v57 = vld [vmem:[%s1 + $0xa8] sm:$0xf]
  %v58 = vld [vmem:[%s1 + $0xac] sm:$0xf]
  %v59 = vld [vmem:[%s1 + $0xb0] sm:$0xf]
  %v60 = vld [vmem:[%s1 + $0xb4] sm:$0xf]
  %v61 = vld [vmem:[%s1 + $0xb8] sm:$0xf]
  %v62 = vld [vmem:[%s1 + $0xbc] sm:$0xf]
  %v63 = vld [vmem:[%s1 + $0xc0] sm:$0xf]
  %v64 = vld [vmem:[%s1 + $0xc4] sm:$0xf]
  %v65 = vld [vmem:[%s0] sm:$0xff]
  %v66 = vld [vmem:[%s0 + $0x8] sm:$0xff]
  %v67 = vld [vmem:[%s0 + $0x10] sm:$0xff]
  %v68 = vld [vmem:[%s0 + $0x18] sm:$0xff]
  %v69 = vld [vmem:[%s0 + $0x20] sm:$0xff]
  %v70 = vld [vmem:[%s0 + $0x28] sm:$0xff]
  %v71 = vld [vmem:[%s0 + $0x30] sm:$0xff]
  %v72 = vld [vmem:[%s0 + $0x38] sm:$0xff]
  %v73 = vld [vmem:[%s0 + $0x40] sm:$0xff]
  %v74 = vld [vmem:[%s0 + $0x48] sm:$0xff]
  %v75 = vld [vmem:[%s0 + $0x50] sm:$0xff]
  %v76 = vld [vmem:[%s0 + $0x58] sm:$0xff]
  %v77 = vld [vmem:[%s0 + $0x60] sm:$0xff]
  %v78 = vld [vmem:[%s0 + $0x68] sm:$0xff]
  %v79 = vld [vmem:[%s0 + $0x70] sm:$0xff]
  %v80 = vld [vmem:[%s0 + $0x78] sm:$0xff]
  %v81 = vld [vmem:[%s0 + $0x80] sm:$0xff]
  %v82 = vld [vmem:[%s0 + $0x88] sm:$0xff]
  %v83 = vld [vmem:[%s0 + $0x90] sm:$0xff]
  %v84 = vld [vmem:[%s0 + $0x98] sm:$0xff]
  %v85 = vld [vmem:[%s0 + $0xa0] sm:$0xff]
  %v86 = vld [vmem:[%s0 + $0xa8] sm:$0xff]
  %v87 = vld [vmem:[%s0 + $0xb0] sm:$0xff]
  %v88 = vld [vmem:[%s0 + $0xb8] sm:$0xff]
  %v89 = vld [vmem:[%s0 + $0xc0] sm:$0xff]
  %v90 = vld [vmem:[%s0 + $0xc8] sm:$0xff]
  %v91 = vld [vmem:[%s0 + $0xd0] sm:$0xff]
  %v92 = vld [vmem:[%s0 + $0xd8] sm:$0xff]
  %v121 = vunpack.c.l.b16 %v65
  %v122 = vunpack.c.h.b16 %v65
  %v123 = vunpack.c.l.b16 %v66
  %v124 = vunpack.c.h.b16 %v66
  %v125 = vunpack.c.l.b16 %v67
  %v126 = vunpack.c.h.b16 %v67
  %v127 = vunpack.c.l.b16 %v68
  %v128 = vunpack.c.h.b16 %v68
  %v129 = vunpack.c.l.b16 %v69
  %v130 = vunpack.c.h.b16 %v69
  %v131 = vunpack.c.l.b16 %v70
  %v132 = vunpack.c.h.b16 %v70
  %v133 = vunpack.c.l.b16 %v71
  %v134 = vunpack.c.h.b16 %v71
  %v135 = vunpack.c.l.b16 %v72
  %v136 = vunpack.c.h.b16 %v72
  %v137 = vunpack.c.l.b16 %v73
  %v138 = vunpack.c.h.b16 %v73
  %v139 = vunpack.c.l.b16 %v74
  %v140 = vunpack.c.h.b16 %v74
  %v141 = vunpack.c.l.b16 %v75
  %v142 = vunpack.c.h.b16 %v75
  %v143 = vunpack.c.l.b16 %v76
  %v144 = vunpack.c.h.b16 %v76
  %v145 = vunpack.c.l.b16 %v77
  %v146 = vunpack.c.h.b16 %v77
  %v147 = vunpack.c.l.b16 %v78
  %v148 = vunpack.c.h.b16 %v78
  %v149 = vunpack.c.l.b16 %v79
  %v150 = vunpack.c.h.b16 %v79
  %v151 = vunpack.c.l.b16 %v80
  %v152 = vunpack.c.h.b16 %v80
  %v153 = vunpack.c.l.b16 %v81
  %v154 = vunpack.c.h.b16 %v81
  %v155 = vunpack.c.l.b16 %v82
  %v156 = vunpack.c.h.b16 %v82
  %v157 = vunpack.c.l.b16 %v83
  %v158 = vunpack.c.h.b16 %v83
  %v159 = vunpack.c.l.b16 %v84
  %v160 = vunpack.c.h.b16 %v84
  %v161 = vunpack.c.l.b16 %v85
  %v162 = vunpack.c.h.b16 %v85
  %v163 = vunpack.c.l.b16 %v86
  %v164 = vunpack.c.h.b16 %v86
  %v165 = vunpack.c.l.b16 %v87
  %v166 = vunpack.c.h.b16 %v87
  %v167 = vunpack.c.l.b16 %v88
  %v168 = vunpack.c.h.b16 %v88
  %v169 = vunpack.c.l.b16 %v89
  %v170 = vunpack.c.h.b16 %v89
  %v171 = vunpack.c.l.b16 %v90
  %v172 = vunpack.c.h.b16 %v90
  %v173 = vunpack.c.l.b16 %v91
  %v174 = vunpack.c.h.b16 %v91
  %v175 = vunpack.c.l.b16 %v92
  %v176 = vunpack.c.h.b16 %v92
  %v177 = vpack.c.b16 %v125, %v121
  %v178 = vpack.c.b16 %v126, %v122
  %v179 = vpack.c.b16 %v127, %v123
  %v180 = vpack.c.b16 %v128, %v124
  %v181 = vpack.c.b16 %v133, %v129
  %v182 = vpack.c.b16 %v134, %v130
  %v183 = vpack.c.b16 %v135, %v131
  %v184 = vpack.c.b16 %v136, %v132
  %v185 = vpack.c.b16 %v141, %v137
  %v186 = vpack.c.b16 %v142, %v138
  %v187 = vpack.c.b16 %v143, %v139
  %v188 = vpack.c.b16 %v144, %v140
  %v189 = vpack.c.b16 %v149, %v145
  %v190 = vpack.c.b16 %v150, %v146
  %v191 = vpack.c.b16 %v151, %v147
  %v192 = vpack.c.b16 %v152, %v148
  %v193 = vpack.c.b16 %v157, %v153
  %v194 = vpack.c.b16 %v158, %v154
  %v195 = vpack.c.b16 %v159, %v155
  %v196 = vpack.c.b16 %v160, %v156
  %v197 = vpack.c.b16 %v165, %v161
  %v198 = vpack.c.b16 %v166, %v162
  %v199 = vpack.c.b16 %v167, %v163
  %v200 = vpack.c.b16 %v168, %v164
  %v201 = vpack.c.b16 %v173, %v169
  %v202 = vpack.c.b16 %v174, %v170
  %v203 = vpack.c.b16 %v175, %v171
  %v204 = vpack.c.b16 %v176, %v172
  %v276 = vunpack.c.l.b16 %v15
  %v277 = vunpack.c.l.b16 %v16
  %v278 = vunpack.c.l.b16 %v17
  %v279 = vunpack.c.l.b16 %v18
  %v280 = vunpack.c.l.b16 %v19
  %v281 = vunpack.c.l.b16 %v20
  %v282 = vunpack.c.l.b16 %v21
  %v283 = vunpack.c.l.b16 %v22
  %v284 = vunpack.c.l.b16 %v23
  %v285 = vunpack.c.l.b16 %v24
  %v286 = vunpack.c.l.b16 %v25
  %v287 = vunpack.c.l.b16 %v26
  %v288 = vunpack.c.l.b16 %v27
  %v289 = vunpack.c.l.b16 %v28
  %v290 = vunpack.c.l.b16 %v29
  %v291 = vunpack.c.l.b16 %v30
  %v292 = vunpack.c.l.b16 %v31
  %v293 = vunpack.c.l.b16 %v32
  %v294 = vunpack.c.l.b16 %v33
  %v295 = vunpack.c.l.b16 %v34
  %v296 = vunpack.c.l.b16 %v35
  %v297 = vunpack.c.l.b16 %v36
  %v298 = vunpack.c.l.b16 %v37
  %v299 = vunpack.c.l.b16 %v38
  %v300 = vunpack.c.l.b16 %v39
  %v301 = vunpack.c.l.b16 %v40
  %v302 = vunpack.c.l.b16 %v41
  %v303 = vunpack.c.l.b16 %v42
  %v304 = vunpack.c.l.b16 %v43
  %v305 = vunpack.c.l.b16 %v44
  %v306 = vunpack.c.l.b16 %v45
  %v307 = vunpack.c.l.b16 %v46
  %v308 = vunpack.c.l.b16 %v47
  %v309 = vunpack.c.l.b16 %v48
  %v310 = vunpack.c.l.b16 %v49
  %v311 = vunpack.c.l.b16 %v50
  %v312 = vunpack.c.l.b16 %v51
  %v313 = vunpack.c.l.b16 %v52
  %v314 = vunpack.c.l.b16 %v53
  %v315 = vunpack.c.l.b16 %v54
  %v316 = vunpack.c.l.b16 %v55
  %v317 = vunpack.c.l.b16 %v56
  %v318 = vunpack.c.l.b16 %v57
  %v319 = vunpack.c.l.b16 %v58
  %v320 = vunpack.c.l.b16 %v59
  %v321 = vunpack.c.l.b16 %v60
  %v322 = vunpack.c.l.b16 %v61
  %v323 = vunpack.c.l.b16 %v62
  %v324 = vunpack.c.l.b16 %v63
  %v325 = vunpack.c.l.b16 %v64
  %v326 = vpack.c.b16 %v277, %v276
  %v327 = vpack.c.b16 %v279, %v278
  %v328 = vpack.c.b16 %v281, %v280
  %v329 = vpack.c.b16 %v283, %v282
  %v330 = vpack.c.b16 %v285, %v284
  %v331 = vpack.c.b16 %v287, %v286
  %v332 = vpack.c.b16 %v289, %v288
  %v333 = vpack.c.b16 %v291, %v290
  %v334 = vpack.c.b16 %v293, %v292
  %v335 = vpack.c.b16 %v295, %v294
  %v336 = vpack.c.b16 %v297, %v296
  %v337 = vpack.c.b16 %v299, %v298
  %v338 = vpack.c.b16 %v301, %v300
  %v339 = vpack.c.b16 %v303, %v302
  %v340 = vpack.c.b16 %v305, %v304
  %v341 = vpack.c.b16 %v307, %v306
  %v342 = vpack.c.b16 %v309, %v308
  %v343 = vpack.c.b16 %v311, %v310
  %v344 = vpack.c.b16 %v313, %v312
  %v345 = vpack.c.b16 %v315, %v314
  %v346 = vpack.c.b16 %v317, %v316
  %v347 = vpack.c.b16 %v319, %v318
  %v348 = vpack.c.b16 %v321, %v320
  %v349 = vpack.c.b16 %v323, %v322
  %v350 = vpack.c.b16 %v325, %v324
  %vm376 = vcmask 130048
  %v378 = vsel %vm376, %v180, 0
  %v381 = vsel %vm376, %v184, 0
  %v384 = vsel %vm376, %v188, 0
  %v387 = vsel %vm376, %v192, 0
  %v390 = vsel %vm376, %v196, 0
  %v393 = vsel %vm376, %v200, 0
  %v396 = vsel %vm376, %v204, 0
  %398 = vmatpush.bf16.msra.mxu0 %v333
  %399 = vmatpush.bf16.msra.mxu0 %v332
  %400 = vmatpush.bf16.msra.mxu0 %v331
  %401 = vmatpush.bf16.msra.mxu0 %v330
  %402 = vmatpush.bf16.msra.mxu0 %v329
  %403 = vmatpush.bf16.msra.mxu0 %v328
  %404 = vmatpush.bf16.msra.mxu0 %v327
  %405 = vmatpush.bf16.msra.mxu0 %v326
  %406 = vmatmul.bf16.gmra.mxu0 %v177
  %v407 = vpop.f32.mrf.mxu0
  %v408 = vadd.f32 0.0, %v407
  %v409 = vpop.f32.mrf.mxu0
  %v410 = vadd.f32 0.0, %v409
  %411 = vmatmul.bf16.gmra.mxu0 %v181
  %v412 = vpop.f32.mrf.mxu0
  %v413 = vadd.f32 0.0, %v412
  %v414 = vpop.f32.mrf.mxu0
  %v415 = vadd.f32 0.0, %v414
  %416 = vmatmul.bf16.gmra.mxu0 %v185
  %v417 = vpop.f32.mrf.mxu0
  %v418 = vadd.f32 0.0, %v417
  %v419 = vpop.f32.mrf.mxu0
  %v420 = vadd.f32 0.0, %v419
  %421 = vmatmul.bf16.gmra.mxu0 %v189
  %v422 = vpop.f32.mrf.mxu0
  %v423 = vadd.f32 0.0, %v422
  %v424 = vpop.f32.mrf.mxu0
  %v425 = vadd.f32 0.0, %v424
  %426 = vmatmul.bf16.gmra.mxu0 %v193
  %v427 = vpop.f32.mrf.mxu0
  %v428 = vadd.f32 0.0, %v427
  %v429 = vpop.f32.mrf.mxu0
  %v430 = vadd.f32 0.0, %v429
  %431 = vmatmul.bf16.gmra.mxu0 %v197
  %v432 = vpop.f32.mrf.mxu0
  %v433 = vadd.f32 0.0, %v432
  %v434 = vpop.f32.mrf.mxu0
  %v435 = vadd.f32 0.0, %v434
  %436 = vmatmul.bf16.gmra.mxu0 %v201
  %v437 = vpop.f32.mrf.mxu0
  %v438 = vadd.f32 0.0, %v437
  %v439 = vpop.f32.mrf.mxu0
  %v440 = vadd.f32 0.0, %v439
  %441 = vdwg.mxu0
  %442 = vmatpush.bf16.msra.mxu0 %v341
  %443 = vmatpush.bf16.msra.mxu0 %v340
  %444 = vmatpush.bf16.msra.mxu0 %v339
  %445 = vmatpush.bf16.msra.mxu0 %v338
  %446 = vmatpush.bf16.msra.mxu0 %v337
  %447 = vmatpush.bf16.msra.mxu0 %v336
  %448 = vmatpush.bf16.msra.mxu0 %v335
  %449 = vmatpush.bf16.msra.mxu0 %v334
  %450 = vmatmul.bf16.gmra.mxu0 %v178
  %v451 = vpop.f32.mrf.mxu0
  %v452 = vadd.f32 %v408, %v451
  %v453 = vpop.f32.mrf.mxu0
  %v454 = vadd.f32 %v410, %v453
  %455 = vmatmul.bf16.gmra.mxu0 %v182
  %v456 = vpop.f32.mrf.mxu0
  %v457 = vadd.f32 %v413, %v456
  %v458 = vpop.f32.mrf.mxu0
  %v459 = vadd.f32 %v415, %v458
  %460 = vmatmul.bf16.gmra.mxu0 %v186
  %v461 = vpop.f32.mrf.mxu0
  %v462 = vadd.f32 %v418, %v461
  %v463 = vpop.f32.mrf.mxu0
  %v464 = vadd.f32 %v420, %v463
  %465 = vmatmul.bf16.gmra.mxu0 %v190
  %v466 = vpop.f32.mrf.mxu0
  %v467 = vadd.f32 %v423, %v466
  %v468 = vpop.f32.mrf.mxu0
  %v469 = vadd.f32 %v425, %v468
  %470 = vmatmul.bf16.gmra.mxu0 %v194
  %v471 = vpop.f32.mrf.mxu0
  %v472 = vadd.f32 %v428, %v471
  %v473 = vpop.f32.mrf.mxu0
  %v474 = vadd.f32 %v430, %v473
  %475 = vmatmul.bf16.gmra.mxu0 %v198
  %v476 = vpop.f32.mrf.mxu0
  %v477 = vadd.f32 %v433, %v476
  %v478 = vpop.f32.mrf.mxu0
  %v479 = vadd.f32 %v435, %v478
  %480 = vmatmul.bf16.gmra.mxu0 %v202
  %v481 = vpop.f32.mrf.mxu0
  %v482 = vadd.f32 %v438, %v481
  %v483 = vpop.f32.mrf.mxu0
  %v484 = vadd.f32 %v440, %v483
  %485 = vdwg.mxu0
  %486 = vmatpush.bf16.msra.mxu0 %v349
  %487 = vmatpush.bf16.msra.mxu0 %v348
  %488 = vmatpush.bf16.msra.mxu0 %v347
  %489 = vmatpush.bf16.msra.mxu0 %v346
  %490 = vmatpush.bf16.msra.mxu0 %v345
  %491 = vmatpush.bf16.msra.mxu0 %v344
  %492 = vmatpush.bf16.msra.mxu0 %v343
  %493 = vmatpush.bf16.msra.mxu0 %v342
  %494 = vmatmul.bf16.gmra.mxu0 %v179
  %v495 = vpop.f32.mrf.mxu0
  %v496 = vadd.f32 %v452, %v495
  %v497 = vpop.f32.mrf.mxu0
  %v498 = vadd.f32 %v454, %v497
  %499 = vmatmul.bf16.gmra.mxu0 %v183
  %v500 = vpop.f32.mrf.mxu0
  %v501 = vadd.f32 %v457, %v500
  %v502 = vpop.f32.mrf.mxu0
  %v503 = vadd.f32 %v459, %v502
  %504 = vmatmul.bf16.gmra.mxu0 %v187
  %v505 = vpop.f32.mrf.mxu0
  %v506 = vadd.f32 %v462, %v505
  %v507 = vpop.f32.mrf.mxu0
  %v508 = vadd.f32 %v464, %v507
  %509 = vmatmul.bf16.gmra.mxu0 %v191
  %v510 = vpop.f32.mrf.mxu0
  %v511 = vadd.f32 %v467, %v510
  %v512 = vpop.f32.mrf.mxu0
  %v513 = vadd.f32 %v469, %v512
  %514 = vmatmul.bf16.gmra.mxu0 %v195
  %v515 = vpop.f32.mrf.mxu0
  %v516 = vadd.f32 %v472, %v515
  %v517 = vpop.f32.mrf.mxu0
  %v518 = vadd.f32 %v474, %v517
  %519 = vmatmul.bf16.gmra.mxu0 %v199
  %v520 = vpop.f32.mrf.mxu0
  %v521 = vadd.f32 %v477, %v520
  %v522 = vpop.f32.mrf.mxu0
  %v523 = vadd.f32 %v479, %v522
  %524 = vmatmul.bf16.gmra.mxu0 %v203
  %v525 = vpop.f32.mrf.mxu0
  %v526 = vadd.f32 %v482, %v525
  %v527 = vpop.f32.mrf.mxu0
  %v528 = vadd.f32 %v484, %v527
  %529 = vdwg.mxu0
  %530 = vmatpush.bf16.msra.mxu0 0
  %531 = vmatpush.bf16.msra.mxu0 0
  %532 = vmatpush.bf16.msra.mxu0 0
  %533 = vmatpush.bf16.msra.mxu0 0
  %534 = vmatpush.bf16.msra.mxu0 0
  %535 = vmatpush.bf16.msra.mxu0 0
  %536 = vmatpush.bf16.msra.mxu0 0
  %537 = vmatpush.bf16.msra.mxu0 %v350
  %538 = vmatmul.bf16.gmra.mxu0 %v378
  %v539 = vpop.f32.mrf.mxu0
  %v540 = vadd.f32 %v496, %v539
  %v541 = vpop.f32.mrf.mxu0
  %v542 = vadd.f32 %v498, %v541
  %543 = vmatmul.bf16.gmra.mxu0 %v381
  %v544 = vpop.f32.mrf.mxu0
  %v545 = vadd.f32 %v501, %v544
  %v546 = vpop.f32.mrf.mxu0
  %v547 = vadd.f32 %v503, %v546
  %548 = vmatmul.bf16.gmra.mxu0 %v384
  %v549 = vpop.f32.mrf.mxu0
  %v550 = vadd.f32 %v506, %v549
  %v551 = vpop.f32.mrf.mxu0
  %v552 = vadd.f32 %v508, %v551
  %553 = vmatmul.bf16.gmra.mxu0 %v387
  %v554 = vpop.f32.mrf.mxu0
  %v555 = vadd.f32 %v511, %v554
  %v556 = vpop.f32.mrf.mxu0
  %v557 = vadd.f32 %v513, %v556
  %558 = vmatmul.bf16.gmra.mxu0 %v390
  %v559 = vpop.f32.mrf.mxu0
  %v560 = vadd.f32 %v516, %v559
  %v561 = vpop.f32.mrf.mxu0
  %v562 = vadd.f32 %v518, %v561
  %563 = vmatmul.bf16.gmra.mxu0 %v393
  %v564 = vpop.f32.mrf.mxu0
  %v565 = vadd.f32 %v521, %v564
  %v566 = vpop.f32.mrf.mxu0
  %v567 = vadd.f32 %v523, %v566
  %568 = vmatmul.bf16.gmra.mxu0 %v396
  %v569 = vpop.f32.mrf.mxu0
  %v570 = vadd.f32 %v526, %v569
  %v571 = vpop.f32.mrf.mxu0
  %v572 = vadd.f32 %v528, %v571
  %573 = vdwg.mxu0
  %s574 = scalar_lea.vmem %s0, 224
  %v575 = vld [vmem:[%s574] sm:$0xff]
  %v576 = vld [vmem:[%s574 + $0x8] sm:$0xff]
  %v577 = vld [vmem:[%s574 + $0x10] sm:$0xff]
  %v578 = vld [vmem:[%s574 + $0x18] sm:$0xff]
  %v579 = vld [vmem:[%s574 + $0x20] sm:$0xff]
  %v580 = vld [vmem:[%s574 + $0x28] sm:$0xff]
  %v581 = vld [vmem:[%s574 + $0x30] sm:$0xff]
  %v582 = vld [vmem:[%s574 + $0x38] sm:$0xff]
  %v583 = vld [vmem:[%s574 + $0x40] sm:$0xff]
  %v584 = vld [vmem:[%s574 + $0x48] sm:$0xff]
  %v585 = vld [vmem:[%s574 + $0x50] sm:$0xff]
  %v586 = vld [vmem:[%s574 + $0x58] sm:$0xff]
  %v587 = vld [vmem:[%s574 + $0x60] sm:$0xff]
  %v588 = vld [vmem:[%s574 + $0x68] sm:$0xff]
  %v589 = vld [vmem:[%s574 + $0x70] sm:$0xff]
  %v590 = vld [vmem:[%s574 + $0x78] sm:$0xff]
  %v591 = vld [vmem:[%s574 + $0x80] sm:$0xff]
  %v592 = vld [vmem:[%s574 + $0x88] sm:$0xff]
  %v593 = vld [vmem:[%s574 + $0x90] sm:$0xff]
  %v594 = vld [vmem:[%s574 + $0x98] sm:$0xff]
  %v595 = vld [vmem:[%s574 + $0xa0] sm:$0xff]
  %v596 = vld [vmem:[%s574 + $0xa8] sm:$0xff]
  %v597 = vld [vmem:[%s574 + $0xb0] sm:$0xff]
  %v598 = vld [vmem:[%s574 + $0xb8] sm:$0xff]
  %v599 = vld [vmem:[%s574 + $0xc0] sm:$0xff]
  %v600 = vld [vmem:[%s574 + $0xc8] sm:$0xff]
  %v601 = vld [vmem:[%s574 + $0xd0] sm:$0xff]
  %v602 = vld [vmem:[%s574 + $0xd8] sm:$0xff]
  %v631 = vunpack.c.l.b16 %v575
  %v632 = vunpack.c.h.b16 %v575
  %v633 = vunpack.c.l.b16 %v576
  %v634 = vunpack.c.h.b16 %v576
  %v635 = vunpack.c.l.b16 %v577
  %v636 = vunpack.c.h.b16 %v577
  %v637 = vunpack.c.l.b16 %v578
  %v638 = vunpack.c.h.b16 %v578
  %v639 = vunpack.c.l.b16 %v579
  %v640 = vunpack.c.h.b16 %v579
  %v641 = vunpack.c.l.b16 %v580
  %v642 = vunpack.c.h.b16 %v580
  %v643 = vunpack.c.l.b16 %v581
  %v644 = vunpack.c.h.b16 %v581
  %v645 = vunpack.c.l.b16 %v582
  %v646 = vunpack.c.h.b16 %v582
  %v647 = vunpack.c.l.b16 %v583
  %v648 = vunpack.c.h.b16 %v583
  %v649 = vunpack.c.l.b16 %v584
  %v650 = vunpack.c.h.b16 %v584
  %v651 = vunpack.c.l.b16 %v585
  %v652 = vunpack.c.h.b16 %v585
  %v653 = vunpack.c.l.b16 %v586
  %v654 = vunpack.c.h.b16 %v586
  %v655 = vunpack.c.l.b16 %v587
  %v656 = vunpack.c.h.b16 %v587
  %v657 = vunpack.c.l.b16 %v588
  %v658 = vunpack.c.h.b16 %v588
  %v659 = vunpack.c.l.b16 %v589
  %v660 = vunpack.c.h.b16 %v589
  %v661 = vunpack.c.l.b16 %v590
  %v662 = vunpack.c.h.b16 %v590
  %v663 = vunpack.c.l.b16 %v591
  %v664 = vunpack.c.h.b16 %v591
  %v665 = vunpack.c.l.b16 %v592
  %v666 = vunpack.c.h.b16 %v592
  %v667 = vunpack.c.l.b16 %v593
  %v668 = vunpack.c.h.b16 %v593
  %v669 = vunpack.c.l.b16 %v594
  %v670 = vunpack.c.h.b16 %v594
  %v671 = vunpack.c.l.b16 %v595
  %v672 = vunpack.c.h.b16 %v595
  %v673 = vunpack.c.l.b16 %v596
  %v674 = vunpack.c.h.b16 %v596
  %v675 = vunpack.c.l.b16 %v597
  %v676 = vunpack.c.h.b16 %v597
  %v677 = vunpack.c.l.b16 %v598
  %v678 = vunpack.c.h.b16 %v598
  %v679 = vunpack.c.l.b16 %v599
  %v680 = vunpack.c.h.b16 %v599
  %v681 = vunpack.c.l.b16 %v600
  %v682 = vunpack.c.h.b16 %v600
  %v683 = vunpack.c.l.b16 %v601
  %v684 = vunpack.c.h.b16 %v601
  %v685 = vunpack.c.l.b16 %v602
  %v686 = vunpack.c.h.b16 %v602
  %v687 = vpack.c.b16 %v635, %v631
  %v688 = vpack.c.b16 %v636, %v632
  %v689 = vpack.c.b16 %v637, %v633
  %v690 = vpack.c.b16 %v638, %v634
  %v691 = vpack.c.b16 %v643, %v639
  %v692 = vpack.c.b16 %v644, %v640
  %v693 = vpack.c.b16 %v645, %v641
  %v694 = vpack.c.b16 %v646, %v642
  %v695 = vpack.c.b16 %v651, %v647
  %v696 = vpack.c.b16 %v652, %v648
  %v697 = vpack.c.b16 %v653, %v649
  %v698 = vpack.c.b16 %v654, %v650
  %v699 = vpack.c.b16 %v659, %v655
  %v700 = vpack.c.b16 %v660, %v656
  %v701 = vpack.c.b16 %v661, %v657
  %v702 = vpack.c.b16 %v662, %v658
  %v703 = vpack.c.b16 %v667, %v663
  %v704 = vpack.c.b16 %v668, %v664
  %v705 = vpack.c.b16 %v669, %v665
  %v706 = vpack.c.b16 %v670, %v666
  %v707 = vpack.c.b16 %v675, %v671
  %v708 = vpack.c.b16 %v676, %v672
  %v709 = vpack.c.b16 %v677, %v673
  %v710 = vpack.c.b16 %v678, %v674
  %v711 = vpack.c.b16 %v683, %v679
  %v712 = vpack.c.b16 %v684, %v680
  %v713 = vpack.c.b16 %v685, %v681
  %v714 = vpack.c.b16 %v686, %v682
  %v737 = vsel %vm376, %v690, 0
  %v740 = vsel %vm376, %v694, 0
  %v743 = vsel %vm376, %v698, 0
  %v746 = vsel %vm376, %v702, 0
  %v749 = vsel %vm376, %v706, 0
  %v752 = vsel %vm376, %v710, 0
  %v755 = vsel %vm376, %v714, 0
  %757 = vmatpush.bf16.msra.mxu0 %v333
  %758 = vmatpush.bf16.msra.mxu0 %v332
  %759 = vmatpush.bf16.msra.mxu0 %v331
  %760 = vmatpush.bf16.msra.mxu0 %v330
  %761 = vmatpush.bf16.msra.mxu0 %v329
  %762 = vmatpush.bf16.msra.mxu0 %v328
  %763 = vmatpush.bf16.msra.mxu0 %v327
  %764 = vmatpush.bf16.msra.mxu0 %v326
  %765 = vmatmul.bf16.gmra.mxu0 %v687
  %v766 = vpop.f32.mrf.mxu0
  %v767 = vadd.f32 0.0, %v766
  %v768 = vpop.f32.mrf.mxu0
  %v769 = vadd.f32 0.0, %v768
  %770 = vmatmul.bf16.gmra.mxu0 %v691
  %v771 = vpop.f32.mrf.mxu0
  %v772 = vadd.f32 0.0, %v771
  %v773 = vpop.f32.mrf.mxu0
  %v774 = vadd.f32 0.0, %v773
  %775 = vmatmul.bf16.gmra.mxu0 %v695
  %v776 = vpop.f32.mrf.mxu0
  %v777 = vadd.f32 0.0, %v776
  %v778 = vpop.f32.mrf.mxu0
  %v779 = vadd.f32 0.0, %v778
  %780 = vmatmul.bf16.gmra.mxu0 %v699
  %v781 = vpop.f32.mrf.mxu0
  %v782 = vadd.f32 0.0, %v781
  %v783 = vpop.f32.mrf.mxu0
  %v784 = vadd.f32 0.0, %v783
  %785 = vmatmul.bf16.gmra.mxu0 %v703
  %v786 = vpop.f32.mrf.mxu0
  %v787 = vadd.f32 0.0, %v786
  %v788 = vpop.f32.mrf.mxu0
  %v789 = vadd.f32 0.0, %v788
  %790 = vmatmul.bf16.gmra.mxu0 %v707
  %v791 = vpop.f32.mrf.mxu0
  %v792 = vadd.f32 0.0, %v791
  %v793 = vpop.f32.mrf.mxu0
  %v794 = vadd.f32 0.0, %v793
  %795 = vmatmul.bf16.gmra.mxu0 %v711
  %v796 = vpop.f32.mrf.mxu0
  %v797 = vadd.f32 0.0, %v796
  %v798 = vpop.f32.mrf.mxu0
  %v799 = vadd.f32 0.0, %v798
  %800 = vdwg.mxu0
  %801 = vmatpush.bf16.msra.mxu0 %v341
  %802 = vmatpush.bf16.msra.mxu0 %v340
  %803 = vmatpush.bf16.msra.mxu0 %v339
  %804 = vmatpush.bf16.msra.mxu0 %v338
  %805 = vmatpush.bf16.msra.mxu0 %v337
  %806 = vmatpush.bf16.msra.mxu0 %v336
  %807 = vmatpush.bf16.msra.mxu0 %v335
  %808 = vmatpush.bf16.msra.mxu0 %v334
  %809 = vmatmul.bf16.gmra.mxu0 %v688
  %v810 = vpop.f32.mrf.mxu0
  %v811 = vadd.f32 %v767, %v810
  %v812 = vpop.f32.mrf.mxu0
  %v813 = vadd.f32 %v769, %v812
  %814 = vmatmul.bf16.gmra.mxu0 %v692
  %v815 = vpop.f32.mrf.mxu0
  %v816 = vadd.f32 %v772, %v815
  %v817 = vpop.f32.mrf.mxu0
  %v818 = vadd.f32 %v774, %v817
  %819 = vmatmul.bf16.gmra.mxu0 %v696
  %v820 = vpop.f32.mrf.mxu0
  %v821 = vadd.f32 %v777, %v820
  %v822 = vpop.f32.mrf.mxu0
  %v823 = vadd.f32 %v779, %v822
  %824 = vmatmul.bf16.gmra.mxu0 %v700
  %v825 = vpop.f32.mrf.mxu0
  %v826 = vadd.f32 %v782, %v825
  %v827 = vpop.f32.mrf.mxu0
  %v828 = vadd.f32 %v784, %v827
  %829 = vmatmul.bf16.gmra.mxu0 %v704
  %v830 = vpop.f32.mrf.mxu0
  %v831 = vadd.f32 %v787, %v830
  %v832 = vpop.f32.mrf.mxu0
  %v833 = vadd.f32 %v789, %v832
  %834 = vmatmul.bf16.gmra.mxu0 %v708
  %v835 = vpop.f32.mrf.mxu0
  %v836 = vadd.f32 %v792, %v835
  %v837 = vpop.f32.mrf.mxu0
  %v838 = vadd.f32 %v794, %v837
  %839 = vmatmul.bf16.gmra.mxu0 %v712
  %v840 = vpop.f32.mrf.mxu0
  %v841 = vadd.f32 %v797, %v840
  %v842 = vpop.f32.mrf.mxu0
  %v843 = vadd.f32 %v799, %v842
  %844 = vdwg.mxu0
  %845 = vmatpush.bf16.msra.mxu0 %v349
  %846 = vmatpush.bf16.msra.mxu0 %v348
  %847 = vmatpush.bf16.msra.mxu0 %v347
  %848 = vmatpush.bf16.msra.mxu0 %v346
  %849 = vmatpush.bf16.msra.mxu0 %v345
  %850 = vmatpush.bf16.msra.mxu0 %v344
  %851 = vmatpush.bf16.msra.mxu0 %v343
  %852 = vmatpush.bf16.msra.mxu0 %v342
  %853 = vmatmul.bf16.gmra.mxu0 %v689
  %v854 = vpop.f32.mrf.mxu0
  %v855 = vadd.f32 %v811, %v854
  %v856 = vpop.f32.mrf.mxu0
  %v857 = vadd.f32 %v813, %v856
  %858 = vmatmul.bf16.gmra.mxu0 %v693
  %v859 = vpop.f32.mrf.mxu0
  %v860 = vadd.f32 %v816, %v859
  %v861 = vpop.f32.mrf.mxu0
  %v862 = vadd.f32 %v818, %v861
  %863 = vmatmul.bf16.gmra.mxu0 %v697
  %v864 = vpop.f32.mrf.mxu0
  %v865 = vadd.f32 %v821, %v864
  %v866 = vpop.f32.mrf.mxu0
  %v867 = vadd.f32 %v823, %v866
  %868 = vmatmul.bf16.gmra.mxu0 %v701
  %v869 = vpop.f32.mrf.mxu0
  %v870 = vadd.f32 %v826, %v869
  %v871 = vpop.f32.mrf.mxu0
  %v872 = vadd.f32 %v828, %v871
  %873 = vmatmul.bf16.gmra.mxu0 %v705
  %v874 = vpop.f32.mrf.mxu0
  %v875 = vadd.f32 %v831, %v874
  %v876 = vpop.f32.mrf.mxu0
  %v877 = vadd.f32 %v833, %v876
  %878 = vmatmul.bf16.gmra.mxu0 %v709
  %v879 = vpop.f32.mrf.mxu0
  %v880 = vadd.f32 %v836, %v879
  %v881 = vpop.f32.mrf.mxu0
  %v882 = vadd.f32 %v838, %v881
  %883 = vmatmul.bf16.gmra.mxu0 %v713
  %v884 = vpop.f32.mrf.mxu0
  %v885 = vadd.f32 %v841, %v884
  %v886 = vpop.f32.mrf.mxu0
  %v887 = vadd.f32 %v843, %v886
  %888 = vdwg.mxu0
  %889 = vmatpush.bf16.msra.mxu0 0
  %890 = vmatpush.bf16.msra.mxu0 0
  %891 = vmatpush.bf16.msra.mxu0 0
  %892 = vmatpush.bf16.msra.mxu0 0
  %893 = vmatpush.bf16.msra.mxu0 0
  %894 = vmatpush.bf16.msra.mxu0 0
  %895 = vmatpush.bf16.msra.mxu0 0
  %896 = vmatpush.bf16.msra.mxu0 %v350
  %897 = vmatmul.bf16.gmra.mxu0 %v737
  %v898 = vpop.f32.mrf.mxu0
  %v899 = vadd.f32 %v855, %v898
  %v900 = vpop.f32.mrf.mxu0
  %v901 = vadd.f32 %v857, %v900
  %902 = vmatmul.bf16.gmra.mxu0 %v740
  %v903 = vpop.f32.mrf.mxu0
  %v904 = vadd.f32 %v860, %v903
  %v905 = vpop.f32.mrf.mxu0
  %v906 = vadd.f32 %v862, %v905
  %907 = vmatmul.bf16.gmra.mxu0 %v743
  %v908 = vpop.f32.mrf.mxu0
  %v909 = vadd.f32 %v865, %v908
  %v910 = vpop.f32.mrf.mxu0
  %v911 = vadd.f32 %v867, %v910
  %912 = vmatmul.bf16.gmra.mxu0 %v746
  %v913 = vpop.f32.mrf.mxu0
  %v914 = vadd.f32 %v870, %v913
  %v915 = vpop.f32.mrf.mxu0
  %v916 = vadd.f32 %v872, %v915
  %917 = vmatmul.bf16.gmra.mxu0 %v749
  %v918 = vpop.f32.mrf.mxu0
  %v919 = vadd.f32 %v875, %v918
  %v920 = vpop.f32.mrf.mxu0
  %v921 = vadd.f32 %v877, %v920
  %922 = vmatmul.bf16.gmra.mxu0 %v752
  %v923 = vpop.f32.mrf.mxu0
  %v924 = vadd.f32 %v880, %v923
  %v925 = vpop.f32.mrf.mxu0
  %v926 = vadd.f32 %v882, %v925
  %927 = vmatmul.bf16.gmra.mxu0 %v755
  %v928 = vpop.f32.mrf.mxu0
  %v929 = vadd.f32 %v885, %v928
  %v930 = vpop.f32.mrf.mxu0
  %v931 = vadd.f32 %v887, %v930
  %932 = vdwg.mxu0
  %v933 = vmax.f32 %v540, %v899
  %v934 = vmax.f32 %v542, %v901
  %v935 = vmax.f32 %v545, %v904
  %v936 = vmax.f32 %v547, %v906
  %v937 = vmax.f32 %v550, %v909
  %v938 = vmax.f32 %v552, %v911
  %v939 = vmax.f32 %v555, %v914
  %v940 = vmax.f32 %v557, %v916
  %v941 = vmax.f32 %v560, %v919
  %v942 = vmax.f32 %v562, %v921
  %v943 = vmax.f32 %v565, %v924
  %v944 = vmax.f32 %v567, %v926
  %v945 = vmax.f32 %v570, %v929
  %v946 = vmax.f32 %v572, %v931
  %s947 = scalar_lea.vmem %s0, 448
  %v948 = vld [vmem:[%s947] sm:$0xff]
  %v949 = vld [vmem:[%s947 + $0x8] sm:$0xff]
  %v950 = vld [vmem:[%s947 + $0x10] sm:$0xff]
  %v951 = vld [vmem:[%s947 + $0x18] sm:$0xff]
  %v952 = vld [vmem:[%s947 + $0x20] sm:$0xff]
  %v953 = vld [vmem:[%s947 + $0x28] sm:$0xff]
  %v954 = vld [vmem:[%s947 + $0x30] sm:$0xff]
  %v955 = vld [vmem:[%s947 + $0x38] sm:$0xff]
  %v956 = vld [vmem:[%s947 + $0x40] sm:$0xff]
  %v957 = vld [vmem:[%s947 + $0x48] sm:$0xff]
  %v958 = vld [vmem:[%s947 + $0x50] sm:$0xff]
  %v959 = vld [vmem:[%s947 + $0x58] sm:$0xff]
  %v960 = vld [vmem:[%s947 + $0x60] sm:$0xff]
  %v961 = vld [vmem:[%s947 + $0x68] sm:$0xff]
  %v962 = vld [vmem:[%s947 + $0x70] sm:$0xff]
  %v963 = vld [vmem:[%s947 + $0x78] sm:$0xff]
  %v964 = vld [vmem:[%s947 + $0x80] sm:$0xff]
  %v965 = vld [vmem:[%s947 + $0x88] sm:$0xff]
  %v966 = vld [vmem:[%s947 + $0x90] sm:$0xff]
  %v967 = vld [vmem:[%s947 + $0x98] sm:$0xff]
  %v968 = vld [vmem:[%s947 + $0xa0] sm:$0xff]
  %v969 = vld [vmem:[%s947 + $0xa8] sm:$0xff]
  %v970 = vld [vmem:[%s947 + $0xb0] sm:$0xff]
  %v971 = vld [vmem:[%s947 + $0xb8] sm:$0xff]
  %v972 = vld [vmem:[%s947 + $0xc0] sm:$0xff]
  %v973 = vld [vmem:[%s947 + $0xc8] sm:$0xff]
  %v974 = vld [vmem:[%s947 + $0xd0] sm:$0xff]
  %v975 = vld [vmem:[%s947 + $0xd8] sm:$0xff]
  %v1004 = vunpack.c.l.b16 %v948
  %v1005 = vunpack.c.h.b16 %v948
  %v1006 = vunpack.c.l.b16 %v949
  %v1007 = vunpack.c.h.b16 %v949
  %v1008 = vunpack.c.l.b16 %v950
  %v1009 = vunpack.c.h.b16 %v950
  %v1010 = vunpack.c.l.b16 %v951
  %v1011 = vunpack.c.h.b16 %v951
  %v1012 = vunpack.c.l.b16 %v952
  %v1013 = vunpack.c.h.b16 %v952
  %v1014 = vunpack.c.l.b16 %v953
  %v1015 = vunpack.c.h.b16 %v953
  %v1016 = vunpack.c.l.b16 %v954
  %v1017 = vunpack.c.h.b16 %v954
  %v1018 = vunpack.c.l.b16 %v955
  %v1019 = vunpack.c.h.b16 %v955
  %v1020 = vunpack.c.l.b16 %v956
  %v1021 = vunpack.c.h.b16 %v956
  %v1022 = vunpack.c.l.b16 %v957
  %v1023 = vunpack.c.h.b16 %v957
  %v1024 = vunpack.c.l.b16 %v958
  %v1025 = vunpack.c.h.b16 %v958
  %v1026 = vunpack.c.l.b16 %v959
  %v1027 = vunpack.c.h.b16 %v959
  %v1028 = vunpack.c.l.b16 %v960
  %v1029 = vunpack.c.h.b16 %v960
  %v1030 = vunpack.c.l.b16 %v961
  %v1031 = vunpack.c.h.b16 %v961
  %v1032 = vunpack.c.l.b16 %v962
  %v1033 = vunpack.c.h.b16 %v962
  %v1034 = vunpack.c.l.b16 %v963
  %v1035 = vunpack.c.h.b16 %v963
  %v1036 = vunpack.c.l.b16 %v964
  %v1037 = vunpack.c.h.b16 %v964
  %v1038 = vunpack.c.l.b16 %v965
  %v1039 = vunpack.c.h.b16 %v965
  %v1040 = vunpack.c.l.b16 %v966
  %v1041 = vunpack.c.h.b16 %v966
  %v1042 = vunpack.c.l.b16 %v967
  %v1043 = vunpack.c.h.b16 %v967
  %v1044 = vunpack.c.l.b16 %v968
  %v1045 = vunpack.c.h.b16 %v968
  %v1046 = vunpack.c.l.b16 %v969
  %v1047 = vunpack.c.h.b16 %v969
  %v1048 = vunpack.c.l.b16 %v970
  %v1049 = vunpack.c.h.b16 %v970
  %v1050 = vunpack.c.l.b16 %v971
  %v1051 = vunpack.c.h.b16 %v971
  %v1052 = vunpack.c.l.b16 %v972
  %v1053 = vunpack.c.h.b16 %v972
  %v1054 = vunpack.c.l.b16 %v973
  %v1055 = vunpack.c.h.b16 %v973
  %v1056 = vunpack.c.l.b16 %v974
  %v1057 = vunpack.c.h.b16 %v974
  %v1058 = vunpack.c.l.b16 %v975
  %v1059 = vunpack.c.h.b16 %v975
  %v1060 = vpack.c.b16 %v1008, %v1004
  %v1061 = vpack.c.b16 %v1009, %v1005
  %v1062 = vpack.c.b16 %v1010, %v1006
  %v1063 = vpack.c.b16 %v1011, %v1007
  %v1064 = vpack.c.b16 %v1016, %v1012
  %v1065 = vpack.c.b16 %v1017, %v1013
  %v1066 = vpack.c.b16 %v1018, %v1014
  %v1067 = vpack.c.b16 %v1019, %v1015
  %v1068 = vpack.c.b16 %v1024, %v1020
  %v1069 = vpack.c.b16 %v1025, %v1021
  %v1070 = vpack.c.b16 %v1026, %v1022
  %v1071 = vpack.c.b16 %v1027, %v1023
  %v1072 = vpack.c.b16 %v1032, %v1028
  %v1073 = vpack.c.b16 %v1033, %v1029
  %v1074 = vpack.c.b16 %v1034, %v1030
  %v1075 = vpack.c.b16 %v1035, %v1031
  %v1076 = vpack.c.b16 %v1040, %v1036
  %v1077 = vpack.c.b16 %v1041, %v1037
  %v1078 = vpack.c.b16 %v1042, %v1038
  %v1079 = vpack.c.b16 %v1043, %v1039
  %v1080 = vpack.c.b16 %v1048, %v1044
  %v1081 = vpack.c.b16 %v1049, %v1045
  %v1082 = vpack.c.b16 %v1050, %v1046
  %v1083 = vpack.c.b16 %v1051, %v1047
  %v1084 = vpack.c.b16 %v1056, %v1052
  %v1085 = vpack.c.b16 %v1057, %v1053
  %v1086 = vpack.c.b16 %v1058, %v1054
  %v1087 = vpack.c.b16 %v1059, %v1055
  %v1110 = vsel %vm376, %v1063, 0
  %v1113 = vsel %vm376, %v1067, 0
  %v1116 = vsel %vm376, %v1071, 0
  %v1119 = vsel %vm376, %v1075, 0
  %v1122 = vsel %vm376, %v1079, 0
  %v1125 = vsel %vm376, %v1083, 0
  %v1128 = vsel %vm376, %v1087, 0
  %1130 = vmatpush.bf16.msra.mxu0 %v333
  %1131 = vmatpush.bf16.msra.mxu0 %v332
  %1132 = vmatpush.bf16.msra.mxu0 %v331
  %1133 = vmatpush.bf16.msra.mxu0 %v330
  %1134 = vmatpush.bf16.msra.mxu0 %v329
  %1135 = vmatpush.bf16.msra.mxu0 %v328
  %1136 = vmatpush.bf16.msra.mxu0 %v327
  %1137 = vmatpush.bf16.msra.mxu0 %v326
  %1138 = vmatmul.bf16.gmra.mxu0 %v1060
  %v1139 = vpop.f32.mrf.mxu0
  %v1140 = vadd.f32 0.0, %v1139
  %v1141 = vpop.f32.mrf.mxu0
  %v1142 = vadd.f32 0.0, %v1141
  %1143 = vmatmul.bf16.gmra.mxu0 %v1064
  %v1144 = vpop.f32.mrf.mxu0
  %v1145 = vadd.f32 0.0, %v1144
  %v1146 = vpop.f32.mrf.mxu0
  %v1147 = vadd.f32 0.0, %v1146
  %1148 = vmatmul.bf16.gmra.mxu0 %v1068
  %v1149 = vpop.f32.mrf.mxu0
  %v1150 = vadd.f32 0.0, %v1149
  %v1151 = vpop.f32.mrf.mxu0
  %v1152 = vadd.f32 0.0, %v1151
  %1153 = vmatmul.bf16.gmra.mxu0 %v1072
  %v1154 = vpop.f32.mrf.mxu0
  %v1155 = vadd.f32 0.0, %v1154
  %v1156 = vpop.f32.mrf.mxu0
  %v1157 = vadd.f32 0.0, %v1156
  %1158 = vmatmul.bf16.gmra.mxu0 %v1076
  %v1159 = vpop.f32.mrf.mxu0
  %v1160 = vadd.f32 0.0, %v1159
  %v1161 = vpop.f32.mrf.mxu0
  %v1162 = vadd.f32 0.0, %v1161
  %1163 = vmatmul.bf16.gmra.mxu0 %v1080
  %v1164 = vpop.f32.mrf.mxu0
  %v1165 = vadd.f32 0.0, %v1164
  %v1166 = vpop.f32.mrf.mxu0
  %v1167 = vadd.f32 0.0, %v1166
  %1168 = vmatmul.bf16.gmra.mxu0 %v1084
  %v1169 = vpop.f32.mrf.mxu0
  %v1170 = vadd.f32 0.0, %v1169
  %v1171 = vpop.f32.mrf.mxu0
  %v1172 = vadd.f32 0.0, %v1171
  %1173 = vdwg.mxu0
  %1174 = vmatpush.bf16.msra.mxu0 %v341
  %1175 = vmatpush.bf16.msra.mxu0 %v340
  %1176 = vmatpush.bf16.msra.mxu0 %v339
  %1177 = vmatpush.bf16.msra.mxu0 %v338
  %1178 = vmatpush.bf16.msra.mxu0 %v337
  %1179 = vmatpush.bf16.msra.mxu0 %v336
  %1180 = vmatpush.bf16.msra.mxu0 %v335
  %1181 = vmatpush.bf16.msra.mxu0 %v334
  %1182 = vmatmul.bf16.gmra.mxu0 %v1061
  %v1183 = vpop.f32.mrf.mxu0
  %v1184 = vadd.f32 %v1140, %v1183
  %v1185 = vpop.f32.mrf.mxu0
  %v1186 = vadd.f32 %v1142, %v1185
  %1187 = vmatmul.bf16.gmra.mxu0 %v1065
  %v1188 = vpop.f32.mrf.mxu0
  %v1189 = vadd.f32 %v1145, %v1188
  %v1190 = vpop.f32.mrf.mxu0
  %v1191 = vadd.f32 %v1147, %v1190
  %1192 = vmatmul.bf16.gmra.mxu0 %v1069
  %v1193 = vpop.f32.mrf.mxu0
  %v1194 = vadd.f32 %v1150, %v1193
  %v1195 = vpop.f32.mrf.mxu0
  %v1196 = vadd.f32 %v1152, %v1195
  %1197 = vmatmul.bf16.gmra.mxu0 %v1073
  %v1198 = vpop.f32.mrf.mxu0
  %v1199 = vadd.f32 %v1155, %v1198
  %v1200 = vpop.f32.mrf.mxu0
  %v1201 = vadd.f32 %v1157, %v1200
  %1202 = vmatmul.bf16.gmra.mxu0 %v1077
  %v1203 = vpop.f32.mrf.mxu0
  %v1204 = vadd.f32 %v1160, %v1203
  %v1205 = vpop.f32.mrf.mxu0
  %v1206 = vadd.f32 %v1162, %v1205
  %1207 = vmatmul.bf16.gmra.mxu0 %v1081
  %v1208 = vpop.f32.mrf.mxu0
  %v1209 = vadd.f32 %v1165, %v1208
  %v1210 = vpop.f32.mrf.mxu0
  %v1211 = vadd.f32 %v1167, %v1210
  %1212 = vmatmul.bf16.gmra.mxu0 %v1085
  %v1213 = vpop.f32.mrf.mxu0
  %v1214 = vadd.f32 %v1170, %v1213
  %v1215 = vpop.f32.mrf.mxu0
  %v1216 = vadd.f32 %v1172, %v1215
  %1217 = vdwg.mxu0
  %1218 = vmatpush.bf16.msra.mxu0 %v349
  %1219 = vmatpush.bf16.msra.mxu0 %v348
  %1220 = vmatpush.bf16.msra.mxu0 %v347
  %1221 = vmatpush.bf16.msra.mxu0 %v346
  %1222 = vmatpush.bf16.msra.mxu0 %v345
  %1223 = vmatpush.bf16.msra.mxu0 %v344
  %1224 = vmatpush.bf16.msra.mxu0 %v343
  %1225 = vmatpush.bf16.msra.mxu0 %v342
  %1226 = vmatmul.bf16.gmra.mxu0 %v1062
  %v1227 = vpop.f32.mrf.mxu0
  %v1228 = vadd.f32 %v1184, %v1227
  %v1229 = vpop.f32.mrf.mxu0
  %v1230 = vadd.f32 %v1186, %v1229
  %1231 = vmatmul.bf16.gmra.mxu0 %v1066
  %v1232 = vpop.f32.mrf.mxu0
  %v1233 = vadd.f32 %v1189, %v1232
  %v1234 = vpop.f32.mrf.mxu0
  %v1235 = vadd.f32 %v1191, %v1234
  %1236 = vmatmul.bf16.gmra.mxu0 %v1070
  %v1237 = vpop.f32.mrf.mxu0
  %v1238 = vadd.f32 %v1194, %v1237
  %v1239 = vpop.f32.mrf.mxu0
  %v1240 = vadd.f32 %v1196, %v1239
  %1241 = vmatmul.bf16.gmra.mxu0 %v1074
  %v1242 = vpop.f32.mrf.mxu0
  %v1243 = vadd.f32 %v1199, %v1242
  %v1244 = vpop.f32.mrf.mxu0
  %v1245 = vadd.f32 %v1201, %v1244
  %1246 = vmatmul.bf16.gmra.mxu0 %v1078
  %v1247 = vpop.f32.mrf.mxu0
  %v1248 = vadd.f32 %v1204, %v1247
  %v1249 = vpop.f32.mrf.mxu0
  %v1250 = vadd.f32 %v1206, %v1249
  %1251 = vmatmul.bf16.gmra.mxu0 %v1082
  %v1252 = vpop.f32.mrf.mxu0
  %v1253 = vadd.f32 %v1209, %v1252
  %v1254 = vpop.f32.mrf.mxu0
  %v1255 = vadd.f32 %v1211, %v1254
  %1256 = vmatmul.bf16.gmra.mxu0 %v1086
  %v1257 = vpop.f32.mrf.mxu0
  %v1258 = vadd.f32 %v1214, %v1257
  %v1259 = vpop.f32.mrf.mxu0
  %v1260 = vadd.f32 %v1216, %v1259
  %1261 = vdwg.mxu0
  %1262 = vmatpush.bf16.msra.mxu0 0
  %1263 = vmatpush.bf16.msra.mxu0 0
  %1264 = vmatpush.bf16.msra.mxu0 0
  %1265 = vmatpush.bf16.msra.mxu0 0
  %1266 = vmatpush.bf16.msra.mxu0 0
  %1267 = vmatpush.bf16.msra.mxu0 0
  %1268 = vmatpush.bf16.msra.mxu0 0
  %1269 = vmatpush.bf16.msra.mxu0 %v350
  %1270 = vmatmul.bf16.gmra.mxu0 %v1110
  %v1271 = vpop.f32.mrf.mxu0
  %v1272 = vadd.f32 %v1228, %v1271
  %v1273 = vpop.f32.mrf.mxu0
  %v1274 = vadd.f32 %v1230, %v1273
  %1275 = vmatmul.bf16.gmra.mxu0 %v1113
  %v1276 = vpop.f32.mrf.mxu0
  %v1277 = vadd.f32 %v1233, %v1276
  %v1278 = vpop.f32.mrf.mxu0
  %v1279 = vadd.f32 %v1235, %v1278
  %1280 = vmatmul.bf16.gmra.mxu0 %v1116
  %v1281 = vpop.f32.mrf.mxu0
  %v1282 = vadd.f32 %v1238, %v1281
  %v1283 = vpop.f32.mrf.mxu0
  %v1284 = vadd.f32 %v1240, %v1283
  %1285 = vmatmul.bf16.gmra.mxu0 %v1119
  %v1286 = vpop.f32.mrf.mxu0
  %v1287 = vadd.f32 %v1243, %v1286
  %v1288 = vpop.f32.mrf.mxu0
  %v1289 = vadd.f32 %v1245, %v1288
  %1290 = vmatmul.bf16.gmra.mxu0 %v1122
  %v1291 = vpop.f32.mrf.mxu0
  %v1292 = vadd.f32 %v1248, %v1291
  %v1293 = vpop.f32.mrf.mxu0
  %v1294 = vadd.f32 %v1250, %v1293
  %1295 = vmatmul.bf16.gmra.mxu0 %v1125
  %v1296 = vpop.f32.mrf.mxu0
  %v1297 = vadd.f32 %v1253, %v1296
  %v1298 = vpop.f32.mrf.mxu0
  %v1299 = vadd.f32 %v1255, %v1298
  %1300 = vmatmul.bf16.gmra.mxu0 %v1128
  %v1301 = vpop.f32.mrf.mxu0
  %v1302 = vadd.f32 %v1258, %v1301
  %v1303 = vpop.f32.mrf.mxu0
  %v1304 = vadd.f32 %v1260, %v1303
  %1305 = vdwg.mxu0
  %v1306 = vmax.f32 %v933, %v1272
  %v1307 = vmax.f32 %v934, %v1274
  %v1308 = vmax.f32 %v935, %v1277
  %v1309 = vmax.f32 %v936, %v1279
  %v1310 = vmax.f32 %v937, %v1282
  %v1311 = vmax.f32 %v938, %v1284
  %v1312 = vmax.f32 %v939, %v1287
  %v1313 = vmax.f32 %v940, %v1289
  %v1314 = vmax.f32 %v941, %v1292
  %v1315 = vmax.f32 %v942, %v1294
  %v1316 = vmax.f32 %v943, %v1297
  %v1317 = vmax.f32 %v944, %v1299
  %v1318 = vmax.f32 %v945, %v1302
  %v1319 = vmax.f32 %v946, %v1304
  %s1320 = scalar_lea.vmem %s0, 672
  %v1321 = vld [vmem:[%s1320] sm:$0xff]
  %v1322 = vld [vmem:[%s1320 + $0x8] sm:$0xff]
  %v1323 = vld [vmem:[%s1320 + $0x10] sm:$0xff]
  %v1324 = vld [vmem:[%s1320 + $0x18] sm:$0xff]
  %v1325 = vld [vmem:[%s1320 + $0x20] sm:$0xff]
  %v1326 = vld [vmem:[%s1320 + $0x28] sm:$0xff]
  %v1327 = vld [vmem:[%s1320 + $0x30] sm:$0xff]
  %v1328 = vld [vmem:[%s1320 + $0x38] sm:$0xff]
  %v1329 = vld [vmem:[%s1320 + $0x40] sm:$0xff]
  %v1330 = vld [vmem:[%s1320 + $0x48] sm:$0xff]
  %v1331 = vld [vmem:[%s1320 + $0x50] sm:$0xff]
  %v1332 = vld [vmem:[%s1320 + $0x58] sm:$0xff]
  %v1333 = vld [vmem:[%s1320 + $0x60] sm:$0xff]
  %v1334 = vld [vmem:[%s1320 + $0x68] sm:$0xff]
  %v1335 = vld [vmem:[%s1320 + $0x70] sm:$0xff]
  %v1336 = vld [vmem:[%s1320 + $0x78] sm:$0xff]
  %v1337 = vld [vmem:[%s1320 + $0x80] sm:$0xff]
  %v1338 = vld [vmem:[%s1320 + $0x88] sm:$0xff]
  %v1339 = vld [vmem:[%s1320 + $0x90] sm:$0xff]
  %v1340 = vld [vmem:[%s1320 + $0x98] sm:$0xff]
  %v1341 = vld [vmem:[%s1320 + $0xa0] sm:$0xff]
  %v1342 = vld [vmem:[%s1320 + $0xa8] sm:$0xff]
  %v1343 = vld [vmem:[%s1320 + $0xb0] sm:$0xff]
  %v1344 = vld [vmem:[%s1320 + $0xb8] sm:$0xff]
  %v1345 = vld [vmem:[%s1320 + $0xc0] sm:$0xff]
  %v1346 = vld [vmem:[%s1320 + $0xc8] sm:$0xff]
  %v1347 = vld [vmem:[%s1320 + $0xd0] sm:$0xff]
  %v1348 = vld [vmem:[%s1320 + $0xd8] sm:$0xff]
  %v1377 = vunpack.c.l.b16 %v1321
  %v1378 = vunpack.c.h.b16 %v1321
  %v1379 = vunpack.c.l.b16 %v1322
  %v1380 = vunpack.c.h.b16 %v1322
  %v1381 = vunpack.c.l.b16 %v1323
  %v1382 = vunpack.c.h.b16 %v1323
  %v1383 = vunpack.c.l.b16 %v1324
  %v1384 = vunpack.c.h.b16 %v1324
  %v1385 = vunpack.c.l.b16 %v1325
  %v1386 = vunpack.c.h.b16 %v1325
  %v1387 = vunpack.c.l.b16 %v1326
  %v1388 = vunpack.c.h.b16 %v1326
  %v1389 = vunpack.c.l.b16 %v1327
  %v1390 = vunpack.c.h.b16 %v1327
  %v1391 = vunpack.c.l.b16 %v1328
  %v1392 = vunpack.c.h.b16 %v1328
  %v1393 = vunpack.c.l.b16 %v1329
  %v1394 = vunpack.c.h.b16 %v1329
  %v1395 = vunpack.c.l.b16 %v1330
  %v1396 = vunpack.c.h.b16 %v1330
  %v1397 = vunpack.c.l.b16 %v1331
  %v1398 = vunpack.c.h.b16 %v1331
  %v1399 = vunpack.c.l.b16 %v1332
  %v1400 = vunpack.c.h.b16 %v1332
  %v1401 = vunpack.c.l.b16 %v1333
  %v1402 = vunpack.c.h.b16 %v1333
  %v1403 = vunpack.c.l.b16 %v1334
  %v1404 = vunpack.c.h.b16 %v1334
  %v1405 = vunpack.c.l.b16 %v1335
  %v1406 = vunpack.c.h.b16 %v1335
  %v1407 = vunpack.c.l.b16 %v1336
  %v1408 = vunpack.c.h.b16 %v1336
  %v1409 = vunpack.c.l.b16 %v1337
  %v1410 = vunpack.c.h.b16 %v1337
  %v1411 = vunpack.c.l.b16 %v1338
  %v1412 = vunpack.c.h.b16 %v1338
  %v1413 = vunpack.c.l.b16 %v1339
  %v1414 = vunpack.c.h.b16 %v1339
  %v1415 = vunpack.c.l.b16 %v1340
  %v1416 = vunpack.c.h.b16 %v1340
  %v1417 = vunpack.c.l.b16 %v1341
  %v1418 = vunpack.c.h.b16 %v1341
  %v1419 = vunpack.c.l.b16 %v1342
  %v1420 = vunpack.c.h.b16 %v1342
  %v1421 = vunpack.c.l.b16 %v1343
  %v1422 = vunpack.c.h.b16 %v1343
  %v1423 = vunpack.c.l.b16 %v1344
  %v1424 = vunpack.c.h.b16 %v1344
  %v1425 = vunpack.c.l.b16 %v1345
  %v1426 = vunpack.c.h.b16 %v1345
  %v1427 = vunpack.c.l.b16 %v1346
  %v1428 = vunpack.c.h.b16 %v1346
  %v1429 = vunpack.c.l.b16 %v1347
  %v1430 = vunpack.c.h.b16 %v1347
  %v1431 = vunpack.c.l.b16 %v1348
  %v1432 = vunpack.c.h.b16 %v1348
  %v1433 = vpack.c.b16 %v1381, %v1377
  %v1434 = vpack.c.b16 %v1382, %v1378
  %v1435 = vpack.c.b16 %v1383, %v1379
  %v1436 = vpack.c.b16 %v1384, %v1380
  %v1437 = vpack.c.b16 %v1389, %v1385
  %v1438 = vpack.c.b16 %v1390, %v1386
  %v1439 = vpack.c.b16 %v1391, %v1387
  %v1440 = vpack.c.b16 %v1392, %v1388
  %v1441 = vpack.c.b16 %v1397, %v1393
  %v1442 = vpack.c.b16 %v1398, %v1394
  %v1443 = vpack.c.b16 %v1399, %v1395
  %v1444 = vpack.c.b16 %v1400, %v1396
  %v1445 = vpack.c.b16 %v1405, %v1401
  %v1446 = vpack.c.b16 %v1406, %v1402
  %v1447 = vpack.c.b16 %v1407, %v1403
  %v1448 = vpack.c.b16 %v1408, %v1404
  %v1449 = vpack.c.b16 %v1413, %v1409
  %v1450 = vpack.c.b16 %v1414, %v1410
  %v1451 = vpack.c.b16 %v1415, %v1411
  %v1452 = vpack.c.b16 %v1416, %v1412
  %v1453 = vpack.c.b16 %v1421, %v1417
  %v1454 = vpack.c.b16 %v1422, %v1418
  %v1455 = vpack.c.b16 %v1423, %v1419
  %v1456 = vpack.c.b16 %v1424, %v1420
  %v1457 = vpack.c.b16 %v1429, %v1425
  %v1458 = vpack.c.b16 %v1430, %v1426
  %v1459 = vpack.c.b16 %v1431, %v1427
  %v1460 = vpack.c.b16 %v1432, %v1428
  %v1483 = vsel %vm376, %v1436, 0
  %v1486 = vsel %vm376, %v1440, 0
  %v1489 = vsel %vm376, %v1444, 0
  %v1492 = vsel %vm376, %v1448, 0
  %v1495 = vsel %vm376, %v1452, 0
  %v1498 = vsel %vm376, %v1456, 0
  %v1501 = vsel %vm376, %v1460, 0
  %1503 = vmatpush.bf16.msra.mxu0 %v333
  %1504 = vmatpush.bf16.msra.mxu0 %v332
  %1505 = vmatpush.bf16.msra.mxu0 %v331
  %1506 = vmatpush.bf16.msra.mxu0 %v330
  %1507 = vmatpush.bf16.msra.mxu0 %v329
  %1508 = vmatpush.bf16.msra.mxu0 %v328
  %1509 = vmatpush.bf16.msra.mxu0 %v327
  %1510 = vmatpush.bf16.msra.mxu0 %v326
  %1511 = vmatmul.bf16.gmra.mxu0 %v1433
  %v1512 = vpop.f32.mrf.mxu0
  %v1513 = vadd.f32 0.0, %v1512
  %v1514 = vpop.f32.mrf.mxu0
  %v1515 = vadd.f32 0.0, %v1514
  %1516 = vmatmul.bf16.gmra.mxu0 %v1437
  %v1517 = vpop.f32.mrf.mxu0
  %v1518 = vadd.f32 0.0, %v1517
  %v1519 = vpop.f32.mrf.mxu0
  %v1520 = vadd.f32 0.0, %v1519
  %1521 = vmatmul.bf16.gmra.mxu0 %v1441
  %v1522 = vpop.f32.mrf.mxu0
  %v1523 = vadd.f32 0.0, %v1522
  %v1524 = vpop.f32.mrf.mxu0
  %v1525 = vadd.f32 0.0, %v1524
  %1526 = vmatmul.bf16.gmra.mxu0 %v1445
  %v1527 = vpop.f32.mrf.mxu0
  %v1528 = vadd.f32 0.0, %v1527
  %v1529 = vpop.f32.mrf.mxu0
  %v1530 = vadd.f32 0.0, %v1529
  %1531 = vmatmul.bf16.gmra.mxu0 %v1449
  %v1532 = vpop.f32.mrf.mxu0
  %v1533 = vadd.f32 0.0, %v1532
  %v1534 = vpop.f32.mrf.mxu0
  %v1535 = vadd.f32 0.0, %v1534
  %1536 = vmatmul.bf16.gmra.mxu0 %v1453
  %v1537 = vpop.f32.mrf.mxu0
  %v1538 = vadd.f32 0.0, %v1537
  %v1539 = vpop.f32.mrf.mxu0
  %v1540 = vadd.f32 0.0, %v1539
  %1541 = vmatmul.bf16.gmra.mxu0 %v1457
  %v1542 = vpop.f32.mrf.mxu0
  %v1543 = vadd.f32 0.0, %v1542
  %v1544 = vpop.f32.mrf.mxu0
  %v1545 = vadd.f32 0.0, %v1544
  %1546 = vdwg.mxu0
  %1547 = vmatpush.bf16.msra.mxu0 %v341
  %1548 = vmatpush.bf16.msra.mxu0 %v340
  %1549 = vmatpush.bf16.msra.mxu0 %v339
  %1550 = vmatpush.bf16.msra.mxu0 %v338
  %1551 = vmatpush.bf16.msra.mxu0 %v337
  %1552 = vmatpush.bf16.msra.mxu0 %v336
  %1553 = vmatpush.bf16.msra.mxu0 %v335
  %1554 = vmatpush.bf16.msra.mxu0 %v334
  %1555 = vmatmul.bf16.gmra.mxu0 %v1434
  %v1556 = vpop.f32.mrf.mxu0
  %v1557 = vadd.f32 %v1513, %v1556
  %v1558 = vpop.f32.mrf.mxu0
  %v1559 = vadd.f32 %v1515, %v1558
  %1560 = vmatmul.bf16.gmra.mxu0 %v1438
  %v1561 = vpop.f32.mrf.mxu0
  %v1562 = vadd.f32 %v1518, %v1561
  %v1563 = vpop.f32.mrf.mxu0
  %v1564 = vadd.f32 %v1520, %v1563
  %1565 = vmatmul.bf16.gmra.mxu0 %v1442
  %v1566 = vpop.f32.mrf.mxu0
  %v1567 = vadd.f32 %v1523, %v1566
  %v1568 = vpop.f32.mrf.mxu0
  %v1569 = vadd.f32 %v1525, %v1568
  %1570 = vmatmul.bf16.gmra.mxu0 %v1446
  %v1571 = vpop.f32.mrf.mxu0
  %v1572 = vadd.f32 %v1528, %v1571
  %v1573 = vpop.f32.mrf.mxu0
  %v1574 = vadd.f32 %v1530, %v1573
  %1575 = vmatmul.bf16.gmra.mxu0 %v1450
  %v1576 = vpop.f32.mrf.mxu0
  %v1577 = vadd.f32 %v1533, %v1576
  %v1578 = vpop.f32.mrf.mxu0
  %v1579 = vadd.f32 %v1535, %v1578
  %1580 = vmatmul.bf16.gmra.mxu0 %v1454
  %v1581 = vpop.f32.mrf.mxu0
  %v1582 = vadd.f32 %v1538, %v1581
  %v1583 = vpop.f32.mrf.mxu0
  %v1584 = vadd.f32 %v1540, %v1583
  %1585 = vmatmul.bf16.gmra.mxu0 %v1458
  %v1586 = vpop.f32.mrf.mxu0
  %v1587 = vadd.f32 %v1543, %v1586
  %v1588 = vpop.f32.mrf.mxu0
  %v1589 = vadd.f32 %v1545, %v1588
  %1590 = vdwg.mxu0
  %1591 = vmatpush.bf16.msra.mxu0 %v349
  %1592 = vmatpush.bf16.msra.mxu0 %v348
  %1593 = vmatpush.bf16.msra.mxu0 %v347
  %1594 = vmatpush.bf16.msra.mxu0 %v346
  %1595 = vmatpush.bf16.msra.mxu0 %v345
  %1596 = vmatpush.bf16.msra.mxu0 %v344
  %1597 = vmatpush.bf16.msra.mxu0 %v343
  %1598 = vmatpush.bf16.msra.mxu0 %v342
  %1599 = vmatmul.bf16.gmra.mxu0 %v1435
  %v1600 = vpop.f32.mrf.mxu0
  %v1601 = vadd.f32 %v1557, %v1600
  %v1602 = vpop.f32.mrf.mxu0
  %v1603 = vadd.f32 %v1559, %v1602
  %1604 = vmatmul.bf16.gmra.mxu0 %v1439
  %v1605 = vpop.f32.mrf.mxu0
  %v1606 = vadd.f32 %v1562, %v1605
  %v1607 = vpop.f32.mrf.mxu0
  %v1608 = vadd.f32 %v1564, %v1607
  %1609 = vmatmul.bf16.gmra.mxu0 %v1443
  %v1610 = vpop.f32.mrf.mxu0
  %v1611 = vadd.f32 %v1567, %v1610
  %v1612 = vpop.f32.mrf.mxu0
  %v1613 = vadd.f32 %v1569, %v1612
  %1614 = vmatmul.bf16.gmra.mxu0 %v1447
  %v1615 = vpop.f32.mrf.mxu0
  %v1616 = vadd.f32 %v1572, %v1615
  %v1617 = vpop.f32.mrf.mxu0
  %v1618 = vadd.f32 %v1574, %v1617
  %1619 = vmatmul.bf16.gmra.mxu0 %v1451
  %v1620 = vpop.f32.mrf.mxu0
  %v1621 = vadd.f32 %v1577, %v1620
  %v1622 = vpop.f32.mrf.mxu0
  %v1623 = vadd.f32 %v1579, %v1622
  %1624 = vmatmul.bf16.gmra.mxu0 %v1455
  %v1625 = vpop.f32.mrf.mxu0
  %v1626 = vadd.f32 %v1582, %v1625
  %v1627 = vpop.f32.mrf.mxu0
  %v1628 = vadd.f32 %v1584, %v1627
  %1629 = vmatmul.bf16.gmra.mxu0 %v1459
  %v1630 = vpop.f32.mrf.mxu0
  %v1631 = vadd.f32 %v1587, %v1630
  %v1632 = vpop.f32.mrf.mxu0
  %v1633 = vadd.f32 %v1589, %v1632
  %1634 = vdwg.mxu0
  %1635 = vmatpush.bf16.msra.mxu0 0
  %1636 = vmatpush.bf16.msra.mxu0 0
  %1637 = vmatpush.bf16.msra.mxu0 0
  %1638 = vmatpush.bf16.msra.mxu0 0
  %1639 = vmatpush.bf16.msra.mxu0 0
  %1640 = vmatpush.bf16.msra.mxu0 0
  %1641 = vmatpush.bf16.msra.mxu0 0
  %1642 = vmatpush.bf16.msra.mxu0 %v350
  %1643 = vmatmul.bf16.gmra.mxu0 %v1483
  %v1644 = vpop.f32.mrf.mxu0
  %v1645 = vadd.f32 %v1601, %v1644
  %v1646 = vpop.f32.mrf.mxu0
  %v1647 = vadd.f32 %v1603, %v1646
  %1648 = vmatmul.bf16.gmra.mxu0 %v1486
  %v1649 = vpop.f32.mrf.mxu0
  %v1650 = vadd.f32 %v1606, %v1649
  %v1651 = vpop.f32.mrf.mxu0
  %v1652 = vadd.f32 %v1608, %v1651
  %1653 = vmatmul.bf16.gmra.mxu0 %v1489
  %v1654 = vpop.f32.mrf.mxu0
  %v1655 = vadd.f32 %v1611, %v1654
  %v1656 = vpop.f32.mrf.mxu0
  %v1657 = vadd.f32 %v1613, %v1656
  %1658 = vmatmul.bf16.gmra.mxu0 %v1492
  %v1659 = vpop.f32.mrf.mxu0
  %v1660 = vadd.f32 %v1616, %v1659
  %v1661 = vpop.f32.mrf.mxu0
  %v1662 = vadd.f32 %v1618, %v1661
  %1663 = vmatmul.bf16.gmra.mxu0 %v1495
  %v1664 = vpop.f32.mrf.mxu0
  %v1665 = vadd.f32 %v1621, %v1664
  %v1666 = vpop.f32.mrf.mxu0
  %v1667 = vadd.f32 %v1623, %v1666
  %1668 = vmatmul.bf16.gmra.mxu0 %v1498
  %v1669 = vpop.f32.mrf.mxu0
  %v1670 = vadd.f32 %v1626, %v1669
  %v1671 = vpop.f32.mrf.mxu0
  %v1672 = vadd.f32 %v1628, %v1671
  %1673 = vmatmul.bf16.gmra.mxu0 %v1501
  %v1674 = vpop.f32.mrf.mxu0
  %v1675 = vadd.f32 %v1631, %v1674
  %v1676 = vpop.f32.mrf.mxu0
  %v1677 = vadd.f32 %v1633, %v1676
  %1678 = vdwg.mxu0
  %v1679 = vmax.f32 %v1306, %v1645
  %v1680 = vmax.f32 %v1307, %v1647
  %v1681 = vmax.f32 %v1308, %v1650
  %v1682 = vmax.f32 %v1309, %v1652
  %v1683 = vmax.f32 %v1310, %v1655
  %v1684 = vmax.f32 %v1311, %v1657
  %v1685 = vmax.f32 %v1312, %v1660
  %v1686 = vmax.f32 %v1313, %v1662
  %v1687 = vmax.f32 %v1314, %v1665
  %v1688 = vmax.f32 %v1315, %v1667
  %v1689 = vmax.f32 %v1316, %v1670
  %v1690 = vmax.f32 %v1317, %v1672
  %v1691 = vmax.f32 %v1318, %v1675
  %v1692 = vmax.f32 %v1319, %v1677
  %v1693 = vld [vmem:[%s2] sm:$0x1]
  %v1695 = vperm.slane %v1693, 0
  %v1697 = vadd.f32 %v1679, %v1695
  %v1698 = vadd.f32 %v1680, %v1695
  %v1699 = vadd.f32 %v1681, %v1695
  %v1700 = vadd.f32 %v1682, %v1695
  %v1701 = vadd.f32 %v1683, %v1695
  %v1702 = vadd.f32 %v1684, %v1695
  %v1703 = vadd.f32 %v1685, %v1695
  %v1704 = vadd.f32 %v1686, %v1695
  %v1705 = vadd.f32 %v1687, %v1695
  %v1706 = vadd.f32 %v1688, %v1695
  %v1707 = vadd.f32 %v1689, %v1695
  %v1708 = vadd.f32 %v1690, %v1695
  %v1709 = vadd.f32 %v1691, %v1695
  %v1710 = vadd.f32 %v1692, %v1695
  %v1711 = vmax.f32 %v1697, 0.0
  %v1712 = vmax.f32 %v1698, 0.0
  %v1713 = vmax.f32 %v1699, 0.0
  %v1714 = vmax.f32 %v1700, 0.0
  %v1715 = vmax.f32 %v1701, 0.0
  %v1716 = vmax.f32 %v1702, 0.0
  %v1717 = vmax.f32 %v1703, 0.0
  %v1718 = vmax.f32 %v1704, 0.0
  %v1719 = vmax.f32 %v1705, 0.0
  %v1720 = vmax.f32 %v1706, 0.0
  %v1721 = vmax.f32 %v1707, 0.0
  %v1722 = vmax.f32 %v1708, 0.0
  %v1723 = vmax.f32 %v1709, 0.0
  %v1724 = vmax.f32 %v1710, 0.0
  %v1725 = vpack.c.bf16 %v1711, %v1711
  %v1726 = vpack.c.bf16 %v1712, %v1712
  %v1727 = vpack.c.bf16 %v1713, %v1713
  %v1728 = vpack.c.bf16 %v1714, %v1714
  %v1729 = vpack.c.bf16 %v1715, %v1715
  %v1730 = vpack.c.bf16 %v1716, %v1716
  %v1731 = vpack.c.bf16 %v1717, %v1717
  %v1732 = vpack.c.bf16 %v1718, %v1718
  %v1733 = vpack.c.bf16 %v1719, %v1719
  %v1734 = vpack.c.bf16 %v1720, %v1720
  %v1735 = vpack.c.bf16 %v1721, %v1721
  %v1736 = vpack.c.bf16 %v1722, %v1722
  %v1737 = vpack.c.bf16 %v1723, %v1723
  %v1738 = vpack.c.bf16 %v1724, %v1724
  %vm1739 = vcmask 257024
  %1740 = vst.msk [vmem:[%s3] sm:$0xf] %vm1739, %v1725
  %1741 = vst.msk [vmem:[%s3 + $0x4] sm:$0xf] %vm1739, %v1726
  %1742 = vst.msk [vmem:[%s3 + $0x8] sm:$0xf] %vm1739, %v1727
  %1743 = vst.msk [vmem:[%s3 + $0xc] sm:$0xf] %vm1739, %v1728
  %1744 = vst.msk [vmem:[%s3 + $0x10] sm:$0xf] %vm1739, %v1729
  %1745 = vst.msk [vmem:[%s3 + $0x14] sm:$0xf] %vm1739, %v1730
  %1746 = vst.msk [vmem:[%s3 + $0x18] sm:$0xf] %vm1739, %v1731
  %1747 = vst.msk [vmem:[%s3 + $0x1c] sm:$0xf] %vm1739, %v1732
  %1748 = vst.msk [vmem:[%s3 + $0x20] sm:$0xf] %vm1739, %v1733
  %1749 = vst.msk [vmem:[%s3 + $0x24] sm:$0xf] %vm1739, %v1734
  %1750 = vst.msk [vmem:[%s3 + $0x28] sm:$0xf] %vm1739, %v1735
  %1751 = vst.msk [vmem:[%s3 + $0x2c] sm:$0xf] %vm1739, %v1736
  %1752 = vst.msk [vmem:[%s3 + $0x30] sm:$0xf] %vm1739, %v1737
  %1753 = vst.msk [vmem:[%s3 + $0x34] sm:$0xf] %vm1739, %v1738
  // Predicated region
  $region14: #{mnist_conv_forward.5} parent=0 // pred_check
    _
  $region15: #{mnist_conv_forward.5} parent=0 // pred_check_branch
    %1755 = sbr.rel (0) target = $region17
  $region16: #{mnist_conv_forward.5} parent=0 // pred_region
    _
  $region17: #{mnist_conv_forward.5} parent=0 // pred_fallthru
    _
  // Predicated region
  $region18: #{mnist_conv_forward.5} parent=0 // pred_check
    _
  $region19: #{mnist_conv_forward.5} parent=0 // pred_check_branch
    %1757 = sbr.rel (0) target = $region21
  $region20: #{mnist_conv_forward.5} parent=0 // pred_region
    _
  $region21: #{mnist_conv_forward.5} parent=0 // pred_fallthru
    _

// kernel: mnist_conv_forward.7
$region0: #{mnist_conv_forward.7}
  #allocation0 [shape = 'u32[]', space=smem, size = 0x4, offset = 0x4, fixed_abs, tag = 'smem constant byte address 0x4 - core index']
  #allocation1 [shape = 'u32[72,128]{1,0:T(1,128)}', space=vmem, size = 0x9000, scoped, tag = 'internal scratch']
  %s0 = inlined_call_operand.vmem [shape: bf16[16,512], index: 0, kind: input, shape index: {}]
  %s1 = inlined_call_operand.vmem [shape: bf16[512,128], index: 1, kind: input, shape index: {}]
  %s2 = inlined_call_operand.vmem [shape: f32[1,128], index: 2, kind: input, shape index: {}]
  %s3 = inlined_call_operand.vmem [shape: f32[16,128], index: 3, kind: output, shape index: {}]
  %s4 = sld [smem:[#allocation0]]
  $region22: #{mnist_conv_forward.7} parent=0
    _
  %s6 = ssub.s32 1, %s4
  %s7 = scalar_select 0, %s6, %s4
  // Predicated region
  $region2: #{mnist_conv_forward.7} parent=0 // pred_check
    _
  $region3: #{mnist_conv_forward.7} parent=0 // pred_check_branch
    %9 = sbr.rel (0) target = $region5
  $region4: #{mnist_conv_forward.7} parent=0 // pred_region
    _
  $region5: #{mnist_conv_forward.7} parent=0 // pred_fallthru
    _
  // Predicated region
  $region6: #{mnist_conv_forward.7} parent=0 // pred_check
    _
  $region7: #{mnist_conv_forward.7} parent=0 // pred_check_branch
    %11 = sbr.rel (0) target = $region9
  $region8: #{mnist_conv_forward.7} parent=0 // pred_region
    _
  $region9: #{mnist_conv_forward.7} parent=0 // pred_fallthru
    _
  // Predicated region
  $region10: #{mnist_conv_forward.7} parent=0 // pred_check
    _
  $region11: #{mnist_conv_forward.7} parent=0 // pred_check_branch
    %13 = sbr.rel (0) target = $region13
  $region12: #{mnist_conv_forward.7} parent=0 // pred_region
    _
  $region13: #{mnist_conv_forward.7} parent=0 // pred_fallthru
    _
  %v14 = vld [vmem:[%s0] sm:$0xff]
  %v15 = vld [vmem:[%s0 + $0x8] sm:$0xff]
  %v16 = vld [vmem:[%s0 + $0x10] sm:$0xff]
  %v17 = vld [vmem:[%s0 + $0x18] sm:$0xff]
  %v18 = vld [vmem:[%s1] sm:$0xf]
  %v19 = vld [vmem:[%s1 + $0x4] sm:$0xf]
  %v20 = vld [vmem:[%s1 + $0x8] sm:$0xf]
  %v21 = vld [vmem:[%s1 + $0xc] sm:$0xf]
  %v22 = vld [vmem:[%s1 + $0x10] sm:$0xf]
  %v23 = vld [vmem:[%s1 + $0x14] sm:$0xf]
  %v24 = vld [vmem:[%s1 + $0x18] sm:$0xf]
  %v25 = vld [vmem:[%s1 + $0x1c] sm:$0xf]
  %v26 = vld [vmem:[%s1 + $0x20] sm:$0xf]
  %v27 = vld [vmem:[%s1 + $0x24] sm:$0xf]
  %v28 = vld [vmem:[%s1 + $0x28] sm:$0xf]
  %v29 = vld [vmem:[%s1 + $0x2c] sm:$0xf]
  %v30 = vld [vmem:[%s1 + $0x30] sm:$0xf]
  %v31 = vld [vmem:[%s1 + $0x34] sm:$0xf]
  %v32 = vld [vmem:[%s1 + $0x38] sm:$0xf]
  %v33 = vld [vmem:[%s1 + $0x3c] sm:$0xf]
  %v34 = vld [vmem:[%s1 + $0x40] sm:$0xf]
  %v35 = vld [vmem:[%s1 + $0x44] sm:$0xf]
  %v36 = vld [vmem:[%s1 + $0x48] sm:$0xf]
  %v37 = vld [vmem:[%s1 + $0x4c] sm:$0xf]
  %v38 = vld [vmem:[%s1 + $0x50] sm:$0xf]
  %v39 = vld [vmem:[%s1 + $0x54] sm:$0xf]
  %v40 = vld [vmem:[%s1 + $0x58] sm:$0xf]
  %v41 = vld [vmem:[%s1 + $0x5c] sm:$0xf]
  %v42 = vld [vmem:[%s1 + $0x60] sm:$0xf]
  %v43 = vld [vmem:[%s1 + $0x64] sm:$0xf]
  %v44 = vld [vmem:[%s1 + $0x68] sm:$0xf]
  %v45 = vld [vmem:[%s1 + $0x6c] sm:$0xf]
  %v46 = vld [vmem:[%s1 + $0x70] sm:$0xf]
  %v47 = vld [vmem:[%s1 + $0x74] sm:$0xf]
  %v48 = vld [vmem:[%s1 + $0x78] sm:$0xf]
  %v49 = vld [vmem:[%s1 + $0x7c] sm:$0xf]
  %v50 = vld [vmem:[%s1 + $0x80] sm:$0xf]
  %v51 = vld [vmem:[%s1 + $0x84] sm:$0xf]
  %v52 = vld [vmem:[%s1 + $0x88] sm:$0xf]
  %v53 = vld [vmem:[%s1 + $0x8c] sm:$0xf]
  %v54 = vld [vmem:[%s1 + $0x90] sm:$0xf]
  %v55 = vld [vmem:[%s1 + $0x94] sm:$0xf]
  %v56 = vld [vmem:[%s1 + $0x98] sm:$0xf]
  %v57 = vld [vmem:[%s1 + $0x9c] sm:$0xf]
  %v58 = vld [vmem:[%s1 + $0xa0] sm:$0xf]
  %v59 = vld [vmem:[%s1 + $0xa4] sm:$0xf]
  %v60 = vld [vmem:[%s1 + $0xa8] sm:$0xf]
  %v61 = vld [vmem:[%s1 + $0xac] sm:$0xf]
  %v62 = vld [vmem:[%s1 + $0xb0] sm:$0xf]
  %v63 = vld [vmem:[%s1 + $0xb4] sm:$0xf]
  %v64 = vld [vmem:[%s1 + $0xb8] sm:$0xf]
  %v65 = vld [vmem:[%s1 + $0xbc] sm:$0xf]
  %v66 = vld [vmem:[%s1 + $0xc0] sm:$0xf]
  %v67 = vld [vmem:[%s1 + $0xc4] sm:$0xf]
  %v68 = vld [vmem:[%s1 + $0xc8] sm:$0xf]
  %v69 = vld [vmem:[%s1 + $0xcc] sm:$0xf]
  %v70 = vld [vmem:[%s1 + $0xd0] sm:$0xf]
  %v71 = vld [vmem:[%s1 + $0xd4] sm:$0xf]
  %v72 = vld [vmem:[%s1 + $0xd8] sm:$0xf]
  %v73 = vld [vmem:[%s1 + $0xdc] sm:$0xf]
  %v74 = vld [vmem:[%s1 + $0xe0] sm:$0xf]
  %v75 = vld [vmem:[%s1 + $0xe4] sm:$0xf]
  %v76 = vld [vmem:[%s1 + $0xe8] sm:$0xf]
  %v77 = vld [vmem:[%s1 + $0xec] sm:$0xf]
  %v78 = vld [vmem:[%s1 + $0xf0] sm:$0xf]
  %v79 = vld [vmem:[%s1 + $0xf4] sm:$0xf]
  %v80 = vld [vmem:[%s1 + $0xf8] sm:$0xf]
  %v81 = vld [vmem:[%s1 + $0xfc] sm:$0xf]
  %v82 = vld [vmem:[%s2] sm:$0x1]
  %v84 = vperm.slane %v82, 0
  %v90 = vunpack.c.l.b16 %v14
  %v91 = vunpack.c.h.b16 %v14
  %v92 = vunpack.c.l.b16 %v15
  %v93 = vunpack.c.h.b16 %v15
  %v94 = vunpack.c.l.b16 %v16
  %v95 = vunpack.c.h.b16 %v16
  %v96 = vunpack.c.l.b16 %v17
  %v97 = vunpack.c.h.b16 %v17
  %v98 = vpack.c.b16 %v94, %v90
  %v99 = vpack.c.b16 %v95, %v91
  %v100 = vpack.c.b16 %v96, %v92
  %v101 = vpack.c.b16 %v97, %v93
  %v170 = vunpack.c.l.b16 %v18
  %v171 = vunpack.c.l.b16 %v19
  %v172 = vunpack.c.l.b16 %v20
  %v173 = vunpack.c.l.b16 %v21
  %v174 = vunpack.c.l.b16 %v22
  %v175 = vunpack.c.l.b16 %v23
  %v176 = vunpack.c.l.b16 %v24
  %v177 = vunpack.c.l.b16 %v25
  %v178 = vunpack.c.l.b16 %v26
  %v179 = vunpack.c.l.b16 %v27
  %v180 = vunpack.c.l.b16 %v28
  %v181 = vunpack.c.l.b16 %v29
  %v182 = vunpack.c.l.b16 %v30
  %v183 = vunpack.c.l.b16 %v31
  %v184 = vunpack.c.l.b16 %v32
  %v185 = vunpack.c.l.b16 %v33
  %v186 = vunpack.c.l.b16 %v34
  %v187 = vunpack.c.l.b16 %v35
  %v188 = vunpack.c.l.b16 %v36
  %v189 = vunpack.c.l.b16 %v37
  %v190 = vunpack.c.l.b16 %v38
  %v191 = vunpack.c.l.b16 %v39
  %v192 = vunpack.c.l.b16 %v40
  %v193 = vunpack.c.l.b16 %v41
  %v194 = vunpack.c.l.b16 %v42
  %v195 = vunpack.c.l.b16 %v43
  %v196 = vunpack.c.l.b16 %v44
  %v197 = vunpack.c.l.b16 %v45
  %v198 = vunpack.c.l.b16 %v46
  %v199 = vunpack.c.l.b16 %v47
  %v200 = vunpack.c.l.b16 %v48
  %v201 = vunpack.c.l.b16 %v49
  %v202 = vunpack.c.l.b16 %v50
  %v203 = vunpack.c.l.b16 %v51
  %v204 = vunpack.c.l.b16 %v52
  %v205 = vunpack.c.l.b16 %v53
  %v206 = vunpack.c.l.b16 %v54
  %v207 = vunpack.c.l.b16 %v55
  %v208 = vunpack.c.l.b16 %v56
  %v209 = vunpack.c.l.b16 %v57
  %v210 = vunpack.c.l.b16 %v58
  %v211 = vunpack.c.l.b16 %v59
  %v212 = vunpack.c.l.b16 %v60
  %v213 = vunpack.c.l.b16 %v61
  %v214 = vunpack.c.l.b16 %v62
  %v215 = vunpack.c.l.b16 %v63
  %v216 = vunpack.c.l.b16 %v64
  %v217 = vunpack.c.l.b16 %v65
  %v218 = vunpack.c.l.b16 %v66
  %v219 = vunpack.c.l.b16 %v67
  %v220 = vunpack.c.l.b16 %v68
  %v221 = vunpack.c.l.b16 %v69
  %v222 = vunpack.c.l.b16 %v70
  %v223 = vunpack.c.l.b16 %v71
  %v224 = vunpack.c.l.b16 %v72
  %v225 = vunpack.c.l.b16 %v73
  %v226 = vunpack.c.l.b16 %v74
  %v227 = vunpack.c.l.b16 %v75
  %v228 = vunpack.c.l.b16 %v76
  %v229 = vunpack.c.l.b16 %v77
  %v230 = vunpack.c.l.b16 %v78
  %v231 = vunpack.c.l.b16 %v79
  %v232 = vunpack.c.l.b16 %v80
  %v233 = vunpack.c.l.b16 %v81
  %v234 = vpack.c.b16 %v171, %v170
  %v235 = vpack.c.b16 %v173, %v172
  %v236 = vpack.c.b16 %v175, %v174
  %v237 = vpack.c.b16 %v177, %v176
  %v238 = vpack.c.b16 %v179, %v178
  %v239 = vpack.c.b16 %v181, %v180
  %v240 = vpack.c.b16 %v183, %v182
  %v241 = vpack.c.b16 %v185, %v184
  %v242 = vpack.c.b16 %v187, %v186
  %v243 = vpack.c.b16 %v189, %v188
  %v244 = vpack.c.b16 %v191, %v190
  %v245 = vpack.c.b16 %v193, %v192
  %v246 = vpack.c.b16 %v195, %v194
  %v247 = vpack.c.b16 %v197, %v196
  %v248 = vpack.c.b16 %v199, %v198
  %v249 = vpack.c.b16 %v201, %v200
  %v250 = vpack.c.b16 %v203, %v202
  %v251 = vpack.c.b16 %v205, %v204
  %v252 = vpack.c.b16 %v207, %v206
  %v253 = vpack.c.b16 %v209, %v208
  %v254 = vpack.c.b16 %v211, %v210
  %v255 = vpack.c.b16 %v213, %v212
  %v256 = vpack.c.b16 %v215, %v214
  %v257 = vpack.c.b16 %v217, %v216
  %v258 = vpack.c.b16 %v219, %v218
  %v259 = vpack.c.b16 %v221, %v220
  %v260 = vpack.c.b16 %v223, %v222
  %v261 = vpack.c.b16 %v225, %v224
  %v262 = vpack.c.b16 %v227, %v226
  %v263 = vpack.c.b16 %v229, %v228
  %v264 = vpack.c.b16 %v231, %v230
  %v265 = vpack.c.b16 %v233, %v232
  %298 = vmatpush.bf16.msra.mxu0 %v241
  %299 = vmatpush.bf16.msra.mxu0 %v240
  %300 = vmatpush.bf16.msra.mxu0 %v239
  %301 = vmatpush.bf16.msra.mxu0 %v238
  %302 = vmatpush.bf16.msra.mxu0 %v237
  %303 = vmatpush.bf16.msra.mxu0 %v236
  %304 = vmatpush.bf16.msra.mxu0 %v235
  %305 = vmatpush.bf16.msra.mxu0 %v234
  %306 = vmatmul.bf16.gmra.mxu0 %v98
  %v307 = vpop.f32.mrf.mxu0
  %v308 = vadd.f32 %v84, %v307
  %v309 = vpop.f32.mrf.mxu0
  %v310 = vadd.f32 %v84, %v309
  %311 = vdwg.mxu0
  %312 = vmatpush.bf16.msra.mxu0 %v249
  %313 = vmatpush.bf16.msra.mxu0 %v248
  %314 = vmatpush.bf16.msra.mxu0 %v247
  %315 = vmatpush.bf16.msra.mxu0 %v246
  %316 = vmatpush.bf16.msra.mxu0 %v245
  %317 = vmatpush.bf16.msra.mxu0 %v244
  %318 = vmatpush.bf16.msra.mxu0 %v243
  %319 = vmatpush.bf16.msra.mxu0 %v242
  %320 = vmatmul.bf16.gmra.mxu0 %v99
  %v321 = vpop.f32.mrf.mxu0
  %v322 = vadd.f32 %v308, %v321
  %v323 = vpop.f32.mrf.mxu0
  %v324 = vadd.f32 %v310, %v323
  %325 = vdwg.mxu0
  %326 = vmatpush.bf16.msra.mxu0 %v257
  %327 = vmatpush.bf16.msra.mxu0 %v256
  %328 = vmatpush.bf16.msra.mxu0 %v255
  %329 = vmatpush.bf16.msra.mxu0 %v254
  %330 = vmatpush.bf16.msra.mxu0 %v253
  %331 = vmatpush.bf16.msra.mxu0 %v252
  %332 = vmatpush.bf16.msra.mxu0 %v251
  %333 = vmatpush.bf16.msra.mxu0 %v250
  %334 = vmatmul.bf16.gmra.mxu0 %v100
  %v335 = vpop.f32.mrf.mxu0
  %v336 = vadd.f32 %v322, %v335
  %v337 = vpop.f32.mrf.mxu0
  %v338 = vadd.f32 %v324, %v337
  %339 = vdwg.mxu0
  %340 = vmatpush.bf16.msra.mxu0 %v265
  %341 = vmatpush.bf16.msra.mxu0 %v264
  %342 = vmatpush.bf16.msra.mxu0 %v263
  %343 = vmatpush.bf16.msra.mxu0 %v262
  %344 = vmatpush.bf16.msra.mxu0 %v261
  %345 = vmatpush.bf16.msra.mxu0 %v260
  %346 = vmatpush.bf16.msra.mxu0 %v259
  %347 = vmatpush.bf16.msra.mxu0 %v258
  %348 = vmatmul.bf16.gmra.mxu0 %v101
  %v349 = vpop.f32.mrf.mxu0
  %v350 = vadd.f32 %v336, %v349
  %v351 = vpop.f32.mrf.mxu0
  %v352 = vadd.f32 %v338, %v351
  %353 = vdwg.mxu0
  %354 = vst [vmem:[%s3] sm:$0xff] %v350
  %355 = vst [vmem:[%s3 + $0x8] sm:$0xff] %v352
  // Predicated region
  $region14: #{mnist_conv_forward.7} parent=0 // pred_check
    _
  $region15: #{mnist_conv_forward.7} parent=0 // pred_check_branch
    %357 = sbr.rel (0) target = $region17
  $region16: #{mnist_conv_forward.7} parent=0 // pred_region
    _
  $region17: #{mnist_conv_forward.7} parent=0 // pred_fallthru
    _
  // Predicated region
  $region18: #{mnist_conv_forward.7} parent=0 // pred_check
    _
  $region19: #{mnist_conv_forward.7} parent=0 // pred_check_branch
    %359 = sbr.rel (0) target = $region21
  $region20: #{mnist_conv_forward.7} parent=0 // pred_region
    _
  $region21: #{mnist_conv_forward.7} parent=0 // pred_fallthru
    _

// kernel: mnist_conv_forward.6
$region0: #{mnist_conv_forward.6}
  #allocation0 [shape = 'u32[]', space=smem, size = 0x4, offset = 0x4, fixed_abs, tag = 'smem constant byte address 0x4 - core index']
  #allocation1 [shape = 'u32[72,128]{1,0:T(1,128)}', space=vmem, size = 0x9000, scoped, tag = 'internal scratch']
  %s0 = inlined_call_operand.vmem [shape: bf16[16,1568], index: 0, kind: input, shape index: {}]
  %s1 = inlined_call_operand.vmem [shape: bf16[1568,512], index: 1, kind: input, shape index: {}]
  %s2 = inlined_call_operand.vmem [shape: f32[1,512], index: 2, kind: input, shape index: {}]
  %s3 = inlined_call_operand.vmem [shape: bf16[16,512], index: 3, kind: output, shape index: {}]
  %s4 = sld [smem:[#allocation0]]
  $region22: #{mnist_conv_forward.6} parent=0
    _
  %s6 = ssub.s32 1, %s4
  %s7 = scalar_select 0, %s6, %s4
  // Predicated region
  $region2: #{mnist_conv_forward.6} parent=0 // pred_check
    _
  $region3: #{mnist_conv_forward.6} parent=0 // pred_check_branch
    %9 = sbr.rel (0) target = $region5
  $region4: #{mnist_conv_forward.6} parent=0 // pred_region
    _
  $region5: #{mnist_conv_forward.6} parent=0 // pred_fallthru
    _
  // Predicated region
  $region6: #{mnist_conv_forward.6} parent=0 // pred_check
    _
  $region7: #{mnist_conv_forward.6} parent=0 // pred_check_branch
    %11 = sbr.rel (0) target = $region9
  $region8: #{mnist_conv_forward.6} parent=0 // pred_region
    _
  $region9: #{mnist_conv_forward.6} parent=0 // pred_fallthru
    _
  // Predicated region
  $region10: #{mnist_conv_forward.6} parent=0 // pred_check
    _
  $region11: #{mnist_conv_forward.6} parent=0 // pred_check_branch
    %13 = sbr.rel (0) target = $region13
  $region12: #{mnist_conv_forward.6} parent=0 // pred_region
    _
  $region13: #{mnist_conv_forward.6} parent=0 // pred_fallthru
    _
  %v15 = vld [vmem:[%s0] sm:$0xff]
  %v16 = vld [vmem:[%s0 + $0x8] sm:$0xff]
  %v17 = vld [vmem:[%s0 + $0x10] sm:$0xff]
  %v18 = vld [vmem:[%s0 + $0x18] sm:$0xff]
  %v19 = vld [vmem:[%s0 + $0x20] sm:$0xff]
  %v20 = vld [vmem:[%s0 + $0x28] sm:$0xff]
  %v21 = vld [vmem:[%s0 + $0x30] sm:$0xf]
  %v22 = vld [vmem:[%s0 + $0x34] sm:$0xff]
  %v23 = vld [vmem:[%s0 + $0x3c] sm:$0xff]
  %v24 = vld [vmem:[%s0 + $0x44] sm:$0xff]
  %v25 = vld [vmem:[%s0 + $0x4c] sm:$0xff]
  %v26 = vld [vmem:[%s0 + $0x54] sm:$0xff]
  %v27 = vld [vmem:[%s0 + $0x5c] sm:$0xff]
  %v28 = vld [vmem:[%s0 + $0x64] sm:$0xf]
  %v29 = vld [vmem:[%s1] sm:$0xff]
  %v30 = vld [vmem:[%s1 + $0x8] sm:$0xff]
  %v31 = vld [vmem:[%s1 + $0x10] sm:$0xff]
  %v32 = vld [vmem:[%s1 + $0x18] sm:$0xff]
  %v33 = vld [vmem:[%s1 + $0x20] sm:$0xff]
  %v34 = vld [vmem:[%s1 + $0x28] sm:$0xff]
  %v35 = vld [vmem:[%s1 + $0x30] sm:$0xff]
  %v36 = vld [vmem:[%s1 + $0x38] sm:$0xff]
  %v37 = vld [vmem:[%s1 + $0x40] sm:$0xff]
  %v38 = vld [vmem:[%s1 + $0x48] sm:$0xff]
  %v39 = vld [vmem:[%s1 + $0x50] sm:$0xff]
  %v40 = vld [vmem:[%s1 + $0x58] sm:$0xff]
  %v41 = vld [vmem:[%s1 + $0x60] sm:$0xff]
  %v42 = vld [vmem:[%s1 + $0x68] sm:$0xff]
  %v43 = vld [vmem:[%s1 + $0x70] sm:$0xff]
  %v44 = vld [vmem:[%s1 + $0x78] sm:$0xff]
  %v45 = vld [vmem:[%s1 + $0x80] sm:$0xff]
  %v46 = vld [vmem:[%s1 + $0x88] sm:$0xff]
  %v47 = vld [vmem:[%s1 + $0x90] sm:$0xff]
  %v48 = vld [vmem:[%s1 + $0x98] sm:$0xff]
  %v49 = vld [vmem:[%s1 + $0xa0] sm:$0xff]
  %v50 = vld [vmem:[%s1 + $0xa8] sm:$0xff]
  %v51 = vld [vmem:[%s1 + $0xb0] sm:$0xff]
  %v52 = vld [vmem:[%s1 + $0xb8] sm:$0xff]
  %v53 = vld [vmem:[%s1 + $0xc0] sm:$0xff]
  %v54 = vld [vmem:[%s1 + $0xc8] sm:$0xff]
  %v55 = vld [vmem:[%s1 + $0xd0] sm:$0xff]
  %v56 = vld [vmem:[%s1 + $0xd8] sm:$0xff]
  %v57 = vld [vmem:[%s1 + $0xe0] sm:$0xff]
  %v58 = vld [vmem:[%s1 + $0xe8] sm:$0xff]
  %v59 = vld [vmem:[%s1 + $0xf0] sm:$0xff]
  %v60 = vld [vmem:[%s1 + $0xf8] sm:$0xff]
  %v61 = vld [vmem:[%s1 + $0x100] sm:$0xff]
  %v62 = vld [vmem:[%s1 + $0x108] sm:$0xff]
  %v63 = vld [vmem:[%s1 + $0x110] sm:$0xff]
  %v64 = vld [vmem:[%s1 + $0x118] sm:$0xff]
  %v65 = vld [vmem:[%s1 + $0x120] sm:$0xff]
  %v66 = vld [vmem:[%s1 + $0x128] sm:$0xff]
  %v67 = vld [vmem:[%s1 + $0x130] sm:$0xff]
  %v68 = vld [vmem:[%s1 + $0x138] sm:$0xff]
  %v69 = vld [vmem:[%s1 + $0x140] sm:$0xff]
  %v70 = vld [vmem:[%s1 + $0x148] sm:$0xff]
  %v71 = vld [vmem:[%s1 + $0x150] sm:$0xff]
  %v72 = vld [vmem:[%s1 + $0x158] sm:$0xff]
  %v73 = vld [vmem:[%s1 + $0x160] sm:$0xff]
  %v74 = vld [vmem:[%s1 + $0x168] sm:$0xff]
  %v75 = vld [vmem:[%s1 + $0x170] sm:$0xff]
  %v76 = vld [vmem:[%s1 + $0x178] sm:$0xff]
  %v77 = vld [vmem:[%s1 + $0x180] sm:$0xff]
  %v78 = vld [vmem:[%s1 + $0x188] sm:$0xff]
  %v79 = vld [vmem:[%s1 + $0x190] sm:$0xff]
  %v80 = vld [vmem:[%s1 + $0x198] sm:$0xff]
  %v81 = vld [vmem:[%s1 + $0x1a0] sm:$0xff]
  %v82 = vld [vmem:[%s1 + $0x1a8] sm:$0xff]
  %v83 = vld [vmem:[%s1 + $0x1b0] sm:$0xff]
  %v84 = vld [vmem:[%s1 + $0x1b8] sm:$0xff]
  %v85 = vld [vmem:[%s1 + $0x1c0] sm:$0xff]
  %v86 = vld [vmem:[%s1 + $0x1c8] sm:$0xff]
  %v87 = vld [vmem:[%s1 + $0x1d0] sm:$0xff]
  %v88 = vld [vmem:[%s1 + $0x1d8] sm:$0xff]
  %v89 = vld [vmem:[%s1 + $0x1e0] sm:$0xff]
  %v90 = vld [vmem:[%s1 + $0x1e8] sm:$0xff]
  %v91 = vld [vmem:[%s1 + $0x1f0] sm:$0xff]
  %v92 = vld [vmem:[%s1 + $0x1f8] sm:$0xff]
  %v93 = vld [vmem:[%s1 + $0x200] sm:$0xff]
  %v94 = vld [vmem:[%s1 + $0x208] sm:$0xff]
  %v95 = vld [vmem:[%s1 + $0x210] sm:$0xff]
  %v96 = vld [vmem:[%s1 + $0x218] sm:$0xff]
  %v97 = vld [vmem:[%s1 + $0x220] sm:$0xff]
  %v98 = vld [vmem:[%s1 + $0x228] sm:$0xff]
  %v99 = vld [vmem:[%s1 + $0x230] sm:$0xff]
  %v100 = vld [vmem:[%s1 + $0x238] sm:$0xff]
  %v101 = vld [vmem:[%s1 + $0x240] sm:$0xff]
  %v102 = vld [vmem:[%s1 + $0x248] sm:$0xff]
  %v103 = vld [vmem:[%s1 + $0x250] sm:$0xff]
  %v104 = vld [vmem:[%s1 + $0x258] sm:$0xff]
  %v105 = vld [vmem:[%s1 + $0x260] sm:$0xff]
  %v106 = vld [vmem:[%s1 + $0x268] sm:$0xff]
  %v107 = vld [vmem:[%s1 + $0x270] sm:$0xff]
  %v108 = vld [vmem:[%s1 + $0x278] sm:$0xff]
  %v109 = vld [vmem:[%s1 + $0x280] sm:$0xff]
  %v110 = vld [vmem:[%s1 + $0x288] sm:$0xff]
  %v111 = vld [vmem:[%s1 + $0x290] sm:$0xff]
  %v112 = vld [vmem:[%s1 + $0x298] sm:$0xff]
  %v113 = vld [vmem:[%s1 + $0x2a0] sm:$0xff]
  %v114 = vld [vmem:[%s1 + $0x2a8] sm:$0xff]
  %v115 = vld [vmem:[%s1 + $0x2b0] sm:$0xff]
  %v116 = vld [vmem:[%s1 + $0x2b8] sm:$0xff]
  %v117 = vld [vmem:[%s1 + $0x2c0] sm:$0xff]
  %v118 = vld [vmem:[%s1 + $0x2c8] sm:$0xff]
  %v119 = vld [vmem:[%s1 + $0x2d0] sm:$0xff]
  %v120 = vld [vmem:[%s1 + $0x2d8] sm:$0xff]
  %v121 = vld [vmem:[%s1 + $0x2e0] sm:$0xff]
  %v122 = vld [vmem:[%s1 + $0x2e8] sm:$0xff]
  %v123 = vld [vmem:[%s1 + $0x2f0] sm:$0xff]
  %v124 = vld [vmem:[%s1 + $0x2f8] sm:$0xff]
  %v125 = vld [vmem:[%s1 + $0x300] sm:$0xff]
  %v126 = vld [vmem:[%s1 + $0x308] sm:$0xff]
  %v127 = vld [vmem:[%s1 + $0x310] sm:$0xff]
  %v128 = vld [vmem:[%s1 + $0x318] sm:$0xff]
  %v129 = vld [vmem:[%s1 + $0x320] sm:$0xff]
  %v130 = vld [vmem:[%s1 + $0x328] sm:$0xff]
  %v131 = vld [vmem:[%s1 + $0x330] sm:$0xff]
  %v132 = vld [vmem:[%s1 + $0x338] sm:$0xff]
  %v133 = vld [vmem:[%s1 + $0x340] sm:$0xff]
  %v134 = vld [vmem:[%s1 + $0x348] sm:$0xff]
  %v135 = vld [vmem:[%s1 + $0x350] sm:$0xff]
  %v136 = vld [vmem:[%s1 + $0x358] sm:$0xff]
  %v137 = vld [vmem:[%s1 + $0x360] sm:$0xff]
  %v138 = vld [vmem:[%s1 + $0x368] sm:$0xff]
  %v139 = vld [vmem:[%s1 + $0x370] sm:$0xff]
  %v140 = vld [vmem:[%s1 + $0x378] sm:$0xff]
  %v141 = vld [vmem:[%s1 + $0x380] sm:$0xff]
  %v142 = vld [vmem:[%s1 + $0x388] sm:$0xff]
  %v143 = vld [vmem:[%s1 + $0x390] sm:$0xff]
  %v144 = vld [vmem:[%s1 + $0x398] sm:$0xff]
  %v145 = vld [vmem:[%s1 + $0x3a0] sm:$0xff]
  %v146 = vld [vmem:[%s1 + $0x3a8] sm:$0xff]
  %v147 = vld [vmem:[%s1 + $0x3b0] sm:$0xff]
  %v148 = vld [vmem:[%s1 + $0x3b8] sm:$0xff]
  %v149 = vld [vmem:[%s1 + $0x3c0] sm:$0xff]
  %v150 = vld [vmem:[%s1 + $0x3c8] sm:$0xff]
  %v151 = vld [vmem:[%s1 + $0x3d0] sm:$0xff]
  %v152 = vld [vmem:[%s1 + $0x3d8] sm:$0xff]
  %v153 = vld [vmem:[%s1 + $0x3e0] sm:$0xff]
  %v154 = vld [vmem:[%s1 + $0x3e8] sm:$0xff]
  %v155 = vld [vmem:[%s1 + $0x3f0] sm:$0xff]
  %v156 = vld [vmem:[%s1 + $0x3f8] sm:$0xff]
  %v157 = vld [vmem:[%s1 + $0x400] sm:$0xff]
  %v158 = vld [vmem:[%s1 + $0x408] sm:$0xff]
  %v159 = vld [vmem:[%s1 + $0x410] sm:$0xff]
  %v160 = vld [vmem:[%s1 + $0x418] sm:$0xff]
  %v161 = vld [vmem:[%s1 + $0x420] sm:$0xff]
  %v162 = vld [vmem:[%s1 + $0x428] sm:$0xff]
  %v163 = vld [vmem:[%s1 + $0x430] sm:$0xff]
  %v164 = vld [vmem:[%s1 + $0x438] sm:$0xff]
  %v165 = vld [vmem:[%s1 + $0x440] sm:$0xff]
  %v166 = vld [vmem:[%s1 + $0x448] sm:$0xff]
  %v167 = vld [vmem:[%s1 + $0x450] sm:$0xff]
  %v168 = vld [vmem:[%s1 + $0x458] sm:$0xff]
  %v169 = vld [vmem:[%s1 + $0x460] sm:$0xff]
  %v170 = vld [vmem:[%s1 + $0x468] sm:$0xff]
  %v171 = vld [vmem:[%s1 + $0x470] sm:$0xff]
  %v172 = vld [vmem:[%s1 + $0x478] sm:$0xff]
  %v173 = vld [vmem:[%s1 + $0x480] sm:$0xff]
  %v174 = vld [vmem:[%s1 + $0x488] sm:$0xff]
  %v175 = vld [vmem:[%s1 + $0x490] sm:$0xff]
  %v176 = vld [vmem:[%s1 + $0x498] sm:$0xff]
  %v177 = vld [vmem:[%s1 + $0x4a0] sm:$0xff]
  %v178 = vld [vmem:[%s1 + $0x4a8] sm:$0xff]
  %v179 = vld [vmem:[%s1 + $0x4b0] sm:$0xff]
  %v180 = vld [vmem:[%s1 + $0x4b8] sm:$0xff]
  %v181 = vld [vmem:[%s1 + $0x4c0] sm:$0xff]
  %v182 = vld [vmem:[%s1 + $0x4c8] sm:$0xff]
  %v183 = vld [vmem:[%s1 + $0x4d0] sm:$0xff]
  %v184 = vld [vmem:[%s1 + $0x4d8] sm:$0xff]
  %v185 = vld [vmem:[%s1 + $0x4e0] sm:$0xff]
  %v186 = vld [vmem:[%s1 + $0x4e8] sm:$0xff]
  %v187 = vld [vmem:[%s1 + $0x4f0] sm:$0xff]
  %v188 = vld [vmem:[%s1 + $0x4f8] sm:$0xff]
  %v189 = vld [vmem:[%s1 + $0x500] sm:$0xff]
  %v190 = vld [vmem:[%s1 + $0x508] sm:$0xff]
  %v191 = vld [vmem:[%s1 + $0x510] sm:$0xff]
  %v192 = vld [vmem:[%s1 + $0x518] sm:$0xff]
  %v193 = vld [vmem:[%s1 + $0x520] sm:$0xff]
  %v194 = vld [vmem:[%s1 + $0x528] sm:$0xff]
  %v195 = vld [vmem:[%s1 + $0x530] sm:$0xff]
  %v196 = vld [vmem:[%s1 + $0x538] sm:$0xff]
  %v197 = vld [vmem:[%s1 + $0x540] sm:$0xff]
  %v198 = vld [vmem:[%s1 + $0x548] sm:$0xff]
  %v199 = vld [vmem:[%s1 + $0x550] sm:$0xff]
  %v200 = vld [vmem:[%s1 + $0x558] sm:$0xff]
  %v201 = vld [vmem:[%s1 + $0x560] sm:$0xff]
  %v202 = vld [vmem:[%s1 + $0x568] sm:$0xff]
  %v203 = vld [vmem:[%s1 + $0x570] sm:$0xff]
  %v204 = vld [vmem:[%s1 + $0x578] sm:$0xff]
  %v205 = vld [vmem:[%s1 + $0x580] sm:$0xff]
  %v206 = vld [vmem:[%s1 + $0x588] sm:$0xff]
  %v207 = vld [vmem:[%s1 + $0x590] sm:$0xff]
  %v208 = vld [vmem:[%s1 + $0x598] sm:$0xff]
  %v209 = vld [vmem:[%s1 + $0x5a0] sm:$0xff]
  %v210 = vld [vmem:[%s1 + $0x5a8] sm:$0xff]
  %v211 = vld [vmem:[%s1 + $0x5b0] sm:$0xff]
  %v212 = vld [vmem:[%s1 + $0x5b8] sm:$0xff]
  %v213 = vld [vmem:[%s1 + $0x5c0] sm:$0xff]
  %v214 = vld [vmem:[%s1 + $0x5c8] sm:$0xff]
  %v215 = vld [vmem:[%s1 + $0x5d0] sm:$0xff]
  %v216 = vld [vmem:[%s1 + $0x5d8] sm:$0xff]
  %v217 = vld [vmem:[%s1 + $0x5e0] sm:$0xff]
  %v218 = vld [vmem:[%s1 + $0x5e8] sm:$0xff]
  %v219 = vld [vmem:[%s1 + $0x5f0] sm:$0xff]
  %v220 = vld [vmem:[%s1 + $0x5f8] sm:$0xff]
  %v221 = vld [vmem:[%s1 + $0x600] sm:$0xff]
  %v222 = vld [vmem:[%s1 + $0x608] sm:$0xff]
  %v223 = vld [vmem:[%s1 + $0x610] sm:$0xff]
  %v224 = vld [vmem:[%s1 + $0x618] sm:$0xff]
  %v225 = vld [vmem:[%s1 + $0x620] sm:$0xff]
  %v226 = vld [vmem:[%s1 + $0x628] sm:$0xff]
  %v227 = vld [vmem:[%s1 + $0x630] sm:$0xff]
  %v228 = vld [vmem:[%s1 + $0x638] sm:$0xff]
  %v229 = vld [vmem:[%s1 + $0x640] sm:$0xff]
  %v230 = vld [vmem:[%s1 + $0x648] sm:$0xff]
  %v231 = vld [vmem:[%s1 + $0x650] sm:$0xff]
  %v232 = vld [vmem:[%s1 + $0x658] sm:$0xff]
  %v233 = vld [vmem:[%s1 + $0x660] sm:$0xff]
  %v234 = vld [vmem:[%s1 + $0x668] sm:$0xff]
  %v235 = vld [vmem:[%s1 + $0x670] sm:$0xff]
  %v236 = vld [vmem:[%s1 + $0x678] sm:$0xff]
  %v237 = vld [vmem:[%s1 + $0x680] sm:$0xff]
  %v238 = vld [vmem:[%s1 + $0x688] sm:$0xff]
  %v239 = vld [vmem:[%s1 + $0x690] sm:$0xff]
  %v240 = vld [vmem:[%s1 + $0x698] sm:$0xff]
  %v241 = vld [vmem:[%s1 + $0x6a0] sm:$0xff]
  %v242 = vld [vmem:[%s1 + $0x6a8] sm:$0xff]
  %v243 = vld [vmem:[%s1 + $0x6b0] sm:$0xff]
  %v244 = vld [vmem:[%s1 + $0x6b8] sm:$0xff]
  %v245 = vld [vmem:[%s1 + $0x6c0] sm:$0xff]
  %v246 = vld [vmem:[%s1 + $0x6c8] sm:$0xff]
  %v247 = vld [vmem:[%s1 + $0x6d0] sm:$0xff]
  %v248 = vld [vmem:[%s1 + $0x6d8] sm:$0xff]
  %v249 = vld [vmem:[%s1 + $0x6e0] sm:$0xff]
  %v250 = vld [vmem:[%s1 + $0x6e8] sm:$0xff]
  %v251 = vld [vmem:[%s1 + $0x6f0] sm:$0xff]
  %v252 = vld [vmem:[%s1 + $0x6f8] sm:$0xff]
  %v253 = vld [vmem:[%s1 + $0x700] sm:$0xff]
  %v254 = vld [vmem:[%s1 + $0x708] sm:$0xff]
  %v255 = vld [vmem:[%s1 + $0x710] sm:$0xff]
  %v256 = vld [vmem:[%s1 + $0x718] sm:$0xff]
  %v257 = vld [vmem:[%s1 + $0x720] sm:$0xff]
  %v258 = vld [vmem:[%s1 + $0x728] sm:$0xff]
  %v259 = vld [vmem:[%s1 + $0x730] sm:$0xff]
  %v260 = vld [vmem:[%s1 + $0x738] sm:$0xff]
  %v261 = vld [vmem:[%s1 + $0x740] sm:$0xff]
  %v262 = vld [vmem:[%s1 + $0x748] sm:$0xff]
  %v263 = vld [vmem:[%s1 + $0x750] sm:$0xff]
  %v264 = vld [vmem:[%s1 + $0x758] sm:$0xff]
  %v265 = vld [vmem:[%s1 + $0x760] sm:$0xff]
  %v266 = vld [vmem:[%s1 + $0x768] sm:$0xff]
  %v267 = vld [vmem:[%s1 + $0x770] sm:$0xff]
  %v268 = vld [vmem:[%s1 + $0x778] sm:$0xff]
  %v269 = vld [vmem:[%s1 + $0x780] sm:$0xff]
  %v270 = vld [vmem:[%s1 + $0x788] sm:$0xff]
  %v271 = vld [vmem:[%s1 + $0x790] sm:$0xff]
  %v272 = vld [vmem:[%s1 + $0x798] sm:$0xff]
  %v273 = vld [vmem:[%s1 + $0x7a0] sm:$0xff]
  %v274 = vld [vmem:[%s1 + $0x7a8] sm:$0xff]
  %v275 = vld [vmem:[%s1 + $0x7b0] sm:$0xff]
  %v276 = vld [vmem:[%s1 + $0x7b8] sm:$0xff]
  %v277 = vld [vmem:[%s1 + $0x7c0] sm:$0xff]
  %v278 = vld [vmem:[%s1 + $0x7c8] sm:$0xff]
  %v279 = vld [vmem:[%s1 + $0x7d0] sm:$0xff]
  %v280 = vld [vmem:[%s1 + $0x7d8] sm:$0xff]
  %v281 = vld [vmem:[%s1 + $0x7e0] sm:$0xff]
  %v282 = vld [vmem:[%s1 + $0x7e8] sm:$0xff]
  %v283 = vld [vmem:[%s1 + $0x7f0] sm:$0xff]
  %v284 = vld [vmem:[%s1 + $0x7f8] sm:$0xff]
  %v285 = vld [vmem:[%s1 + $0x800] sm:$0xff]
  %v286 = vld [vmem:[%s1 + $0x808] sm:$0xff]
  %v287 = vld [vmem:[%s1 + $0x810] sm:$0xff]
  %v288 = vld [vmem:[%s1 + $0x818] sm:$0xff]
  %v289 = vld [vmem:[%s1 + $0x820] sm:$0xff]
  %v290 = vld [vmem:[%s1 + $0x828] sm:$0xff]
  %v291 = vld [vmem:[%s1 + $0x830] sm:$0xff]
  %v292 = vld [vmem:[%s1 + $0x838] sm:$0xff]
  %v293 = vld [vmem:[%s1 + $0x840] sm:$0xff]
  %v294 = vld [vmem:[%s1 + $0x848] sm:$0xff]
  %v295 = vld [vmem:[%s1 + $0x850] sm:$0xff]
  %v296 = vld [vmem:[%s1 + $0x858] sm:$0xff]
  %v297 = vld [vmem:[%s1 + $0x860] sm:$0xff]
  %v298 = vld [vmem:[%s1 + $0x868] sm:$0xff]
  %v299 = vld [vmem:[%s1 + $0x870] sm:$0xff]
  %v300 = vld [vmem:[%s1 + $0x878] sm:$0xff]
  %v301 = vld [vmem:[%s1 + $0x880] sm:$0xff]
  %v302 = vld [vmem:[%s1 + $0x888] sm:$0xff]
  %v303 = vld [vmem:[%s1 + $0x890] sm:$0xff]
  %v304 = vld [vmem:[%s1 + $0x898] sm:$0xff]
  %v305 = vld [vmem:[%s1 + $0x8a0] sm:$0xff]
  %v306 = vld [vmem:[%s1 + $0x8a8] sm:$0xff]
  %v307 = vld [vmem:[%s1 + $0x8b0] sm:$0xff]
  %v308 = vld [vmem:[%s1 + $0x8b8] sm:$0xff]
  %v309 = vld [vmem:[%s1 + $0x8c0] sm:$0xff]
  %v310 = vld [vmem:[%s1 + $0x8c8] sm:$0xff]
  %v311 = vld [vmem:[%s1 + $0x8d0] sm:$0xff]
  %v312 = vld [vmem:[%s1 + $0x8d8] sm:$0xff]
  %v313 = vld [vmem:[%s1 + $0x8e0] sm:$0xff]
  %v314 = vld [vmem:[%s1 + $0x8e8] sm:$0xff]
  %v315 = vld [vmem:[%s1 + $0x8f0] sm:$0xff]
  %v316 = vld [vmem:[%s1 + $0x8f8] sm:$0xff]
  %v317 = vld [vmem:[%s1 + $0x900] sm:$0xff]
  %v318 = vld [vmem:[%s1 + $0x908] sm:$0xff]
  %v319 = vld [vmem:[%s1 + $0x910] sm:$0xff]
  %v320 = vld [vmem:[%s1 + $0x918] sm:$0xff]
  %v321 = vld [vmem:[%s1 + $0x920] sm:$0xff]
  %v322 = vld [vmem:[%s1 + $0x928] sm:$0xff]
  %v323 = vld [vmem:[%s1 + $0x930] sm:$0xff]
  %v324 = vld [vmem:[%s1 + $0x938] sm:$0xff]
  %v325 = vld [vmem:[%s1 + $0x940] sm:$0xff]
  %v326 = vld [vmem:[%s1 + $0x948] sm:$0xff]
  %v327 = vld [vmem:[%s1 + $0x950] sm:$0xff]
  %v328 = vld [vmem:[%s1 + $0x958] sm:$0xff]
  %v329 = vld [vmem:[%s1 + $0x960] sm:$0xff]
  %v330 = vld [vmem:[%s1 + $0x968] sm:$0xff]
  %v331 = vld [vmem:[%s1 + $0x970] sm:$0xff]
  %v332 = vld [vmem:[%s1 + $0x978] sm:$0xff]
  %v333 = vld [vmem:[%s1 + $0x980] sm:$0xff]
  %v334 = vld [vmem:[%s1 + $0x988] sm:$0xff]
  %v335 = vld [vmem:[%s1 + $0x990] sm:$0xff]
  %v336 = vld [vmem:[%s1 + $0x998] sm:$0xff]
  %v337 = vld [vmem:[%s1 + $0x9a0] sm:$0xff]
  %v338 = vld [vmem:[%s1 + $0x9a8] sm:$0xff]
  %v339 = vld [vmem:[%s1 + $0x9b0] sm:$0xff]
  %v340 = vld [vmem:[%s1 + $0x9b8] sm:$0xff]
  %v341 = vld [vmem:[%s1 + $0x9c0] sm:$0xff]
  %v342 = vld [vmem:[%s1 + $0x9c8] sm:$0xff]
  %v343 = vld [vmem:[%s1 + $0x9d0] sm:$0xff]
  %v344 = vld [vmem:[%s1 + $0x9d8] sm:$0xff]
  %v345 = vld [vmem:[%s1 + $0x9e0] sm:$0xff]
  %v346 = vld [vmem:[%s1 + $0x9e8] sm:$0xff]
  %v347 = vld [vmem:[%s1 + $0x9f0] sm:$0xff]
  %v348 = vld [vmem:[%s1 + $0x9f8] sm:$0xff]
  %v349 = vld [vmem:[%s1 + $0xa00] sm:$0xff]
  %v350 = vld [vmem:[%s1 + $0xa08] sm:$0xff]
  %v351 = vld [vmem:[%s1 + $0xa10] sm:$0xff]
  %v352 = vld [vmem:[%s1 + $0xa18] sm:$0xff]
  %v353 = vld [vmem:[%s1 + $0xa20] sm:$0xff]
  %v354 = vld [vmem:[%s1 + $0xa28] sm:$0xff]
  %v355 = vld [vmem:[%s1 + $0xa30] sm:$0xff]
  %v356 = vld [vmem:[%s1 + $0xa38] sm:$0xff]
  %v357 = vld [vmem:[%s1 + $0xa40] sm:$0xff]
  %v358 = vld [vmem:[%s1 + $0xa48] sm:$0xff]
  %v359 = vld [vmem:[%s1 + $0xa50] sm:$0xff]
  %v360 = vld [vmem:[%s1 + $0xa58] sm:$0xff]
  %v361 = vld [vmem:[%s1 + $0xa60] sm:$0xff]
  %v362 = vld [vmem:[%s1 + $0xa68] sm:$0xff]
  %v363 = vld [vmem:[%s1 + $0xa70] sm:$0xff]
  %v364 = vld [vmem:[%s1 + $0xa78] sm:$0xff]
  %v365 = vld [vmem:[%s1 + $0xa80] sm:$0xff]
  %v366 = vld [vmem:[%s1 + $0xa88] sm:$0xff]
  %v367 = vld [vmem:[%s1 + $0xa90] sm:$0xff]
  %v368 = vld [vmem:[%s1 + $0xa98] sm:$0xff]
  %v369 = vld [vmem:[%s1 + $0xaa0] sm:$0xff]
  %v370 = vld [vmem:[%s1 + $0xaa8] sm:$0xff]
  %v371 = vld [vmem:[%s1 + $0xab0] sm:$0xff]
  %v372 = vld [vmem:[%s1 + $0xab8] sm:$0xff]
  %v373 = vld [vmem:[%s1 + $0xac0] sm:$0xff]
  %v374 = vld [vmem:[%s1 + $0xac8] sm:$0xff]
  %v375 = vld [vmem:[%s1 + $0xad0] sm:$0xff]
  %v376 = vld [vmem:[%s1 + $0xad8] sm:$0xff]
  %v377 = vld [vmem:[%s1 + $0xae0] sm:$0xff]
  %v378 = vld [vmem:[%s1 + $0xae8] sm:$0xff]
  %v379 = vld [vmem:[%s1 + $0xaf0] sm:$0xff]
  %v380 = vld [vmem:[%s1 + $0xaf8] sm:$0xff]
  %v381 = vld [vmem:[%s1 + $0xb00] sm:$0xff]
  %v382 = vld [vmem:[%s1 + $0xb08] sm:$0xff]
  %v383 = vld [vmem:[%s1 + $0xb10] sm:$0xff]
  %v384 = vld [vmem:[%s1 + $0xb18] sm:$0xff]
  %v385 = vld [vmem:[%s1 + $0xb20] sm:$0xff]
  %v386 = vld [vmem:[%s1 + $0xb28] sm:$0xff]
  %v387 = vld [vmem:[%s1 + $0xb30] sm:$0xff]
  %v388 = vld [vmem:[%s1 + $0xb38] sm:$0xff]
  %v389 = vld [vmem:[%s1 + $0xb40] sm:$0xff]
  %v390 = vld [vmem:[%s1 + $0xb48] sm:$0xff]
  %v391 = vld [vmem:[%s1 + $0xb50] sm:$0xff]
  %v392 = vld [vmem:[%s1 + $0xb58] sm:$0xff]
  %v393 = vld [vmem:[%s1 + $0xb60] sm:$0xff]
  %v394 = vld [vmem:[%s1 + $0xb68] sm:$0xff]
  %v395 = vld [vmem:[%s1 + $0xb70] sm:$0xff]
  %v396 = vld [vmem:[%s1 + $0xb78] sm:$0xff]
  %v397 = vld [vmem:[%s1 + $0xb80] sm:$0xff]
  %v398 = vld [vmem:[%s1 + $0xb88] sm:$0xff]
  %v399 = vld [vmem:[%s1 + $0xb90] sm:$0xff]
  %v400 = vld [vmem:[%s1 + $0xb98] sm:$0xff]
  %v401 = vld [vmem:[%s1 + $0xba0] sm:$0xff]
  %v402 = vld [vmem:[%s1 + $0xba8] sm:$0xff]
  %v403 = vld [vmem:[%s1 + $0xbb0] sm:$0xff]
  %v404 = vld [vmem:[%s1 + $0xbb8] sm:$0xff]
  %v405 = vld [vmem:[%s1 + $0xbc0] sm:$0xff]
  %v406 = vld [vmem:[%s1 + $0xbc8] sm:$0xff]
  %v407 = vld [vmem:[%s1 + $0xbd0] sm:$0xff]
  %v408 = vld [vmem:[%s1 + $0xbd8] sm:$0xff]
  %v409 = vld [vmem:[%s1 + $0xbe0] sm:$0xff]
  %v410 = vld [vmem:[%s1 + $0xbe8] sm:$0xff]
  %v411 = vld [vmem:[%s1 + $0xbf0] sm:$0xff]
  %v412 = vld [vmem:[%s1 + $0xbf8] sm:$0xff]
  %v413 = vld [vmem:[%s1 + $0xc00] sm:$0xff]
  %v414 = vld [vmem:[%s1 + $0xc08] sm:$0xff]
  %v415 = vld [vmem:[%s1 + $0xc10] sm:$0xff]
  %v416 = vld [vmem:[%s1 + $0xc18] sm:$0xff]
  %v417 = vld [vmem:[%s1 + $0xc20] sm:$0xff]
  %v418 = vld [vmem:[%s1 + $0xc28] sm:$0xff]
  %v419 = vld [vmem:[%s1 + $0xc30] sm:$0xff]
  %v420 = vld [vmem:[%s1 + $0xc38] sm:$0xff]
  %v421 = vld [vmem:[%s2] sm:$0xf]
  %v423 = vperm.slane %v421, 0
  %v424 = vperm.slane %v421, 1
  %v425 = vperm.slane %v421, 2
  %v426 = vperm.slane %v421, 3
  %v445 = vunpack.c.l.b16 %v15
  %v446 = vunpack.c.h.b16 %v15
  %v447 = vunpack.c.l.b16 %v16
  %v448 = vunpack.c.h.b16 %v16
  %v449 = vunpack.c.l.b16 %v17
  %v450 = vunpack.c.h.b16 %v17
  %v451 = vunpack.c.l.b16 %v18
  %v452 = vunpack.c.h.b16 %v18
  %v453 = vunpack.c.l.b16 %v19
  %v454 = vunpack.c.h.b16 %v19
  %v455 = vunpack.c.l.b16 %v20
  %v456 = vunpack.c.h.b16 %v20
  %v457 = vunpack.c.l.b16 %v21
  %v458 = vunpack.c.l.b16 %v22
  %v459 = vunpack.c.h.b16 %v22
  %v460 = vunpack.c.l.b16 %v23
  %v461 = vunpack.c.h.b16 %v23
  %v462 = vunpack.c.l.b16 %v24
  %v463 = vunpack.c.h.b16 %v24
  %v464 = vunpack.c.l.b16 %v25
  %v465 = vunpack.c.h.b16 %v25
  %v466 = vunpack.c.l.b16 %v26
  %v467 = vunpack.c.h.b16 %v26
  %v468 = vunpack.c.l.b16 %v27
  %v469 = vunpack.c.h.b16 %v27
  %v470 = vunpack.c.l.b16 %v28
  %v471 = vpack.c.b16 %v458, %v445
  %v472 = vpack.c.b16 %v459, %v446
  %v473 = vpack.c.b16 %v460, %v447
  %v474 = vpack.c.b16 %v461, %v448
  %v475 = vpack.c.b16 %v462, %v449
  %v476 = vpack.c.b16 %v463, %v450
  %v477 = vpack.c.b16 %v464, %v451
  %v478 = vpack.c.b16 %v465, %v452
  %v479 = vpack.c.b16 %v466, %v453
  %v480 = vpack.c.b16 %v467, %v454
  %v481 = vpack.c.b16 %v468, %v455
  %v482 = vpack.c.b16 %v469, %v456
  %v483 = vpack.c.b16 %v470, %v457
  %v888 = vunpack.c.l.b16 %v29
  %v889 = vunpack.c.h.b16 %v29
  %v890 = vunpack.c.l.b16 %v30
  %v891 = vunpack.c.h.b16 %v30
  %v892 = vunpack.c.l.b16 %v31
  %v893 = vunpack.c.h.b16 %v31
  %v894 = vunpack.c.l.b16 %v32
  %v895 = vunpack.c.h.b16 %v32
  %v896 = vunpack.c.l.b16 %v33
  %v897 = vunpack.c.h.b16 %v33
  %v898 = vunpack.c.l.b16 %v34
  %v899 = vunpack.c.h.b16 %v34
  %v900 = vunpack.c.l.b16 %v35
  %v901 = vunpack.c.h.b16 %v35
  %v902 = vunpack.c.l.b16 %v36
  %v903 = vunpack.c.h.b16 %v36
  %v904 = vunpack.c.l.b16 %v37
  %v905 = vunpack.c.h.b16 %v37
  %v906 = vunpack.c.l.b16 %v38
  %v907 = vunpack.c.h.b16 %v38
  %v908 = vunpack.c.l.b16 %v39
  %v909 = vunpack.c.h.b16 %v39
  %v910 = vunpack.c.l.b16 %v40
  %v911 = vunpack.c.h.b16 %v40
  %v912 = vunpack.c.l.b16 %v41
  %v913 = vunpack.c.h.b16 %v41
  %v914 = vunpack.c.l.b16 %v42
  %v915 = vunpack.c.h.b16 %v42
  %v916 = vunpack.c.l.b16 %v43
  %v917 = vunpack.c.h.b16 %v43
  %v918 = vunpack.c.l.b16 %v44
  %v919 = vunpack.c.h.b16 %v44
  %v920 = vunpack.c.l.b16 %v45
  %v921 = vunpack.c.h.b16 %v45
  %v922 = vunpack.c.l.b16 %v46
  %v923 = vunpack.c.h.b16 %v46
  %v924 = vunpack.c.l.b16 %v47
  %v925 = vunpack.c.h.b16 %v47
  %v926 = vunpack.c.l.b16 %v48
  %v927 = vunpack.c.h.b16 %v48
  %v928 = vunpack.c.l.b16 %v49
  %v929 = vunpack.c.h.b16 %v49
  %v930 = vunpack.c.l.b16 %v50
  %v931 = vunpack.c.h.b16 %v50
  %v932 = vunpack.c.l.b16 %v51
  %v933 = vunpack.c.h.b16 %v51
  %v934 = vunpack.c.l.b16 %v52
  %v935 = vunpack.c.h.b16 %v52
  %v936 = vunpack.c.l.b16 %v53
  %v937 = vunpack.c.h.b16 %v53
  %v938 = vunpack.c.l.b16 %v54
  %v939 = vunpack.c.h.b16 %v54
  %v940 = vunpack.c.l.b16 %v55
  %v941 = vunpack.c.h.b16 %v55
  %v942 = vunpack.c.l.b16 %v56
  %v943 = vunpack.c.h.b16 %v56
  %v944 = vunpack.c.l.b16 %v57
  %v945 = vunpack.c.h.b16 %v57
  %v946 = vunpack.c.l.b16 %v58
  %v947 = vunpack.c.h.b16 %v58
  %v948 = vunpack.c.l.b16 %v59
  %v949 = vunpack.c.h.b16 %v59
  %v950 = vunpack.c.l.b16 %v60
  %v951 = vunpack.c.h.b16 %v60
  %v952 = vunpack.c.l.b16 %v61
  %v953 = vunpack.c.h.b16 %v61
  %v954 = vunpack.c.l.b16 %v62
  %v955 = vunpack.c.h.b16 %v62
  %v956 = vunpack.c.l.b16 %v63
  %v957 = vunpack.c.h.b16 %v63
  %v958 = vunpack.c.l.b16 %v64
  %v959 = vunpack.c.h.b16 %v64
  %v960 = vunpack.c.l.b16 %v65
  %v961 = vunpack.c.h.b16 %v65
  %v962 = vunpack.c.l.b16 %v66
  %v963 = vunpack.c.h.b16 %v66
  %v964 = vunpack.c.l.b16 %v67
  %v965 = vunpack.c.h.b16 %v67
  %v966 = vunpack.c.l.b16 %v68
  %v967 = vunpack.c.h.b16 %v68
  %v968 = vunpack.c.l.b16 %v69
  %v969 = vunpack.c.h.b16 %v69
  %v970 = vunpack.c.l.b16 %v70
  %v971 = vunpack.c.h.b16 %v70
  %v972 = vunpack.c.l.b16 %v71
  %v973 = vunpack.c.h.b16 %v71
  %v974 = vunpack.c.l.b16 %v72
  %v975 = vunpack.c.h.b16 %v72
  %v976 = vunpack.c.l.b16 %v73
  %v977 = vunpack.c.h.b16 %v73
  %v978 = vunpack.c.l.b16 %v74
  %v979 = vunpack.c.h.b16 %v74
  %v980 = vunpack.c.l.b16 %v75
  %v981 = vunpack.c.h.b16 %v75
  %v982 = vunpack.c.l.b16 %v76
  %v983 = vunpack.c.h.b16 %v76
  %v984 = vunpack.c.l.b16 %v77
  %v985 = vunpack.c.h.b16 %v77
  %v986 = vunpack.c.l.b16 %v78
  %v987 = vunpack.c.h.b16 %v78
  %v988 = vunpack.c.l.b16 %v79
  %v989 = vunpack.c.h.b16 %v79
  %v990 = vunpack.c.l.b16 %v80
  %v991 = vunpack.c.h.b16 %v80
  %v992 = vunpack.c.l.b16 %v81
  %v993 = vunpack.c.h.b16 %v81
  %v994 = vunpack.c.l.b16 %v82
  %v995 = vunpack.c.h.b16 %v82
  %v996 = vunpack.c.l.b16 %v83
  %v997 = vunpack.c.h.b16 %v83
  %v998 = vunpack.c.l.b16 %v84
  %v999 = vunpack.c.h.b16 %v84
  %v1000 = vunpack.c.l.b16 %v85
  %v1001 = vunpack.c.h.b16 %v85
  %v1002 = vunpack.c.l.b16 %v86
  %v1003 = vunpack.c.h.b16 %v86
  %v1004 = vunpack.c.l.b16 %v87
  %v1005 = vunpack.c.h.b16 %v87
  %v1006 = vunpack.c.l.b16 %v88
  %v1007 = vunpack.c.h.b16 %v88
  %v1008 = vunpack.c.l.b16 %v89
  %v1009 = vunpack.c.h.b16 %v89
  %v1010 = vunpack.c.l.b16 %v90
  %v1011 = vunpack.c.h.b16 %v90
  %v1012 = vunpack.c.l.b16 %v91
  %v1013 = vunpack.c.h.b16 %v91
  %v1014 = vunpack.c.l.b16 %v92
  %v1015 = vunpack.c.h.b16 %v92
  %v1016 = vunpack.c.l.b16 %v93
  %v1017 = vunpack.c.h.b16 %v93
  %v1018 = vunpack.c.l.b16 %v94
  %v1019 = vunpack.c.h.b16 %v94
  %v1020 = vunpack.c.l.b16 %v95
  %v1021 = vunpack.c.h.b16 %v95
  %v1022 = vunpack.c.l.b16 %v96
  %v1023 = vunpack.c.h.b16 %v96
  %v1024 = vunpack.c.l.b16 %v97
  %v1025 = vunpack.c.h.b16 %v97
  %v1026 = vunpack.c.l.b16 %v98
  %v1027 = vunpack.c.h.b16 %v98
  %v1028 = vunpack.c.l.b16 %v99
  %v1029 = vunpack.c.h.b16 %v99
  %v1030 = vunpack.c.l.b16 %v100
  %v1031 = vunpack.c.h.b16 %v100
  %v1032 = vunpack.c.l.b16 %v101
  %v1033 = vunpack.c.h.b16 %v101
  %v1034 = vunpack.c.l.b16 %v102
  %v1035 = vunpack.c.h.b16 %v102
  %v1036 = vunpack.c.l.b16 %v103
  %v1037 = vunpack.c.h.b16 %v103
  %v1038 = vunpack.c.l.b16 %v104
  %v1039 = vunpack.c.h.b16 %v104
  %v1040 = vunpack.c.l.b16 %v105
  %v1041 = vunpack.c.h.b16 %v105
  %v1042 = vunpack.c.l.b16 %v106
  %v1043 = vunpack.c.h.b16 %v106
  %v1044 = vunpack.c.l.b16 %v107
  %v1045 = vunpack.c.h.b16 %v107
  %v1046 = vunpack.c.l.b16 %v108
  %v1047 = vunpack.c.h.b16 %v108
  %v1048 = vunpack.c.l.b16 %v109
  %v1049 = vunpack.c.h.b16 %v109
  %v1050 = vunpack.c.l.b16 %v110
  %v1051 = vunpack.c.h.b16 %v110
  %v1052 = vunpack.c.l.b16 %v111
  %v1053 = vunpack.c.h.b16 %v111
  %v1054 = vunpack.c.l.b16 %v112
  %v1055 = vunpack.c.h.b16 %v112
  %v1056 = vunpack.c.l.b16 %v113
  %v1057 = vunpack.c.h.b16 %v113
  %v1058 = vunpack.c.l.b16 %v114
  %v1059 = vunpack.c.h.b16 %v114
  %v1060 = vunpack.c.l.b16 %v115
  %v1061 = vunpack.c.h.b16 %v115
  %v1062 = vunpack.c.l.b16 %v116
  %v1063 = vunpack.c.h.b16 %v116
  %v1064 = vunpack.c.l.b16 %v117
  %v1065 = vunpack.c.h.b16 %v117
  %v1066 = vunpack.c.l.b16 %v118
  %v1067 = vunpack.c.h.b16 %v118
  %v1068 = vunpack.c.l.b16 %v119
  %v1069 = vunpack.c.h.b16 %v119
  %v1070 = vunpack.c.l.b16 %v120
  %v1071 = vunpack.c.h.b16 %v120
  %v1072 = vunpack.c.l.b16 %v121
  %v1073 = vunpack.c.h.b16 %v121
  %v1074 = vunpack.c.l.b16 %v122
  %v1075 = vunpack.c.h.b16 %v122
  %v1076 = vunpack.c.l.b16 %v123
  %v1077 = vunpack.c.h.b16 %v123
  %v1078 = vunpack.c.l.b16 %v124
  %v1079 = vunpack.c.h.b16 %v124
  %v1080 = vunpack.c.l.b16 %v125
  %v1081 = vunpack.c.h.b16 %v125
  %v1082 = vunpack.c.l.b16 %v126
  %v1083 = vunpack.c.h.b16 %v126
  %v1084 = vunpack.c.l.b16 %v127
  %v1085 = vunpack.c.h.b16 %v127
  %v1086 = vunpack.c.l.b16 %v128
  %v1087 = vunpack.c.h.b16 %v128
  %v1088 = vunpack.c.l.b16 %v129
  %v1089 = vunpack.c.h.b16 %v129
  %v1090 = vunpack.c.l.b16 %v130
  %v1091 = vunpack.c.h.b16 %v130
  %v1092 = vunpack.c.l.b16 %v131
  %v1093 = vunpack.c.h.b16 %v131
  %v1094 = vunpack.c.l.b16 %v132
  %v1095 = vunpack.c.h.b16 %v132
  %v1096 = vunpack.c.l.b16 %v133
  %v1097 = vunpack.c.h.b16 %v133
  %v1098 = vunpack.c.l.b16 %v134
  %v1099 = vunpack.c.h.b16 %v134
  %v1100 = vunpack.c.l.b16 %v135
  %v1101 = vunpack.c.h.b16 %v135
  %v1102 = vunpack.c.l.b16 %v136
  %v1103 = vunpack.c.h.b16 %v136
  %v1104 = vunpack.c.l.b16 %v137
  %v1105 = vunpack.c.h.b16 %v137
  %v1106 = vunpack.c.l.b16 %v138
  %v1107 = vunpack.c.h.b16 %v138
  %v1108 = vunpack.c.l.b16 %v139
  %v1109 = vunpack.c.h.b16 %v139
  %v1110 = vunpack.c.l.b16 %v140
  %v1111 = vunpack.c.h.b16 %v140
  %v1112 = vunpack.c.l.b16 %v141
  %v1113 = vunpack.c.h.b16 %v141
  %v1114 = vunpack.c.l.b16 %v142
  %v1115 = vunpack.c.h.b16 %v142
  %v1116 = vunpack.c.l.b16 %v143
  %v1117 = vunpack.c.h.b16 %v143
  %v1118 = vunpack.c.l.b16 %v144
  %v1119 = vunpack.c.h.b16 %v144
  %v1120 = vunpack.c.l.b16 %v145
  %v1121 = vunpack.c.h.b16 %v145
  %v1122 = vunpack.c.l.b16 %v146
  %v1123 = vunpack.c.h.b16 %v146
  %v1124 = vunpack.c.l.b16 %v147
  %v1125 = vunpack.c.h.b16 %v147
  %v1126 = vunpack.c.l.b16 %v148
  %v1127 = vunpack.c.h.b16 %v148
  %v1128 = vunpack.c.l.b16 %v149
  %v1129 = vunpack.c.h.b16 %v149
  %v1130 = vunpack.c.l.b16 %v150
  %v1131 = vunpack.c.h.b16 %v150
  %v1132 = vunpack.c.l.b16 %v151
  %v1133 = vunpack.c.h.b16 %v151
  %v1134 = vunpack.c.l.b16 %v152
  %v1135 = vunpack.c.h.b16 %v152
  %v1136 = vunpack.c.l.b16 %v153
  %v1137 = vunpack.c.h.b16 %v153
  %v1138 = vunpack.c.l.b16 %v154
  %v1139 = vunpack.c.h.b16 %v154
  %v1140 = vunpack.c.l.b16 %v155
  %v1141 = vunpack.c.h.b16 %v155
  %v1142 = vunpack.c.l.b16 %v156
  %v1143 = vunpack.c.h.b16 %v156
  %v1144 = vunpack.c.l.b16 %v157
  %v1145 = vunpack.c.h.b16 %v157
  %v1146 = vunpack.c.l.b16 %v158
  %v1147 = vunpack.c.h.b16 %v158
  %v1148 = vunpack.c.l.b16 %v159
  %v1149 = vunpack.c.h.b16 %v159
  %v1150 = vunpack.c.l.b16 %v160
  %v1151 = vunpack.c.h.b16 %v160
  %v1152 = vunpack.c.l.b16 %v161
  %v1153 = vunpack.c.h.b16 %v161
  %v1154 = vunpack.c.l.b16 %v162
  %v1155 = vunpack.c.h.b16 %v162
  %v1156 = vunpack.c.l.b16 %v163
  %v1157 = vunpack.c.h.b16 %v163
  %v1158 = vunpack.c.l.b16 %v164
  %v1159 = vunpack.c.h.b16 %v164
  %v1160 = vunpack.c.l.b16 %v165
  %v1161 = vunpack.c.h.b16 %v165
  %v1162 = vunpack.c.l.b16 %v166
  %v1163 = vunpack.c.h.b16 %v166
  %v1164 = vunpack.c.l.b16 %v167
  %v1165 = vunpack.c.h.b16 %v167
  %v1166 = vunpack.c.l.b16 %v168
  %v1167 = vunpack.c.h.b16 %v168
  %v1168 = vunpack.c.l.b16 %v169
  %v1169 = vunpack.c.h.b16 %v169
  %v1170 = vunpack.c.l.b16 %v170
  %v1171 = vunpack.c.h.b16 %v170
  %v1172 = vunpack.c.l.b16 %v171
  %v1173 = vunpack.c.h.b16 %v171
  %v1174 = vunpack.c.l.b16 %v172
  %v1175 = vunpack.c.h.b16 %v172
  %v1176 = vunpack.c.l.b16 %v173
  %v1177 = vunpack.c.h.b16 %v173
  %v1178 = vunpack.c.l.b16 %v174
  %v1179 = vunpack.c.h.b16 %v174
  %v1180 = vunpack.c.l.b16 %v175
  %v1181 = vunpack.c.h.b16 %v175
  %v1182 = vunpack.c.l.b16 %v176
  %v1183 = vunpack.c.h.b16 %v176
  %v1184 = vunpack.c.l.b16 %v177
  %v1185 = vunpack.c.h.b16 %v177
  %v1186 = vunpack.c.l.b16 %v178
  %v1187 = vunpack.c.h.b16 %v178
  %v1188 = vunpack.c.l.b16 %v179
  %v1189 = vunpack.c.h.b16 %v179
  %v1190 = vunpack.c.l.b16 %v180
  %v1191 = vunpack.c.h.b16 %v180
  %v1192 = vunpack.c.l.b16 %v181
  %v1193 = vunpack.c.h.b16 %v181
  %v1194 = vunpack.c.l.b16 %v182
  %v1195 = vunpack.c.h.b16 %v182
  %v1196 = vunpack.c.l.b16 %v183
  %v1197 = vunpack.c.h.b16 %v183
  %v1198 = vunpack.c.l.b16 %v184
  %v1199 = vunpack.c.h.b16 %v184
  %v1200 = vunpack.c.l.b16 %v185
  %v1201 = vunpack.c.h.b16 %v185
  %v1202 = vunpack.c.l.b16 %v186
  %v1203 = vunpack.c.h.b16 %v186
  %v1204 = vunpack.c.l.b16 %v187
  %v1205 = vunpack.c.h.b16 %v187
  %v1206 = vunpack.c.l.b16 %v188
  %v1207 = vunpack.c.h.b16 %v188
  %v1208 = vunpack.c.l.b16 %v189
  %v1209 = vunpack.c.h.b16 %v189
  %v1210 = vunpack.c.l.b16 %v190
  %v1211 = vunpack.c.h.b16 %v190
  %v1212 = vunpack.c.l.b16 %v191
  %v1213 = vunpack.c.h.b16 %v191
  %v1214 = vunpack.c.l.b16 %v192
  %v1215 = vunpack.c.h.b16 %v192
  %v1216 = vunpack.c.l.b16 %v193
  %v1217 = vunpack.c.h.b16 %v193
  %v1218 = vunpack.c.l.b16 %v194
  %v1219 = vunpack.c.h.b16 %v194
  %v1220 = vunpack.c.l.b16 %v195
  %v1221 = vunpack.c.h.b16 %v195
  %v1222 = vunpack.c.l.b16 %v196
  %v1223 = vunpack.c.h.b16 %v196
  %v1224 = vunpack.c.l.b16 %v197
  %v1225 = vunpack.c.h.b16 %v197
  %v1226 = vunpack.c.l.b16 %v198
  %v1227 = vunpack.c.h.b16 %v198
  %v1228 = vunpack.c.l.b16 %v199
  %v1229 = vunpack.c.h.b16 %v199
  %v1230 = vunpack.c.l.b16 %v200
  %v1231 = vunpack.c.h.b16 %v200
  %v1232 = vunpack.c.l.b16 %v201
  %v1233 = vunpack.c.h.b16 %v201
  %v1234 = vunpack.c.l.b16 %v202
  %v1235 = vunpack.c.h.b16 %v202
  %v1236 = vunpack.c.l.b16 %v203
  %v1237 = vunpack.c.h.b16 %v203
  %v1238 = vunpack.c.l.b16 %v204
  %v1239 = vunpack.c.h.b16 %v204
  %v1240 = vunpack.c.l.b16 %v205
  %v1241 = vunpack.c.h.b16 %v205
  %v1242 = vunpack.c.l.b16 %v206
  %v1243 = vunpack.c.h.b16 %v206
  %v1244 = vunpack.c.l.b16 %v207
  %v1245 = vunpack.c.h.b16 %v207
  %v1246 = vunpack.c.l.b16 %v208
  %v1247 = vunpack.c.h.b16 %v208
  %v1248 = vunpack.c.l.b16 %v209
  %v1249 = vunpack.c.h.b16 %v209
  %v1250 = vunpack.c.l.b16 %v210
  %v1251 = vunpack.c.h.b16 %v210
  %v1252 = vunpack.c.l.b16 %v211
  %v1253 = vunpack.c.h.b16 %v211
  %v1254 = vunpack.c.l.b16 %v212
  %v1255 = vunpack.c.h.b16 %v212
  %v1256 = vunpack.c.l.b16 %v213
  %v1257 = vunpack.c.h.b16 %v213
  %v1258 = vunpack.c.l.b16 %v214
  %v1259 = vunpack.c.h.b16 %v214
  %v1260 = vunpack.c.l.b16 %v215
  %v1261 = vunpack.c.h.b16 %v215
  %v1262 = vunpack.c.l.b16 %v216
  %v1263 = vunpack.c.h.b16 %v216
  %v1264 = vunpack.c.l.b16 %v217
  %v1265 = vunpack.c.h.b16 %v217
  %v1266 = vunpack.c.l.b16 %v218
  %v1267 = vunpack.c.h.b16 %v218
  %v1268 = vunpack.c.l.b16 %v219
  %v1269 = vunpack.c.h.b16 %v219
  %v1270 = vunpack.c.l.b16 %v220
  %v1271 = vunpack.c.h.b16 %v220
  %v1272 = vunpack.c.l.b16 %v221
  %v1273 = vunpack.c.h.b16 %v221
  %v1274 = vunpack.c.l.b16 %v222
  %v1275 = vunpack.c.h.b16 %v222
  %v1276 = vunpack.c.l.b16 %v223
  %v1277 = vunpack.c.h.b16 %v223
  %v1278 = vunpack.c.l.b16 %v224
  %v1279 = vunpack.c.h.b16 %v224
  %v1280 = vunpack.c.l.b16 %v225
  %v1281 = vunpack.c.h.b16 %v225
  %v1282 = vunpack.c.l.b16 %v226
  %v1283 = vunpack.c.h.b16 %v226
  %v1284 = vunpack.c.l.b16 %v227
  %v1285 = vunpack.c.h.b16 %v227
  %v1286 = vunpack.c.l.b16 %v228
  %v1287 = vunpack.c.h.b16 %v228
  %v1288 = vunpack.c.l.b16 %v229
  %v1289 = vunpack.c.h.b16 %v229
  %v1290 = vunpack.c.l.b16 %v230
  %v1291 = vunpack.c.h.b16 %v230
  %v1292 = vunpack.c.l.b16 %v231
  %v1293 = vunpack.c.h.b16 %v231
  %v1294 = vunpack.c.l.b16 %v232
  %v1295 = vunpack.c.h.b16 %v232
  %v1296 = vunpack.c.l.b16 %v233
  %v1297 = vunpack.c.h.b16 %v233
  %v1298 = vunpack.c.l.b16 %v234
  %v1299 = vunpack.c.h.b16 %v234
  %v1300 = vunpack.c.l.b16 %v235
  %v1301 = vunpack.c.h.b16 %v235
  %v1302 = vunpack.c.l.b16 %v236
  %v1303 = vunpack.c.h.b16 %v236
  %v1304 = vunpack.c.l.b16 %v237
  %v1305 = vunpack.c.h.b16 %v237
  %v1306 = vunpack.c.l.b16 %v238
  %v1307 = vunpack.c.h.b16 %v238
  %v1308 = vunpack.c.l.b16 %v239
  %v1309 = vunpack.c.h.b16 %v239
  %v1310 = vunpack.c.l.b16 %v240
  %v1311 = vunpack.c.h.b16 %v240
  %v1312 = vunpack.c.l.b16 %v241
  %v1313 = vunpack.c.h.b16 %v241
  %v1314 = vunpack.c.l.b16 %v242
  %v1315 = vunpack.c.h.b16 %v242
  %v1316 = vunpack.c.l.b16 %v243
  %v1317 = vunpack.c.h.b16 %v243
  %v1318 = vunpack.c.l.b16 %v244
  %v1319 = vunpack.c.h.b16 %v244
  %v1320 = vunpack.c.l.b16 %v245
  %v1321 = vunpack.c.h.b16 %v245
  %v1322 = vunpack.c.l.b16 %v246
  %v1323 = vunpack.c.h.b16 %v246
  %v1324 = vunpack.c.l.b16 %v247
  %v1325 = vunpack.c.h.b16 %v247
  %v1326 = vunpack.c.l.b16 %v248
  %v1327 = vunpack.c.h.b16 %v248
  %v1328 = vunpack.c.l.b16 %v249
  %v1329 = vunpack.c.h.b16 %v249
  %v1330 = vunpack.c.l.b16 %v250
  %v1331 = vunpack.c.h.b16 %v250
  %v1332 = vunpack.c.l.b16 %v251
  %v1333 = vunpack.c.h.b16 %v251
  %v1334 = vunpack.c.l.b16 %v252
  %v1335 = vunpack.c.h.b16 %v252
  %v1336 = vunpack.c.l.b16 %v253
  %v1337 = vunpack.c.h.b16 %v253
  %v1338 = vunpack.c.l.b16 %v254
  %v1339 = vunpack.c.h.b16 %v254
  %v1340 = vunpack.c.l.b16 %v255
  %v1341 = vunpack.c.h.b16 %v255
  %v1342 = vunpack.c.l.b16 %v256
  %v1343 = vunpack.c.h.b16 %v256
  %v1344 = vunpack.c.l.b16 %v257
  %v1345 = vunpack.c.h.b16 %v257
  %v1346 = vunpack.c.l.b16 %v258
  %v1347 = vunpack.c.h.b16 %v258
  %v1348 = vunpack.c.l.b16 %v259
  %v1349 = vunpack.c.h.b16 %v259
  %v1350 = vunpack.c.l.b16 %v260
  %v1351 = vunpack.c.h.b16 %v260
  %v1352 = vunpack.c.l.b16 %v261
  %v1353 = vunpack.c.h.b16 %v261
  %v1354 = vunpack.c.l.b16 %v262
  %v1355 = vunpack.c.h.b16 %v262
  %v1356 = vunpack.c.l.b16 %v263
  %v1357 = vunpack.c.h.b16 %v263
  %v1358 = vunpack.c.l.b16 %v264
  %v1359 = vunpack.c.h.b16 %v264
  %v1360 = vunpack.c.l.b16 %v265
  %v1361 = vunpack.c.h.b16 %v265
  %v1362 = vunpack.c.l.b16 %v266
  %v1363 = vunpack.c.h.b16 %v266
  %v1364 = vunpack.c.l.b16 %v267
  %v1365 = vunpack.c.h.b16 %v267
  %v1366 = vunpack.c.l.b16 %v268
  %v1367 = vunpack.c.h.b16 %v268
  %v1368 = vunpack.c.l.b16 %v269
  %v1369 = vunpack.c.h.b16 %v269
  %v1370 = vunpack.c.l.b16 %v270
  %v1371 = vunpack.c.h.b16 %v270
  %v1372 = vunpack.c.l.b16 %v271
  %v1373 = vunpack.c.h.b16 %v271
  %v1374 = vunpack.c.l.b16 %v272
  %v1375 = vunpack.c.h.b16 %v272
  %v1376 = vunpack.c.l.b16 %v273
  %v1377 = vunpack.c.h.b16 %v273
  %v1378 = vunpack.c.l.b16 %v274
  %v1379 = vunpack.c.h.b16 %v274
  %v1380 = vunpack.c.l.b16 %v275
  %v1381 = vunpack.c.h.b16 %v275
  %v1382 = vunpack.c.l.b16 %v276
  %v1383 = vunpack.c.h.b16 %v276
  %v1384 = vunpack.c.l.b16 %v277
  %v1385 = vunpack.c.h.b16 %v277
  %v1386 = vunpack.c.l.b16 %v278
  %v1387 = vunpack.c.h.b16 %v278
  %v1388 = vunpack.c.l.b16 %v279
  %v1389 = vunpack.c.h.b16 %v279
  %v1390 = vunpack.c.l.b16 %v280
  %v1391 = vunpack.c.h.b16 %v280
  %v1392 = vunpack.c.l.b16 %v281
  %v1393 = vunpack.c.h.b16 %v281
  %v1394 = vunpack.c.l.b16 %v282
  %v1395 = vunpack.c.h.b16 %v282
  %v1396 = vunpack.c.l.b16 %v283
  %v1397 = vunpack.c.h.b16 %v283
  %v1398 = vunpack.c.l.b16 %v284
  %v1399 = vunpack.c.h.b16 %v284
  %v1400 = vunpack.c.l.b16 %v285
  %v1401 = vunpack.c.h.b16 %v285
  %v1402 = vunpack.c.l.b16 %v286
  %v1403 = vunpack.c.h.b16 %v286
  %v1404 = vunpack.c.l.b16 %v287
  %v1405 = vunpack.c.h.b16 %v287
  %v1406 = vunpack.c.l.b16 %v288
  %v1407 = vunpack.c.h.b16 %v288
  %v1408 = vunpack.c.l.b16 %v289
  %v1409 = vunpack.c.h.b16 %v289
  %v1410 = vunpack.c.l.b16 %v290
  %v1411 = vunpack.c.h.b16 %v290
  %v1412 = vunpack.c.l.b16 %v291
  %v1413 = vunpack.c.h.b16 %v291
  %v1414 = vunpack.c.l.b16 %v292
  %v1415 = vunpack.c.h.b16 %v292
  %v1416 = vunpack.c.l.b16 %v293
  %v1417 = vunpack.c.h.b16 %v293
  %v1418 = vunpack.c.l.b16 %v294
  %v1419 = vunpack.c.h.b16 %v294
  %v1420 = vunpack.c.l.b16 %v295
  %v1421 = vunpack.c.h.b16 %v295
  %v1422 = vunpack.c.l.b16 %v296
  %v1423 = vunpack.c.h.b16 %v296
  %v1424 = vunpack.c.l.b16 %v297
  %v1425 = vunpack.c.h.b16 %v297
  %v1426 = vunpack.c.l.b16 %v298
  %v1427 = vunpack.c.h.b16 %v298
  %v1428 = vunpack.c.l.b16 %v299
  %v1429 = vunpack.c.h.b16 %v299
  %v1430 = vunpack.c.l.b16 %v300
  %v1431 = vunpack.c.h.b16 %v300
  %v1432 = vunpack.c.l.b16 %v301
  %v1433 = vunpack.c.h.b16 %v301
  %v1434 = vunpack.c.l.b16 %v302
  %v1435 = vunpack.c.h.b16 %v302
  %v1436 = vunpack.c.l.b16 %v303
  %v1437 = vunpack.c.h.b16 %v303
  %v1438 = vunpack.c.l.b16 %v304
  %v1439 = vunpack.c.h.b16 %v304
  %v1440 = vunpack.c.l.b16 %v305
  %v1441 = vunpack.c.h.b16 %v305
  %v1442 = vunpack.c.l.b16 %v306
  %v1443 = vunpack.c.h.b16 %v306
  %v1444 = vunpack.c.l.b16 %v307
  %v1445 = vunpack.c.h.b16 %v307
  %v1446 = vunpack.c.l.b16 %v308
  %v1447 = vunpack.c.h.b16 %v308
  %v1448 = vunpack.c.l.b16 %v309
  %v1449 = vunpack.c.h.b16 %v309
  %v1450 = vunpack.c.l.b16 %v310
  %v1451 = vunpack.c.h.b16 %v310
  %v1452 = vunpack.c.l.b16 %v311
  %v1453 = vunpack.c.h.b16 %v311
  %v1454 = vunpack.c.l.b16 %v312
  %v1455 = vunpack.c.h.b16 %v312
  %v1456 = vunpack.c.l.b16 %v313
  %v1457 = vunpack.c.h.b16 %v313
  %v1458 = vunpack.c.l.b16 %v314
  %v1459 = vunpack.c.h.b16 %v314
  %v1460 = vunpack.c.l.b16 %v315
  %v1461 = vunpack.c.h.b16 %v315
  %v1462 = vunpack.c.l.b16 %v316
  %v1463 = vunpack.c.h.b16 %v316
  %v1464 = vunpack.c.l.b16 %v317
  %v1465 = vunpack.c.h.b16 %v317
  %v1466 = vunpack.c.l.b16 %v318
  %v1467 = vunpack.c.h.b16 %v318
  %v1468 = vunpack.c.l.b16 %v319
  %v1469 = vunpack.c.h.b16 %v319
  %v1470 = vunpack.c.l.b16 %v320
  %v1471 = vunpack.c.h.b16 %v320
  %v1472 = vunpack.c.l.b16 %v321
  %v1473 = vunpack.c.h.b16 %v321
  %v1474 = vunpack.c.l.b16 %v322
  %v1475 = vunpack.c.h.b16 %v322
  %v1476 = vunpack.c.l.b16 %v323
  %v1477 = vunpack.c.h.b16 %v323
  %v1478 = vunpack.c.l.b16 %v324
  %v1479 = vunpack.c.h.b16 %v324
  %v1480 = vunpack.c.l.b16 %v325
  %v1481 = vunpack.c.h.b16 %v325
  %v1482 = vunpack.c.l.b16 %v326
  %v1483 = vunpack.c.h.b16 %v326
  %v1484 = vunpack.c.l.b16 %v327
  %v1485 = vunpack.c.h.b16 %v327
  %v1486 = vunpack.c.l.b16 %v328
  %v1487 = vunpack.c.h.b16 %v328
  %v1488 = vunpack.c.l.b16 %v329
  %v1489 = vunpack.c.h.b16 %v329
  %v1490 = vunpack.c.l.b16 %v330
  %v1491 = vunpack.c.h.b16 %v330
  %v1492 = vunpack.c.l.b16 %v331
  %v1493 = vunpack.c.h.b16 %v331
  %v1494 = vunpack.c.l.b16 %v332
  %v1495 = vunpack.c.h.b16 %v332
  %v1496 = vunpack.c.l.b16 %v333
  %v1497 = vunpack.c.h.b16 %v333
  %v1498 = vunpack.c.l.b16 %v334
  %v1499 = vunpack.c.h.b16 %v334
  %v1500 = vunpack.c.l.b16 %v335
  %v1501 = vunpack.c.h.b16 %v335
  %v1502 = vunpack.c.l.b16 %v336
  %v1503 = vunpack.c.h.b16 %v336
  %v1504 = vunpack.c.l.b16 %v337
  %v1505 = vunpack.c.h.b16 %v337
  %v1506 = vunpack.c.l.b16 %v338
  %v1507 = vunpack.c.h.b16 %v338
  %v1508 = vunpack.c.l.b16 %v339
  %v1509 = vunpack.c.h.b16 %v339
  %v1510 = vunpack.c.l.b16 %v340
  %v1511 = vunpack.c.h.b16 %v340
  %v1512 = vunpack.c.l.b16 %v341
  %v1513 = vunpack.c.h.b16 %v341
  %v1514 = vunpack.c.l.b16 %v342
  %v1515 = vunpack.c.h.b16 %v342
  %v1516 = vunpack.c.l.b16 %v343
  %v1517 = vunpack.c.h.b16 %v343
  %v1518 = vunpack.c.l.b16 %v344
  %v1519 = vunpack.c.h.b16 %v344
  %v1520 = vunpack.c.l.b16 %v345
  %v1521 = vunpack.c.h.b16 %v345
  %v1522 = vunpack.c.l.b16 %v346
  %v1523 = vunpack.c.h.b16 %v346
  %v1524 = vunpack.c.l.b16 %v347
  %v1525 = vunpack.c.h.b16 %v347
  %v1526 = vunpack.c.l.b16 %v348
  %v1527 = vunpack.c.h.b16 %v348
  %v1528 = vunpack.c.l.b16 %v349
  %v1529 = vunpack.c.h.b16 %v349
  %v1530 = vunpack.c.l.b16 %v350
  %v1531 = vunpack.c.h.b16 %v350
  %v1532 = vunpack.c.l.b16 %v351
  %v1533 = vunpack.c.h.b16 %v351
  %v1534 = vunpack.c.l.b16 %v352
  %v1535 = vunpack.c.h.b16 %v352
  %v1536 = vunpack.c.l.b16 %v353
  %v1537 = vunpack.c.h.b16 %v353
  %v1538 = vunpack.c.l.b16 %v354
  %v1539 = vunpack.c.h.b16 %v354
  %v1540 = vunpack.c.l.b16 %v355
  %v1541 = vunpack.c.h.b16 %v355
  %v1542 = vunpack.c.l.b16 %v356
  %v1543 = vunpack.c.h.b16 %v356
  %v1544 = vunpack.c.l.b16 %v357
  %v1545 = vunpack.c.h.b16 %v357
  %v1546 = vunpack.c.l.b16 %v358
  %v1547 = vunpack.c.h.b16 %v358
  %v1548 = vunpack.c.l.b16 %v359
  %v1549 = vunpack.c.h.b16 %v359
  %v1550 = vunpack.c.l.b16 %v360
  %v1551 = vunpack.c.h.b16 %v360
  %v1552 = vunpack.c.l.b16 %v361
  %v1553 = vunpack.c.h.b16 %v361
  %v1554 = vunpack.c.l.b16 %v362
  %v1555 = vunpack.c.h.b16 %v362
  %v1556 = vunpack.c.l.b16 %v363
  %v1557 = vunpack.c.h.b16 %v363
  %v1558 = vunpack.c.l.b16 %v364
  %v1559 = vunpack.c.h.b16 %v364
  %v1560 = vunpack.c.l.b16 %v365
  %v1561 = vunpack.c.h.b16 %v365
  %v1562 = vunpack.c.l.b16 %v366
  %v1563 = vunpack.c.h.b16 %v366
  %v1564 = vunpack.c.l.b16 %v367
  %v1565 = vunpack.c.h.b16 %v367
  %v1566 = vunpack.c.l.b16 %v368
  %v1567 = vunpack.c.h.b16 %v368
  %v1568 = vunpack.c.l.b16 %v369
  %v1569 = vunpack.c.h.b16 %v369
  %v1570 = vunpack.c.l.b16 %v370
  %v1571 = vunpack.c.h.b16 %v370
  %v1572 = vunpack.c.l.b16 %v371
  %v1573 = vunpack.c.h.b16 %v371
  %v1574 = vunpack.c.l.b16 %v372
  %v1575 = vunpack.c.h.b16 %v372
  %v1576 = vunpack.c.l.b16 %v373
  %v1577 = vunpack.c.h.b16 %v373
  %v1578 = vunpack.c.l.b16 %v374
  %v1579 = vunpack.c.h.b16 %v374
  %v1580 = vunpack.c.l.b16 %v375
  %v1581 = vunpack.c.h.b16 %v375
  %v1582 = vunpack.c.l.b16 %v376
  %v1583 = vunpack.c.h.b16 %v376
  %v1584 = vunpack.c.l.b16 %v377
  %v1585 = vunpack.c.h.b16 %v377
  %v1586 = vunpack.c.l.b16 %v378
  %v1587 = vunpack.c.h.b16 %v378
  %v1588 = vunpack.c.l.b16 %v379
  %v1589 = vunpack.c.h.b16 %v379
  %v1590 = vunpack.c.l.b16 %v380
  %v1591 = vunpack.c.h.b16 %v380
  %v1592 = vunpack.c.l.b16 %v381
  %v1593 = vunpack.c.h.b16 %v381
  %v1594 = vunpack.c.l.b16 %v382
  %v1595 = vunpack.c.h.b16 %v382
  %v1596 = vunpack.c.l.b16 %v383
  %v1597 = vunpack.c.h.b16 %v383
  %v1598 = vunpack.c.l.b16 %v384
  %v1599 = vunpack.c.h.b16 %v384
  %v1600 = vunpack.c.l.b16 %v385
  %v1601 = vunpack.c.h.b16 %v385
  %v1602 = vunpack.c.l.b16 %v386
  %v1603 = vunpack.c.h.b16 %v386
  %v1604 = vunpack.c.l.b16 %v387
  %v1605 = vunpack.c.h.b16 %v387
  %v1606 = vunpack.c.l.b16 %v388
  %v1607 = vunpack.c.h.b16 %v388
  %v1608 = vunpack.c.l.b16 %v389
  %v1609 = vunpack.c.h.b16 %v389
  %v1610 = vunpack.c.l.b16 %v390
  %v1611 = vunpack.c.h.b16 %v390
  %v1612 = vunpack.c.l.b16 %v391
  %v1613 = vunpack.c.h.b16 %v391
  %v1614 = vunpack.c.l.b16 %v392
  %v1615 = vunpack.c.h.b16 %v392
  %v1616 = vunpack.c.l.b16 %v393
  %v1617 = vunpack.c.h.b16 %v393
  %v1618 = vunpack.c.l.b16 %v394
  %v1619 = vunpack.c.h.b16 %v394
  %v1620 = vunpack.c.l.b16 %v395
  %v1621 = vunpack.c.h.b16 %v395
  %v1622 = vunpack.c.l.b16 %v396
  %v1623 = vunpack.c.h.b16 %v396
  %v1624 = vunpack.c.l.b16 %v397
  %v1625 = vunpack.c.h.b16 %v397
  %v1626 = vunpack.c.l.b16 %v398
  %v1627 = vunpack.c.h.b16 %v398
  %v1628 = vunpack.c.l.b16 %v399
  %v1629 = vunpack.c.h.b16 %v399
  %v1630 = vunpack.c.l.b16 %v400
  %v1631 = vunpack.c.h.b16 %v400
  %v1632 = vunpack.c.l.b16 %v401
  %v1633 = vunpack.c.h.b16 %v401
  %v1634 = vunpack.c.l.b16 %v402
  %v1635 = vunpack.c.h.b16 %v402
  %v1636 = vunpack.c.l.b16 %v403
  %v1637 = vunpack.c.h.b16 %v403
  %v1638 = vunpack.c.l.b16 %v404
  %v1639 = vunpack.c.h.b16 %v404
  %v1640 = vunpack.c.l.b16 %v405
  %v1641 = vunpack.c.h.b16 %v405
  %v1642 = vunpack.c.l.b16 %v406
  %v1643 = vunpack.c.h.b16 %v406
  %v1644 = vunpack.c.l.b16 %v407
  %v1645 = vunpack.c.h.b16 %v407
  %v1646 = vunpack.c.l.b16 %v408
  %v1647 = vunpack.c.h.b16 %v408
  %v1648 = vunpack.c.l.b16 %v409
  %v1649 = vunpack.c.h.b16 %v409
  %v1650 = vunpack.c.l.b16 %v410
  %v1651 = vunpack.c.h.b16 %v410
  %v1652 = vunpack.c.l.b16 %v411
  %v1653 = vunpack.c.h.b16 %v411
  %v1654 = vunpack.c.l.b16 %v412
  %v1655 = vunpack.c.h.b16 %v412
  %v1656 = vunpack.c.l.b16 %v413
  %v1657 = vunpack.c.h.b16 %v413
  %v1658 = vunpack.c.l.b16 %v414
  %v1659 = vunpack.c.h.b16 %v414
  %v1660 = vunpack.c.l.b16 %v415
  %v1661 = vunpack.c.h.b16 %v415
  %v1662 = vunpack.c.l.b16 %v416
  %v1663 = vunpack.c.h.b16 %v416
  %v1664 = vunpack.c.l.b16 %v417
  %v1665 = vunpack.c.h.b16 %v417
  %v1666 = vunpack.c.l.b16 %v418
  %v1667 = vunpack.c.h.b16 %v418
  %v1668 = vunpack.c.l.b16 %v419
  %v1669 = vunpack.c.h.b16 %v419
  %v1670 = vunpack.c.l.b16 %v420
  %v1671 = vunpack.c.h.b16 %v420
  %v1672 = vpack.c.b16 %v892, %v888
  %v1673 = vpack.c.b16 %v893, %v889
  %v1674 = vpack.c.b16 %v894, %v890
  %v1675 = vpack.c.b16 %v895, %v891
  %v1676 = vpack.c.b16 %v900, %v896
  %v1677 = vpack.c.b16 %v901, %v897
  %v1678 = vpack.c.b16 %v902, %v898
  %v1679 = vpack.c.b16 %v903, %v899
  %v1680 = vpack.c.b16 %v908, %v904
  %v1681 = vpack.c.b16 %v909, %v905
  %v1682 = vpack.c.b16 %v910, %v906
  %v1683 = vpack.c.b16 %v911, %v907
  %v1684 = vpack.c.b16 %v916, %v912
  %v1685 = vpack.c.b16 %v917, %v913
  %v1686 = vpack.c.b16 %v918, %v914
  %v1687 = vpack.c.b16 %v919, %v915
  %v1688 = vpack.c.b16 %v924, %v920
  %v1689 = vpack.c.b16 %v925, %v921
  %v1690 = vpack.c.b16 %v926, %v922
  %v1691 = vpack.c.b16 %v927, %v923
  %v1692 = vpack.c.b16 %v932, %v928
  %v1693 = vpack.c.b16 %v933, %v929
  %v1694 = vpack.c.b16 %v934, %v930
  %v1695 = vpack.c.b16 %v935, %v931
  %v1696 = vpack.c.b16 %v940, %v936
  %v1697 = vpack.c.b16 %v941, %v937
  %v1698 = vpack.c.b16 %v942, %v938
  %v1699 = vpack.c.b16 %v943, %v939
  %v1700 = vpack.c.b16 %v948, %v944
  %v1701 = vpack.c.b16 %v949, %v945
  %v1702 = vpack.c.b16 %v950, %v946
  %v1703 = vpack.c.b16 %v951, %v947
  %v1704 = vpack.c.b16 %v956, %v952
  %v1705 = vpack.c.b16 %v957, %v953
  %v1706 = vpack.c.b16 %v958, %v954
  %v1707 = vpack.c.b16 %v959, %v955
  %v1708 = vpack.c.b16 %v964, %v960
  %v1709 = vpack.c.b16 %v965, %v961
  %v1710 = vpack.c.b16 %v966, %v962
  %v1711 = vpack.c.b16 %v967, %v963
  %v1712 = vpack.c.b16 %v972, %v968
  %v1713 = vpack.c.b16 %v973, %v969
  %v1714 = vpack.c.b16 %v974, %v970
  %v1715 = vpack.c.b16 %v975, %v971
  %v1716 = vpack.c.b16 %v980, %v976
  %v1717 = vpack.c.b16 %v981, %v977
  %v1718 = vpack.c.b16 %v982, %v978
  %v1719 = vpack.c.b16 %v983, %v979
  %v1720 = vpack.c.b16 %v988, %v984
  %v1721 = vpack.c.b16 %v989, %v985
  %v1722 = vpack.c.b16 %v990, %v986
  %v1723 = vpack.c.b16 %v991, %v987
  %v1724 = vpack.c.b16 %v996, %v992
  %v1725 = vpack.c.b16 %v997, %v993
  %v1726 = vpack.c.b16 %v998, %v994
  %v1727 = vpack.c.b16 %v999, %v995
  %v1728 = vpack.c.b16 %v1004, %v1000
  %v1729 = vpack.c.b16 %v1005, %v1001
  %v1730 = vpack.c.b16 %v1006, %v1002
  %v1731 = vpack.c.b16 %v1007, %v1003
  %v1732 = vpack.c.b16 %v1012, %v1008
  %v1733 = vpack.c.b16 %v1013, %v1009
  %v1734 = vpack.c.b16 %v1014, %v1010
  %v1735 = vpack.c.b16 %v1015, %v1011
  %v1736 = vpack.c.b16 %v1020, %v1016
  %v1737 = vpack.c.b16 %v1021, %v1017
  %v1738 = vpack.c.b16 %v1022, %v1018
  %v1739 = vpack.c.b16 %v1023, %v1019
  %v1740 = vpack.c.b16 %v1028, %v1024
  %v1741 = vpack.c.b16 %v1029, %v1025
  %v1742 = vpack.c.b16 %v1030, %v1026
  %v1743 = vpack.c.b16 %v1031, %v1027
  %v1744 = vpack.c.b16 %v1036, %v1032
  %v1745 = vpack.c.b16 %v1037, %v1033
  %v1746 = vpack.c.b16 %v1038, %v1034
  %v1747 = vpack.c.b16 %v1039, %v1035
  %v1748 = vpack.c.b16 %v1044, %v1040
  %v1749 = vpack.c.b16 %v1045, %v1041
  %v1750 = vpack.c.b16 %v1046, %v1042
  %v1751 = vpack.c.b16 %v1047, %v1043
  %v1752 = vpack.c.b16 %v1052, %v1048
  %v1753 = vpack.c.b16 %v1053, %v1049
  %v1754 = vpack.c.b16 %v1054, %v1050
  %v1755 = vpack.c.b16 %v1055, %v1051
  %v1756 = vpack.c.b16 %v1060, %v1056
  %v1757 = vpack.c.b16 %v1061, %v1057
  %v1758 = vpack.c.b16 %v1062, %v1058
  %v1759 = vpack.c.b16 %v1063, %v1059
  %v1760 = vpack.c.b16 %v1068, %v1064
  %v1761 = vpack.c.b16 %v1069, %v1065
  %v1762 = vpack.c.b16 %v1070, %v1066
  %v1763 = vpack.c.b16 %v1071, %v1067
  %v1764 = vpack.c.b16 %v1076, %v1072
  %v1765 = vpack.c.b16 %v1077, %v1073
  %v1766 = vpack.c.b16 %v1078, %v1074
  %v1767 = vpack.c.b16 %v1079, %v1075
  %v1768 = vpack.c.b16 %v1084, %v1080
  %v1769 = vpack.c.b16 %v1085, %v1081
  %v1770 = vpack.c.b16 %v1086, %v1082
  %v1771 = vpack.c.b16 %v1087, %v1083
  %v1772 = vpack.c.b16 %v1092, %v1088
  %v1773 = vpack.c.b16 %v1093, %v1089
  %v1774 = vpack.c.b16 %v1094, %v1090
  %v1775 = vpack.c.b16 %v1095, %v1091
  %v1776 = vpack.c.b16 %v1100, %v1096
  %v1777 = vpack.c.b16 %v1101, %v1097
  %v1778 = vpack.c.b16 %v1102, %v1098
  %v1779 = vpack.c.b16 %v1103, %v1099
  %v1780 = vpack.c.b16 %v1108, %v1104
  %v1781 = vpack.c.b16 %v1109, %v1105
  %v1782 = vpack.c.b16 %v1110, %v1106
  %v1783 = vpack.c.b16 %v1111, %v1107
  %v1784 = vpack.c.b16 %v1116, %v1112
  %v1785 = vpack.c.b16 %v1117, %v1113
  %v1786 = vpack.c.b16 %v1118, %v1114
  %v1787 = vpack.c.b16 %v1119, %v1115
  %v1788 = vpack.c.b16 %v1124, %v1120
  %v1789 = vpack.c.b16 %v1125, %v1121
  %v1790 = vpack.c.b16 %v1126, %v1122
  %v1791 = vpack.c.b16 %v1127, %v1123
  %v1792 = vpack.c.b16 %v1132, %v1128
  %v1793 = vpack.c.b16 %v1133, %v1129
  %v1794 = vpack.c.b16 %v1134, %v1130
  %v1795 = vpack.c.b16 %v1135, %v1131
  %v1796 = vpack.c.b16 %v1140, %v1136
  %v1797 = vpack.c.b16 %v1141, %v1137
  %v1798 = vpack.c.b16 %v1142, %v1138
  %v1799 = vpack.c.b16 %v1143, %v1139
  %v1800 = vpack.c.b16 %v1148, %v1144
  %v1801 = vpack.c.b16 %v1149, %v1145
  %v1802 = vpack.c.b16 %v1150, %v1146
  %v1803 = vpack.c.b16 %v1151, %v1147
  %v1804 = vpack.c.b16 %v1156, %v1152
  %v1805 = vpack.c.b16 %v1157, %v1153
  %v1806 = vpack.c.b16 %v1158, %v1154
  %v1807 = vpack.c.b16 %v1159, %v1155
  %v1808 = vpack.c.b16 %v1164, %v1160
  %v1809 = vpack.c.b16 %v1165, %v1161
  %v1810 = vpack.c.b16 %v1166, %v1162
  %v1811 = vpack.c.b16 %v1167, %v1163
  %v1812 = vpack.c.b16 %v1172, %v1168
  %v1813 = vpack.c.b16 %v1173, %v1169
  %v1814 = vpack.c.b16 %v1174, %v1170
  %v1815 = vpack.c.b16 %v1175, %v1171
  %v1816 = vpack.c.b16 %v1180, %v1176
  %v1817 = vpack.c.b16 %v1181, %v1177
  %v1818 = vpack.c.b16 %v1182, %v1178
  %v1819 = vpack.c.b16 %v1183, %v1179
  %v1820 = vpack.c.b16 %v1188, %v1184
  %v1821 = vpack.c.b16 %v1189, %v1185
  %v1822 = vpack.c.b16 %v1190, %v1186
  %v1823 = vpack.c.b16 %v1191, %v1187
  %v1824 = vpack.c.b16 %v1196, %v1192
  %v1825 = vpack.c.b16 %v1197, %v1193
  %v1826 = vpack.c.b16 %v1198, %v1194
  %v1827 = vpack.c.b16 %v1199, %v1195
  %v1828 = vpack.c.b16 %v1204, %v1200
  %v1829 = vpack.c.b16 %v1205, %v1201
  %v1830 = vpack.c.b16 %v1206, %v1202
  %v1831 = vpack.c.b16 %v1207, %v1203
  %v1832 = vpack.c.b16 %v1212, %v1208
  %v1833 = vpack.c.b16 %v1213, %v1209
  %v1834 = vpack.c.b16 %v1214, %v1210
  %v1835 = vpack.c.b16 %v1215, %v1211
  %v1836 = vpack.c.b16 %v1220, %v1216
  %v1837 = vpack.c.b16 %v1221, %v1217
  %v1838 = vpack.c.b16 %v1222, %v1218
  %v1839 = vpack.c.b16 %v1223, %v1219
  %v1840 = vpack.c.b16 %v1228, %v1224
  %v1841 = vpack.c.b16 %v1229, %v1225
  %v1842 = vpack.c.b16 %v1230, %v1226
  %v1843 = vpack.c.b16 %v1231, %v1227
  %v1844 = vpack.c.b16 %v1236, %v1232
  %v1845 = vpack.c.b16 %v1237, %v1233
  %v1846 = vpack.c.b16 %v1238, %v1234
  %v1847 = vpack.c.b16 %v1239, %v1235
  %v1848 = vpack.c.b16 %v1244, %v1240
  %v1849 = vpack.c.b16 %v1245, %v1241
  %v1850 = vpack.c.b16 %v1246, %v1242
  %v1851 = vpack.c.b16 %v1247, %v1243
  %v1852 = vpack.c.b16 %v1252, %v1248
  %v1853 = vpack.c.b16 %v1253, %v1249
  %v1854 = vpack.c.b16 %v1254, %v1250
  %v1855 = vpack.c.b16 %v1255, %v1251
  %v1856 = vpack.c.b16 %v1260, %v1256
  %v1857 = vpack.c.b16 %v1261, %v1257
  %v1858 = vpack.c.b16 %v1262, %v1258
  %v1859 = vpack.c.b16 %v1263, %v1259
  %v1860 = vpack.c.b16 %v1268, %v1264
  %v1861 = vpack.c.b16 %v1269, %v1265
  %v1862 = vpack.c.b16 %v1270, %v1266
  %v1863 = vpack.c.b16 %v1271, %v1267
  %v1864 = vpack.c.b16 %v1276, %v1272
  %v1865 = vpack.c.b16 %v1277, %v1273
  %v1866 = vpack.c.b16 %v1278, %v1274
  %v1867 = vpack.c.b16 %v1279, %v1275
  %v1868 = vpack.c.b16 %v1284, %v1280
  %v1869 = vpack.c.b16 %v1285, %v1281
  %v1870 = vpack.c.b16 %v1286, %v1282
  %v1871 = vpack.c.b16 %v1287, %v1283
  %v1872 = vpack.c.b16 %v1292, %v1288
  %v1873 = vpack.c.b16 %v1293, %v1289
  %v1874 = vpack.c.b16 %v1294, %v1290
  %v1875 = vpack.c.b16 %v1295, %v1291
  %v1876 = vpack.c.b16 %v1300, %v1296
  %v1877 = vpack.c.b16 %v1301, %v1297
  %v1878 = vpack.c.b16 %v1302, %v1298
  %v1879 = vpack.c.b16 %v1303, %v1299
  %v1880 = vpack.c.b16 %v1308, %v1304
  %v1881 = vpack.c.b16 %v1309, %v1305
  %v1882 = vpack.c.b16 %v1310, %v1306
  %v1883 = vpack.c.b16 %v1311, %v1307
  %v1884 = vpack.c.b16 %v1316, %v1312
  %v1885 = vpack.c.b16 %v1317, %v1313
  %v1886 = vpack.c.b16 %v1318, %v1314
  %v1887 = vpack.c.b16 %v1319, %v1315
  %v1888 = vpack.c.b16 %v1324, %v1320
  %v1889 = vpack.c.b16 %v1325, %v1321
  %v1890 = vpack.c.b16 %v1326, %v1322
  %v1891 = vpack.c.b16 %v1327, %v1323
  %v1892 = vpack.c.b16 %v1332, %v1328
  %v1893 = vpack.c.b16 %v1333, %v1329
  %v1894 = vpack.c.b16 %v1334, %v1330
  %v1895 = vpack.c.b16 %v1335, %v1331
  %v1896 = vpack.c.b16 %v1340, %v1336
  %v1897 = vpack.c.b16 %v1341, %v1337
  %v1898 = vpack.c.b16 %v1342, %v1338
  %v1899 = vpack.c.b16 %v1343, %v1339
  %v1900 = vpack.c.b16 %v1348, %v1344
  %v1901 = vpack.c.b16 %v1349, %v1345
  %v1902 = vpack.c.b16 %v1350, %v1346
  %v1903 = vpack.c.b16 %v1351, %v1347
  %v1904 = vpack.c.b16 %v1356, %v1352
  %v1905 = vpack.c.b16 %v1357, %v1353
  %v1906 = vpack.c.b16 %v1358, %v1354
  %v1907 = vpack.c.b16 %v1359, %v1355
  %v1908 = vpack.c.b16 %v1364, %v1360
  %v1909 = vpack.c.b16 %v1365, %v1361
  %v1910 = vpack.c.b16 %v1366, %v1362
  %v1911 = vpack.c.b16 %v1367, %v1363
  %v1912 = vpack.c.b16 %v1372, %v1368
  %v1913 = vpack.c.b16 %v1373, %v1369
  %v1914 = vpack.c.b16 %v1374, %v1370
  %v1915 = vpack.c.b16 %v1375, %v1371
  %v1916 = vpack.c.b16 %v1380, %v1376
  %v1917 = vpack.c.b16 %v1381, %v1377
  %v1918 = vpack.c.b16 %v1382, %v1378
  %v1919 = vpack.c.b16 %v1383, %v1379
  %v1920 = vpack.c.b16 %v1388, %v1384
  %v1921 = vpack.c.b16 %v1389, %v1385
  %v1922 = vpack.c.b16 %v1390, %v1386
  %v1923 = vpack.c.b16 %v1391, %v1387
  %v1924 = vpack.c.b16 %v1396, %v1392
  %v1925 = vpack.c.b16 %v1397, %v1393
  %v1926 = vpack.c.b16 %v1398, %v1394
  %v1927 = vpack.c.b16 %v1399, %v1395
  %v1928 = vpack.c.b16 %v1404, %v1400
  %v1929 = vpack.c.b16 %v1405, %v1401
  %v1930 = vpack.c.b16 %v1406, %v1402
  %v1931 = vpack.c.b16 %v1407, %v1403
  %v1932 = vpack.c.b16 %v1412, %v1408
  %v1933 = vpack.c.b16 %v1413, %v1409
  %v1934 = vpack.c.b16 %v1414, %v1410
  %v1935 = vpack.c.b16 %v1415, %v1411
  %v1936 = vpack.c.b16 %v1420, %v1416
  %v1937 = vpack.c.b16 %v1421, %v1417
  %v1938 = vpack.c.b16 %v1422, %v1418
  %v1939 = vpack.c.b16 %v1423, %v1419
  %v1940 = vpack.c.b16 %v1428, %v1424
  %v1941 = vpack.c.b16 %v1429, %v1425
  %v1942 = vpack.c.b16 %v1430, %v1426
  %v1943 = vpack.c.b16 %v1431, %v1427
  %v1944 = vpack.c.b16 %v1436, %v1432
  %v1945 = vpack.c.b16 %v1437, %v1433
  %v1946 = vpack.c.b16 %v1438, %v1434
  %v1947 = vpack.c.b16 %v1439, %v1435
  %v1948 = vpack.c.b16 %v1444, %v1440
  %v1949 = vpack.c.b16 %v1445, %v1441
  %v1950 = vpack.c.b16 %v1446, %v1442
  %v1951 = vpack.c.b16 %v1447, %v1443
  %v1952 = vpack.c.b16 %v1452, %v1448
  %v1953 = vpack.c.b16 %v1453, %v1449
  %v1954 = vpack.c.b16 %v1454, %v1450
  %v1955 = vpack.c.b16 %v1455, %v1451
  %v1956 = vpack.c.b16 %v1460, %v1456
  %v1957 = vpack.c.b16 %v1461, %v1457
  %v1958 = vpack.c.b16 %v1462, %v1458
  %v1959 = vpack.c.b16 %v1463, %v1459
  %v1960 = vpack.c.b16 %v1468, %v1464
  %v1961 = vpack.c.b16 %v1469, %v1465
  %v1962 = vpack.c.b16 %v1470, %v1466
  %v1963 = vpack.c.b16 %v1471, %v1467
  %v1964 = vpack.c.b16 %v1476, %v1472
  %v1965 = vpack.c.b16 %v1477, %v1473
  %v1966 = vpack.c.b16 %v1478, %v1474
  %v1967 = vpack.c.b16 %v1479, %v1475
  %v1968 = vpack.c.b16 %v1484, %v1480
  %v1969 = vpack.c.b16 %v1485, %v1481
  %v1970 = vpack.c.b16 %v1486, %v1482
  %v1971 = vpack.c.b16 %v1487, %v1483
  %v1972 = vpack.c.b16 %v1492, %v1488
  %v1973 = vpack.c.b16 %v1493, %v1489
  %v1974 = vpack.c.b16 %v1494, %v1490
  %v1975 = vpack.c.b16 %v1495, %v1491
  %v1976 = vpack.c.b16 %v1500, %v1496
  %v1977 = vpack.c.b16 %v1501, %v1497
  %v1978 = vpack.c.b16 %v1502, %v1498
  %v1979 = vpack.c.b16 %v1503, %v1499
  %v1980 = vpack.c.b16 %v1508, %v1504
  %v1981 = vpack.c.b16 %v1509, %v1505
  %v1982 = vpack.c.b16 %v1510, %v1506
  %v1983 = vpack.c.b16 %v1511, %v1507
  %v1984 = vpack.c.b16 %v1516, %v1512
  %v1985 = vpack.c.b16 %v1517, %v1513
  %v1986 = vpack.c.b16 %v1518, %v1514
  %v1987 = vpack.c.b16 %v1519, %v1515
  %v1988 = vpack.c.b16 %v1524, %v1520
  %v1989 = vpack.c.b16 %v1525, %v1521
  %v1990 = vpack.c.b16 %v1526, %v1522
  %v1991 = vpack.c.b16 %v1527, %v1523
  %v1992 = vpack.c.b16 %v1532, %v1528
  %v1993 = vpack.c.b16 %v1533, %v1529
  %v1994 = vpack.c.b16 %v1534, %v1530
  %v1995 = vpack.c.b16 %v1535, %v1531
  %v1996 = vpack.c.b16 %v1540, %v1536
  %v1997 = vpack.c.b16 %v1541, %v1537
  %v1998 = vpack.c.b16 %v1542, %v1538
  %v1999 = vpack.c.b16 %v1543, %v1539
  %v2000 = vpack.c.b16 %v1548, %v1544
  %v2001 = vpack.c.b16 %v1549, %v1545
  %v2002 = vpack.c.b16 %v1550, %v1546
  %v2003 = vpack.c.b16 %v1551, %v1547
  %v2004 = vpack.c.b16 %v1556, %v1552
  %v2005 = vpack.c.b16 %v1557, %v1553
  %v2006 = vpack.c.b16 %v1558, %v1554
  %v2007 = vpack.c.b16 %v1559, %v1555
  %v2008 = vpack.c.b16 %v1564, %v1560
  %v2009 = vpack.c.b16 %v1565, %v1561
  %v2010 = vpack.c.b16 %v1566, %v1562
  %v2011 = vpack.c.b16 %v1567, %v1563
  %v2012 = vpack.c.b16 %v1572, %v1568
  %v2013 = vpack.c.b16 %v1573, %v1569
  %v2014 = vpack.c.b16 %v1574, %v1570
  %v2015 = vpack.c.b16 %v1575, %v1571
  %v2016 = vpack.c.b16 %v1580, %v1576
  %v2017 = vpack.c.b16 %v1581, %v1577
  %v2018 = vpack.c.b16 %v1582, %v1578
  %v2019 = vpack.c.b16 %v1583, %v1579
  %v2020 = vpack.c.b16 %v1588, %v1584
  %v2021 = vpack.c.b16 %v1589, %v1585
  %v2022 = vpack.c.b16 %v1590, %v1586
  %v2023 = vpack.c.b16 %v1591, %v1587
  %v2024 = vpack.c.b16 %v1596, %v1592
  %v2025 = vpack.c.b16 %v1597, %v1593
  %v2026 = vpack.c.b16 %v1598, %v1594
  %v2027 = vpack.c.b16 %v1599, %v1595
  %v2028 = vpack.c.b16 %v1604, %v1600
  %v2029 = vpack.c.b16 %v1605, %v1601
  %v2030 = vpack.c.b16 %v1606, %v1602
  %v2031 = vpack.c.b16 %v1607, %v1603
  %v2032 = vpack.c.b16 %v1612, %v1608
  %v2033 = vpack.c.b16 %v1613, %v1609
  %v2034 = vpack.c.b16 %v1614, %v1610
  %v2035 = vpack.c.b16 %v1615, %v1611
  %v2036 = vpack.c.b16 %v1620, %v1616
  %v2037 = vpack.c.b16 %v1621, %v1617
  %v2038 = vpack.c.b16 %v1622, %v1618
  %v2039 = vpack.c.b16 %v1623, %v1619
  %v2040 = vpack.c.b16 %v1628, %v1624
  %v2041 = vpack.c.b16 %v1629, %v1625
  %v2042 = vpack.c.b16 %v1630, %v1626
  %v2043 = vpack.c.b16 %v1631, %v1627
  %v2044 = vpack.c.b16 %v1636, %v1632
  %v2045 = vpack.c.b16 %v1637, %v1633
  %v2046 = vpack.c.b16 %v1638, %v1634
  %v2047 = vpack.c.b16 %v1639, %v1635
  %v2048 = vpack.c.b16 %v1644, %v1640
  %v2049 = vpack.c.b16 %v1645, %v1641
  %v2050 = vpack.c.b16 %v1646, %v1642
  %v2051 = vpack.c.b16 %v1647, %v1643
  %v2052 = vpack.c.b16 %v1652, %v1648
  %v2053 = vpack.c.b16 %v1653, %v1649
  %v2054 = vpack.c.b16 %v1654, %v1650
  %v2055 = vpack.c.b16 %v1655, %v1651
  %v2056 = vpack.c.b16 %v1660, %v1656
  %v2057 = vpack.c.b16 %v1661, %v1657
  %v2058 = vpack.c.b16 %v1662, %v1658
  %v2059 = vpack.c.b16 %v1663, %v1659
  %v2060 = vpack.c.b16 %v1668, %v1664
  %v2061 = vpack.c.b16 %v1669, %v1665
  %v2062 = vpack.c.b16 %v1670, %v1666
  %v2063 = vpack.c.b16 %v1671, %v1667
  %vm2456 = vcmask 261120
  %v2458 = vsel %vm2456, %v483, 0
  %2460 = vmatpush.bf16.msra.mxu0 %v1700
  %2461 = vmatpush.bf16.msra.mxu0 %v1696
  %2462 = vmatpush.bf16.msra.mxu0 %v1692
  %2463 = vmatpush.bf16.msra.mxu0 %v1688
  %2464 = vmatpush.bf16.msra.mxu0 %v1684
  %2465 = vmatpush.bf16.msra.mxu0 %v1680
  %2466 = vmatpush.bf16.msra.mxu0 %v1676
  %2467 = vmatpush.bf16.msra.mxu0 %v1672
  %2468 = vmatmul.bf16.gmra.mxu0 %v471
  %v2469 = vpop.f32.mrf.mxu0
  %v2470 = vadd.f32 %v423, %v2469
  %v2471 = vpop.f32.mrf.mxu0
  %v2472 = vadd.f32 %v423, %v2471
  %2473 = vdwg.mxu0
  %2474 = vmatpush.bf16.msra.mxu0 %v1732
  %2475 = vmatpush.bf16.msra.mxu0 %v1728
  %2476 = vmatpush.bf16.msra.mxu0 %v1724
  %2477 = vmatpush.bf16.msra.mxu0 %v1720
  %2478 = vmatpush.bf16.msra.mxu0 %v1716
  %2479 = vmatpush.bf16.msra.mxu0 %v1712
  %2480 = vmatpush.bf16.msra.mxu0 %v1708
  %2481 = vmatpush.bf16.msra.mxu0 %v1704
  %2482 = vmatmul.bf16.gmra.mxu0 %v472
  %v2483 = vpop.f32.mrf.mxu0
  %v2484 = vadd.f32 %v2470, %v2483
  %v2485 = vpop.f32.mrf.mxu0
  %v2486 = vadd.f32 %v2472, %v2485
  %2487 = vdwg.mxu0
  %2488 = vmatpush.bf16.msra.mxu0 %v1764
  %2489 = vmatpush.bf16.msra.mxu0 %v1760
  %2490 = vmatpush.bf16.msra.mxu0 %v1756
  %2491 = vmatpush.bf16.msra.mxu0 %v1752
  %2492 = vmatpush.bf16.msra.mxu0 %v1748
  %2493 = vmatpush.bf16.msra.mxu0 %v1744
  %2494 = vmatpush.bf16.msra.mxu0 %v1740
  %2495 = vmatpush.bf16.msra.mxu0 %v1736
  %2496 = vmatmul.bf16.gmra.mxu0 %v473
  %v2497 = vpop.f32.mrf.mxu0
  %v2498 = vadd.f32 %v2484, %v2497
  %v2499 = vpop.f32.mrf.mxu0
  %v2500 = vadd.f32 %v2486, %v2499
  %2501 = vdwg.mxu0
  %2502 = vmatpush.bf16.msra.mxu0 %v1796
  %2503 = vmatpush.bf16.msra.mxu0 %v1792
  %2504 = vmatpush.bf16.msra.mxu0 %v1788
  %2505 = vmatpush.bf16.msra.mxu0 %v1784
  %2506 = vmatpush.bf16.msra.mxu0 %v1780
  %2507 = vmatpush.bf16.msra.mxu0 %v1776
  %2508 = vmatpush.bf16.msra.mxu0 %v1772
  %2509 = vmatpush.bf16.msra.mxu0 %v1768
  %2510 = vmatmul.bf16.gmra.mxu0 %v474
  %v2511 = vpop.f32.mrf.mxu0
  %v2512 = vadd.f32 %v2498, %v2511
  %v2513 = vpop.f32.mrf.mxu0
  %v2514 = vadd.f32 %v2500, %v2513
  %2515 = vdwg.mxu0
  %2516 = vmatpush.bf16.msra.mxu0 %v1828
  %2517 = vmatpush.bf16.msra.mxu0 %v1824
  %2518 = vmatpush.bf16.msra.mxu0 %v1820
  %2519 = vmatpush.bf16.msra.mxu0 %v1816
  %2520 = vmatpush.bf16.msra.mxu0 %v1812
  %2521 = vmatpush.bf16.msra.mxu0 %v1808
  %2522 = vmatpush.bf16.msra.mxu0 %v1804
  %2523 = vmatpush.bf16.msra.mxu0 %v1800
  %2524 = vmatmul.bf16.gmra.mxu0 %v475
  %v2525 = vpop.f32.mrf.mxu0
  %v2526 = vadd.f32 %v2512, %v2525
  %v2527 = vpop.f32.mrf.mxu0
  %v2528 = vadd.f32 %v2514, %v2527
  %2529 = vdwg.mxu0
  %2530 = vmatpush.bf16.msra.mxu0 %v1860
  %2531 = vmatpush.bf16.msra.mxu0 %v1856
  %2532 = vmatpush.bf16.msra.mxu0 %v1852
  %2533 = vmatpush.bf16.msra.mxu0 %v1848
  %2534 = vmatpush.bf16.msra.mxu0 %v1844
  %2535 = vmatpush.bf16.msra.mxu0 %v1840
  %2536 = vmatpush.bf16.msra.mxu0 %v1836
  %2537 = vmatpush.bf16.msra.mxu0 %v1832
  %2538 = vmatmul.bf16.gmra.mxu0 %v476
  %v2539 = vpop.f32.mrf.mxu0
  %v2540 = vadd.f32 %v2526, %v2539
  %v2541 = vpop.f32.mrf.mxu0
  %v2542 = vadd.f32 %v2528, %v2541
  %2543 = vdwg.mxu0
  %2544 = vmatpush.bf16.msra.mxu0 %v1892
  %2545 = vmatpush.bf16.msra.mxu0 %v1888
  %2546 = vmatpush.bf16.msra.mxu0 %v1884
  %2547 = vmatpush.bf16.msra.mxu0 %v1880
  %2548 = vmatpush.bf16.msra.mxu0 %v1876
  %2549 = vmatpush.bf16.msra.mxu0 %v1872
  %2550 = vmatpush.bf16.msra.mxu0 %v1868
  %2551 = vmatpush.bf16.msra.mxu0 %v1864
  %2552 = vmatmul.bf16.gmra.mxu0 %v477
  %v2553 = vpop.f32.mrf.mxu0
  %v2554 = vadd.f32 %v2540, %v2553
  %v2555 = vpop.f32.mrf.mxu0
  %v2556 = vadd.f32 %v2542, %v2555
  %2557 = vdwg.mxu0
  %2558 = vmatpush.bf16.msra.mxu0 %v1924
  %2559 = vmatpush.bf16.msra.mxu0 %v1920
  %2560 = vmatpush.bf16.msra.mxu0 %v1916
  %2561 = vmatpush.bf16.msra.mxu0 %v1912
  %2562 = vmatpush.bf16.msra.mxu0 %v1908
  %2563 = vmatpush.bf16.msra.mxu0 %v1904
  %2564 = vmatpush.bf16.msra.mxu0 %v1900
  %2565 = vmatpush.bf16.msra.mxu0 %v1896
  %2566 = vmatmul.bf16.gmra.mxu0 %v478
  %v2567 = vpop.f32.mrf.mxu0
  %v2568 = vadd.f32 %v2554, %v2567
  %v2569 = vpop.f32.mrf.mxu0
  %v2570 = vadd.f32 %v2556, %v2569
  %2571 = vdwg.mxu0
  %2572 = vmatpush.bf16.msra.mxu0 %v1956
  %2573 = vmatpush.bf16.msra.mxu0 %v1952
  %2574 = vmatpush.bf16.msra.mxu0 %v1948
  %2575 = vmatpush.bf16.msra.mxu0 %v1944
  %2576 = vmatpush.bf16.msra.mxu0 %v1940
  %2577 = vmatpush.bf16.msra.mxu0 %v1936
  %2578 = vmatpush.bf16.msra.mxu0 %v1932
  %2579 = vmatpush.bf16.msra.mxu0 %v1928
  %2580 = vmatmul.bf16.gmra.mxu0 %v479
  %v2581 = vpop.f32.mrf.mxu0
  %v2582 = vadd.f32 %v2568, %v2581
  %v2583 = vpop.f32.mrf.mxu0
  %v2584 = vadd.f32 %v2570, %v2583
  %2585 = vdwg.mxu0
  %2586 = vmatpush.bf16.msra.mxu0 %v1988
  %2587 = vmatpush.bf16.msra.mxu0 %v1984
  %2588 = vmatpush.bf16.msra.mxu0 %v1980
  %2589 = vmatpush.bf16.msra.mxu0 %v1976
  %2590 = vmatpush.bf16.msra.mxu0 %v1972
  %2591 = vmatpush.bf16.msra.mxu0 %v1968
  %2592 = vmatpush.bf16.msra.mxu0 %v1964
  %2593 = vmatpush.bf16.msra.mxu0 %v1960
  %2594 = vmatmul.bf16.gmra.mxu0 %v480
  %v2595 = vpop.f32.mrf.mxu0
  %v2596 = vadd.f32 %v2582, %v2595
  %v2597 = vpop.f32.mrf.mxu0
  %v2598 = vadd.f32 %v2584, %v2597
  %2599 = vdwg.mxu0
  %2600 = vmatpush.bf16.msra.mxu0 %v2020
  %2601 = vmatpush.bf16.msra.mxu0 %v2016
  %2602 = vmatpush.bf16.msra.mxu0 %v2012
  %2603 = vmatpush.bf16.msra.mxu0 %v2008
  %2604 = vmatpush.bf16.msra.mxu0 %v2004
  %2605 = vmatpush.bf16.msra.mxu0 %v2000
  %2606 = vmatpush.bf16.msra.mxu0 %v1996
  %2607 = vmatpush.bf16.msra.mxu0 %v1992
  %2608 = vmatmul.bf16.gmra.mxu0 %v481
  %v2609 = vpop.f32.mrf.mxu0
  %v2610 = vadd.f32 %v2596, %v2609
  %v2611 = vpop.f32.mrf.mxu0
  %v2612 = vadd.f32 %v2598, %v2611
  %2613 = vdwg.mxu0
  %2614 = vmatpush.bf16.msra.mxu0 %v2052
  %2615 = vmatpush.bf16.msra.mxu0 %v2048
  %2616 = vmatpush.bf16.msra.mxu0 %v2044
  %2617 = vmatpush.bf16.msra.mxu0 %v2040
  %2618 = vmatpush.bf16.msra.mxu0 %v2036
  %2619 = vmatpush.bf16.msra.mxu0 %v2032
  %2620 = vmatpush.bf16.msra.mxu0 %v2028
  %2621 = vmatpush.bf16.msra.mxu0 %v2024
  %2622 = vmatmul.bf16.gmra.mxu0 %v482
  %v2623 = vpop.f32.mrf.mxu0
  %v2624 = vadd.f32 %v2610, %v2623
  %v2625 = vpop.f32.mrf.mxu0
  %v2626 = vadd.f32 %v2612, %v2625
  %2627 = vdwg.mxu0
  %2628 = vmatpush.bf16.msra.mxu0 0
  %2629 = vmatpush.bf16.msra.mxu0 0
  %2630 = vmatpush.bf16.msra.mxu0 0
  %2631 = vmatpush.bf16.msra.mxu0 0
  %2632 = vmatpush.bf16.msra.mxu0 0
  %2633 = vmatpush.bf16.msra.mxu0 0
  %2634 = vmatpush.bf16.msra.mxu0 %v2060
  %2635 = vmatpush.bf16.msra.mxu0 %v2056
  %2636 = vmatmul.bf16.gmra.mxu0 %v2458
  %v2637 = vpop.f32.mrf.mxu0
  %v2638 = vadd.f32 %v2624, %v2637
  %v2639 = vpop.f32.mrf.mxu0
  %v2640 = vadd.f32 %v2626, %v2639
  %2641 = vdwg.mxu0
  %2642 = vmatpush.bf16.msra.mxu0 %v1701
  %2643 = vmatpush.bf16.msra.mxu0 %v1697
  %2644 = vmatpush.bf16.msra.mxu0 %v1693
  %2645 = vmatpush.bf16.msra.mxu0 %v1689
  %2646 = vmatpush.bf16.msra.mxu0 %v1685
  %2647 = vmatpush.bf16.msra.mxu0 %v1681
  %2648 = vmatpush.bf16.msra.mxu0 %v1677
  %2649 = vmatpush.bf16.msra.mxu0 %v1673
  %2650 = vmatmul.bf16.gmra.mxu0 %v471
  %v2651 = vpop.f32.mrf.mxu0
  %v2652 = vadd.f32 %v424, %v2651
  %v2653 = vpop.f32.mrf.mxu0
  %v2654 = vadd.f32 %v424, %v2653
  %2655 = vdwg.mxu0
  %2656 = vmatpush.bf16.msra.mxu0 %v1733
  %2657 = vmatpush.bf16.msra.mxu0 %v1729
  %2658 = vmatpush.bf16.msra.mxu0 %v1725
  %2659 = vmatpush.bf16.msra.mxu0 %v1721
  %2660 = vmatpush.bf16.msra.mxu0 %v1717
  %2661 = vmatpush.bf16.msra.mxu0 %v1713
  %2662 = vmatpush.bf16.msra.mxu0 %v1709
  %2663 = vmatpush.bf16.msra.mxu0 %v1705
  %2664 = vmatmul.bf16.gmra.mxu0 %v472
  %v2665 = vpop.f32.mrf.mxu0
  %v2666 = vadd.f32 %v2652, %v2665
  %v2667 = vpop.f32.mrf.mxu0
  %v2668 = vadd.f32 %v2654, %v2667
  %2669 = vdwg.mxu0
  %2670 = vmatpush.bf16.msra.mxu0 %v1765
  %2671 = vmatpush.bf16.msra.mxu0 %v1761
  %2672 = vmatpush.bf16.msra.mxu0 %v1757
  %2673 = vmatpush.bf16.msra.mxu0 %v1753
  %2674 = vmatpush.bf16.msra.mxu0 %v1749
  %2675 = vmatpush.bf16.msra.mxu0 %v1745
  %2676 = vmatpush.bf16.msra.mxu0 %v1741
  %2677 = vmatpush.bf16.msra.mxu0 %v1737
  %2678 = vmatmul.bf16.gmra.mxu0 %v473
  %v2679 = vpop.f32.mrf.mxu0
  %v2680 = vadd.f32 %v2666, %v2679
  %v2681 = vpop.f32.mrf.mxu0
  %v2682 = vadd.f32 %v2668, %v2681
  %2683 = vdwg.mxu0
  %2684 = vmatpush.bf16.msra.mxu0 %v1797
  %2685 = vmatpush.bf16.msra.mxu0 %v1793
  %2686 = vmatpush.bf16.msra.mxu0 %v1789
  %2687 = vmatpush.bf16.msra.mxu0 %v1785
  %2688 = vmatpush.bf16.msra.mxu0 %v1781
  %2689 = vmatpush.bf16.msra.mxu0 %v1777
  %2690 = vmatpush.bf16.msra.mxu0 %v1773
  %2691 = vmatpush.bf16.msra.mxu0 %v1769
  %2692 = vmatmul.bf16.gmra.mxu0 %v474
  %v2693 = vpop.f32.mrf.mxu0
  %v2694 = vadd.f32 %v2680, %v2693
  %v2695 = vpop.f32.mrf.mxu0
  %v2696 = vadd.f32 %v2682, %v2695
  %2697 = vdwg.mxu0
  %2698 = vmatpush.bf16.msra.mxu0 %v1829
  %2699 = vmatpush.bf16.msra.mxu0 %v1825
  %2700 = vmatpush.bf16.msra.mxu0 %v1821
  %2701 = vmatpush.bf16.msra.mxu0 %v1817
  %2702 = vmatpush.bf16.msra.mxu0 %v1813
  %2703 = vmatpush.bf16.msra.mxu0 %v1809
  %2704 = vmatpush.bf16.msra.mxu0 %v1805
  %2705 = vmatpush.bf16.msra.mxu0 %v1801
  %2706 = vmatmul.bf16.gmra.mxu0 %v475
  %v2707 = vpop.f32.mrf.mxu0
  %v2708 = vadd.f32 %v2694, %v2707
  %v2709 = vpop.f32.mrf.mxu0
  %v2710 = vadd.f32 %v2696, %v2709
  %2711 = vdwg.mxu0
  %2712 = vmatpush.bf16.msra.mxu0 %v1861
  %2713 = vmatpush.bf16.msra.mxu0 %v1857
  %2714 = vmatpush.bf16.msra.mxu0 %v1853
  %2715 = vmatpush.bf16.msra.mxu0 %v1849
  %2716 = vmatpush.bf16.msra.mxu0 %v1845
  %2717 = vmatpush.bf16.msra.mxu0 %v1841
  %2718 = vmatpush.bf16.msra.mxu0 %v1837
  %2719 = vmatpush.bf16.msra.mxu0 %v1833
  %2720 = vmatmul.bf16.gmra.mxu0 %v476
  %v2721 = vpop.f32.mrf.mxu0
  %v2722 = vadd.f32 %v2708, %v2721
  %v2723 = vpop.f32.mrf.mxu0
  %v2724 = vadd.f32 %v2710, %v2723
  %2725 = vdwg.mxu0
  %2726 = vmatpush.bf16.msra.mxu0 %v1893
  %2727 = vmatpush.bf16.msra.mxu0 %v1889
  %2728 = vmatpush.bf16.msra.mxu0 %v1885
  %2729 = vmatpush.bf16.msra.mxu0 %v1881
  %2730 = vmatpush.bf16.msra.mxu0 %v1877
  %2731 = vmatpush.bf16.msra.mxu0 %v1873
  %2732 = vmatpush.bf16.msra.mxu0 %v1869
  %2733 = vmatpush.bf16.msra.mxu0 %v1865
  %2734 = vmatmul.bf16.gmra.mxu0 %v477
  %v2735 = vpop.f32.mrf.mxu0
  %v2736 = vadd.f32 %v2722, %v2735
  %v2737 = vpop.f32.mrf.mxu0
  %v2738 = vadd.f32 %v2724, %v2737
  %2739 = vdwg.mxu0
  %2740 = vmatpush.bf16.msra.mxu0 %v1925
  %2741 = vmatpush.bf16.msra.mxu0 %v1921
  %2742 = vmatpush.bf16.msra.mxu0 %v1917
  %2743 = vmatpush.bf16.msra.mxu0 %v1913
  %2744 = vmatpush.bf16.msra.mxu0 %v1909
  %2745 = vmatpush.bf16.msra.mxu0 %v1905
  %2746 = vmatpush.bf16.msra.mxu0 %v1901
  %2747 = vmatpush.bf16.msra.mxu0 %v1897
  %2748 = vmatmul.bf16.gmra.mxu0 %v478
  %v2749 = vpop.f32.mrf.mxu0
  %v2750 = vadd.f32 %v2736, %v2749
  %v2751 = vpop.f32.mrf.mxu0
  %v2752 = vadd.f32 %v2738, %v2751
  %2753 = vdwg.mxu0
  %2754 = vmatpush.bf16.msra.mxu0 %v1957
  %2755 = vmatpush.bf16.msra.mxu0 %v1953
  %2756 = vmatpush.bf16.msra.mxu0 %v1949
  %2757 = vmatpush.bf16.msra.mxu0 %v1945
  %2758 = vmatpush.bf16.msra.mxu0 %v1941
  %2759 = vmatpush.bf16.msra.mxu0 %v1937
  %2760 = vmatpush.bf16.msra.mxu0 %v1933
  %2761 = vmatpush.bf16.msra.mxu0 %v1929
  %2762 = vmatmul.bf16.gmra.mxu0 %v479
  %v2763 = vpop.f32.mrf.mxu0
  %v2764 = vadd.f32 %v2750, %v2763
  %v2765 = vpop.f32.mrf.mxu0
  %v2766 = vadd.f32 %v2752, %v2765
  %2767 = vdwg.mxu0
  %2768 = vmatpush.bf16.msra.mxu0 %v1989
  %2769 = vmatpush.bf16.msra.mxu0 %v1985
  %2770 = vmatpush.bf16.msra.mxu0 %v1981
  %2771 = vmatpush.bf16.msra.mxu0 %v1977
  %2772 = vmatpush.bf16.msra.mxu0 %v1973
  %2773 = vmatpush.bf16.msra.mxu0 %v1969
  %2774 = vmatpush.bf16.msra.mxu0 %v1965
  %2775 = vmatpush.bf16.msra.mxu0 %v1961
  %2776 = vmatmul.bf16.gmra.mxu0 %v480
  %v2777 = vpop.f32.mrf.mxu0
  %v2778 = vadd.f32 %v2764, %v2777
  %v2779 = vpop.f32.mrf.mxu0
  %v2780 = vadd.f32 %v2766, %v2779
  %2781 = vdwg.mxu0
  %2782 = vmatpush.bf16.msra.mxu0 %v2021
  %2783 = vmatpush.bf16.msra.mxu0 %v2017
  %2784 = vmatpush.bf16.msra.mxu0 %v2013
  %2785 = vmatpush.bf16.msra.mxu0 %v2009
  %2786 = vmatpush.bf16.msra.mxu0 %v2005
  %2787 = vmatpush.bf16.msra.mxu0 %v2001
  %2788 = vmatpush.bf16.msra.mxu0 %v1997
  %2789 = vmatpush.bf16.msra.mxu0 %v1993
  %2790 = vmatmul.bf16.gmra.mxu0 %v481
  %v2791 = vpop.f32.mrf.mxu0
  %v2792 = vadd.f32 %v2778, %v2791
  %v2793 = vpop.f32.mrf.mxu0
  %v2794 = vadd.f32 %v2780, %v2793
  %2795 = vdwg.mxu0
  %2796 = vmatpush.bf16.msra.mxu0 %v2053
  %2797 = vmatpush.bf16.msra.mxu0 %v2049
  %2798 = vmatpush.bf16.msra.mxu0 %v2045
  %2799 = vmatpush.bf16.msra.mxu0 %v2041
  %2800 = vmatpush.bf16.msra.mxu0 %v2037
  %2801 = vmatpush.bf16.msra.mxu0 %v2033
  %2802 = vmatpush.bf16.msra.mxu0 %v2029
  %2803 = vmatpush.bf16.msra.mxu0 %v2025
  %2804 = vmatmul.bf16.gmra.mxu0 %v482
  %v2805 = vpop.f32.mrf.mxu0
  %v2806 = vadd.f32 %v2792, %v2805
  %v2807 = vpop.f32.mrf.mxu0
  %v2808 = vadd.f32 %v2794, %v2807
  %2809 = vdwg.mxu0
  %2810 = vmatpush.bf16.msra.mxu0 0
  %2811 = vmatpush.bf16.msra.mxu0 0
  %2812 = vmatpush.bf16.msra.mxu0 0
  %2813 = vmatpush.bf16.msra.mxu0 0
  %2814 = vmatpush.bf16.msra.mxu0 0
  %2815 = vmatpush.bf16.msra.mxu0 0
  %2816 = vmatpush.bf16.msra.mxu0 %v2061
  %2817 = vmatpush.bf16.msra.mxu0 %v2057
  %2818 = vmatmul.bf16.gmra.mxu0 %v2458
  %v2819 = vpop.f32.mrf.mxu0
  %v2820 = vadd.f32 %v2806, %v2819
  %v2821 = vpop.f32.mrf.mxu0
  %v2822 = vadd.f32 %v2808, %v2821
  %2823 = vdwg.mxu0
  %2824 = vmatpush.bf16.msra.mxu0 %v1702
  %2825 = vmatpush.bf16.msra.mxu0 %v1698
  %2826 = vmatpush.bf16.msra.mxu0 %v1694
  %2827 = vmatpush.bf16.msra.mxu0 %v1690
  %2828 = vmatpush.bf16.msra.mxu0 %v1686
  %2829 = vmatpush.bf16.msra.mxu0 %v1682
  %2830 = vmatpush.bf16.msra.mxu0 %v1678
  %2831 = vmatpush.bf16.msra.mxu0 %v1674
  %2832 = vmatmul.bf16.gmra.mxu0 %v471
  %v2833 = vpop.f32.mrf.mxu0
  %v2834 = vadd.f32 %v425, %v2833
  %v2835 = vpop.f32.mrf.mxu0
  %v2836 = vadd.f32 %v425, %v2835
  %2837 = vdwg.mxu0
  %2838 = vmatpush.bf16.msra.mxu0 %v1734
  %2839 = vmatpush.bf16.msra.mxu0 %v1730
  %2840 = vmatpush.bf16.msra.mxu0 %v1726
  %2841 = vmatpush.bf16.msra.mxu0 %v1722
  %2842 = vmatpush.bf16.msra.mxu0 %v1718
  %2843 = vmatpush.bf16.msra.mxu0 %v1714
  %2844 = vmatpush.bf16.msra.mxu0 %v1710
  %2845 = vmatpush.bf16.msra.mxu0 %v1706
  %2846 = vmatmul.bf16.gmra.mxu0 %v472
  %v2847 = vpop.f32.mrf.mxu0
  %v2848 = vadd.f32 %v2834, %v2847
  %v2849 = vpop.f32.mrf.mxu0
  %v2850 = vadd.f32 %v2836, %v2849
  %2851 = vdwg.mxu0
  %2852 = vmatpush.bf16.msra.mxu0 %v1766
  %2853 = vmatpush.bf16.msra.mxu0 %v1762
  %2854 = vmatpush.bf16.msra.mxu0 %v1758
  %2855 = vmatpush.bf16.msra.mxu0 %v1754
  %2856 = vmatpush.bf16.msra.mxu0 %v1750
  %2857 = vmatpush.bf16.msra.mxu0 %v1746
  %2858 = vmatpush.bf16.msra.mxu0 %v1742
  %2859 = vmatpush.bf16.msra.mxu0 %v1738
  %2860 = vmatmul.bf16.gmra.mxu0 %v473
  %v2861 = vpop.f32.mrf.mxu0
  %v2862 = vadd.f32 %v2848, %v2861
  %v2863 = vpop.f32.mrf.mxu0
  %v2864 = vadd.f32 %v2850, %v2863
  %2865 = vdwg.mxu0
  %2866 = vmatpush.bf16.msra.mxu0 %v1798
  %2867 = vmatpush.bf16.msra.mxu0 %v1794
  %2868 = vmatpush.bf16.msra.mxu0 %v1790
  %2869 = vmatpush.bf16.msra.mxu0 %v1786
  %2870 = vmatpush.bf16.msra.mxu0 %v1782
  %2871 = vmatpush.bf16.msra.mxu0 %v1778
  %2872 = vmatpush.bf16.msra.mxu0 %v1774
  %2873 = vmatpush.bf16.msra.mxu0 %v1770
  %2874 = vmatmul.bf16.gmra.mxu0 %v474
  %v2875 = vpop.f32.mrf.mxu0
  %v2876 = vadd.f32 %v2862, %v2875
  %v2877 = vpop.f32.mrf.mxu0
  %v2878 = vadd.f32 %v2864, %v2877
  %2879 = vdwg.mxu0
  %2880 = vmatpush.bf16.msra.mxu0 %v1830
  %2881 = vmatpush.bf16.msra.mxu0 %v1826
  %2882 = vmatpush.bf16.msra.mxu0 %v1822
  %2883 = vmatpush.bf16.msra.mxu0 %v1818
  %2884 = vmatpush.bf16.msra.mxu0 %v1814
  %2885 = vmatpush.bf16.msra.mxu0 %v1810
  %2886 = vmatpush.bf16.msra.mxu0 %v1806
  %2887 = vmatpush.bf16.msra.mxu0 %v1802
  %2888 = vmatmul.bf16.gmra.mxu0 %v475
  %v2889 = vpop.f32.mrf.mxu0
  %v2890 = vadd.f32 %v2876, %v2889
  %v2891 = vpop.f32.mrf.mxu0
  %v2892 = vadd.f32 %v2878, %v2891
  %2893 = vdwg.mxu0
  %2894 = vmatpush.bf16.msra.mxu0 %v1862
  %2895 = vmatpush.bf16.msra.mxu0 %v1858
  %2896 = vmatpush.bf16.msra.mxu0 %v1854
  %2897 = vmatpush.bf16.msra.mxu0 %v1850
  %2898 = vmatpush.bf16.msra.mxu0 %v1846
  %2899 = vmatpush.bf16.msra.mxu0 %v1842
  %2900 = vmatpush.bf16.msra.mxu0 %v1838
  %2901 = vmatpush.bf16.msra.mxu0 %v1834
  %2902 = vmatmul.bf16.gmra.mxu0 %v476
  %v2903 = vpop.f32.mrf.mxu0
  %v2904 = vadd.f32 %v2890, %v2903
  %v2905 = vpop.f32.mrf.mxu0
  %v2906 = vadd.f32 %v2892, %v2905
  %2907 = vdwg.mxu0
  %2908 = vmatpush.bf16.msra.mxu0 %v1894
  %2909 = vmatpush.bf16.msra.mxu0 %v1890
  %2910 = vmatpush.bf16.msra.mxu0 %v1886
  %2911 = vmatpush.bf16.msra.mxu0 %v1882
  %2912 = vmatpush.bf16.msra.mxu0 %v1878
  %2913 = vmatpush.bf16.msra.mxu0 %v1874
  %2914 = vmatpush.bf16.msra.mxu0 %v1870
  %2915 = vmatpush.bf16.msra.mxu0 %v1866
  %2916 = vmatmul.bf16.gmra.mxu0 %v477
  %v2917 = vpop.f32.mrf.mxu0
  %v2918 = vadd.f32 %v2904, %v2917
  %v2919 = vpop.f32.mrf.mxu0
  %v2920 = vadd.f32 %v2906, %v2919
  %2921 = vdwg.mxu0
  %2922 = vmatpush.bf16.msra.mxu0 %v1926
  %2923 = vmatpush.bf16.msra.mxu0 %v1922
  %2924 = vmatpush.bf16.msra.mxu0 %v1918
  %2925 = vmatpush.bf16.msra.mxu0 %v1914
  %2926 = vmatpush.bf16.msra.mxu0 %v1910
  %2927 = vmatpush.bf16.msra.mxu0 %v1906
  %2928 = vmatpush.bf16.msra.mxu0 %v1902
  %2929 = vmatpush.bf16.msra.mxu0 %v1898
  %2930 = vmatmul.bf16.gmra.mxu0 %v478
  %v2931 = vpop.f32.mrf.mxu0
  %v2932 = vadd.f32 %v2918, %v2931
  %v2933 = vpop.f32.mrf.mxu0
  %v2934 = vadd.f32 %v2920, %v2933
  %2935 = vdwg.mxu0
  %2936 = vmatpush.bf16.msra.mxu0 %v1958
  %2937 = vmatpush.bf16.msra.mxu0 %v1954
  %2938 = vmatpush.bf16.msra.mxu0 %v1950
  %2939 = vmatpush.bf16.msra.mxu0 %v1946
  %2940 = vmatpush.bf16.msra.mxu0 %v1942
  %2941 = vmatpush.bf16.msra.mxu0 %v1938
  %2942 = vmatpush.bf16.msra.mxu0 %v1934
  %2943 = vmatpush.bf16.msra.mxu0 %v1930
  %2944 = vmatmul.bf16.gmra.mxu0 %v479
  %v2945 = vpop.f32.mrf.mxu0
  %v2946 = vadd.f32 %v2932, %v2945
  %v2947 = vpop.f32.mrf.mxu0
  %v2948 = vadd.f32 %v2934, %v2947
  %2949 = vdwg.mxu0
  %2950 = vmatpush.bf16.msra.mxu0 %v1990
  %2951 = vmatpush.bf16.msra.mxu0 %v1986
  %2952 = vmatpush.bf16.msra.mxu0 %v1982
  %2953 = vmatpush.bf16.msra.mxu0 %v1978
  %2954 = vmatpush.bf16.msra.mxu0 %v1974
  %2955 = vmatpush.bf16.msra.mxu0 %v1970
  %2956 = vmatpush.bf16.msra.mxu0 %v1966
  %2957 = vmatpush.bf16.msra.mxu0 %v1962
  %2958 = vmatmul.bf16.gmra.mxu0 %v480
  %v2959 = vpop.f32.mrf.mxu0
  %v2960 = vadd.f32 %v2946, %v2959
  %v2961 = vpop.f32.mrf.mxu0
  %v2962 = vadd.f32 %v2948, %v2961
  %2963 = vdwg.mxu0
  %2964 = vmatpush.bf16.msra.mxu0 %v2022
  %2965 = vmatpush.bf16.msra.mxu0 %v2018
  %2966 = vmatpush.bf16.msra.mxu0 %v2014
  %2967 = vmatpush.bf16.msra.mxu0 %v2010
  %2968 = vmatpush.bf16.msra.mxu0 %v2006
  %2969 = vmatpush.bf16.msra.mxu0 %v2002
  %2970 = vmatpush.bf16.msra.mxu0 %v1998
  %2971 = vmatpush.bf16.msra.mxu0 %v1994
  %2972 = vmatmul.bf16.gmra.mxu0 %v481
  %v2973 = vpop.f32.mrf.mxu0
  %v2974 = vadd.f32 %v2960, %v2973
  %v2975 = vpop.f32.mrf.mxu0
  %v2976 = vadd.f32 %v2962, %v2975
  %2977 = vdwg.mxu0
  %2978 = vmatpush.bf16.msra.mxu0 %v2054
  %2979 = vmatpush.bf16.msra.mxu0 %v2050
  %2980 = vmatpush.bf16.msra.mxu0 %v2046
  %2981 = vmatpush.bf16.msra.mxu0 %v2042
  %2982 = vmatpush.bf16.msra.mxu0 %v2038
  %2983 = vmatpush.bf16.msra.mxu0 %v2034
  %2984 = vmatpush.bf16.msra.mxu0 %v2030
  %2985 = vmatpush.bf16.msra.mxu0 %v2026
  %2986 = vmatmul.bf16.gmra.mxu0 %v482
  %v2987 = vpop.f32.mrf.mxu0
  %v2988 = vadd.f32 %v2974, %v2987
  %v2989 = vpop.f32.mrf.mxu0
  %v2990 = vadd.f32 %v2976, %v2989
  %2991 = vdwg.mxu0
  %2992 = vmatpush.bf16.msra.mxu0 0
  %2993 = vmatpush.bf16.msra.mxu0 0
  %2994 = vmatpush.bf16.msra.mxu0 0
  %2995 = vmatpush.bf16.msra.mxu0 0
  %2996 = vmatpush.bf16.msra.mxu0 0
  %2997 = vmatpush.bf16.msra.mxu0 0
  %2998 = vmatpush.bf16.msra.mxu0 %v2062
  %2999 = vmatpush.bf16.msra.mxu0 %v2058
  %3000 = vmatmul.bf16.gmra.mxu0 %v2458
  %v3001 = vpop.f32.mrf.mxu0
  %v3002 = vadd.f32 %v2988, %v3001
  %v3003 = vpop.f32.mrf.mxu0
  %v3004 = vadd.f32 %v2990, %v3003
  %3005 = vdwg.mxu0
  %3006 = vmatpush.bf16.msra.mxu0 %v1703
  %3007 = vmatpush.bf16.msra.mxu0 %v1699
  %3008 = vmatpush.bf16.msra.mxu0 %v1695
  %3009 = vmatpush.bf16.msra.mxu0 %v1691
  %3010 = vmatpush.bf16.msra.mxu0 %v1687
  %3011 = vmatpush.bf16.msra.mxu0 %v1683
  %3012 = vmatpush.bf16.msra.mxu0 %v1679
  %3013 = vmatpush.bf16.msra.mxu0 %v1675
  %3014 = vmatmul.bf16.gmra.mxu0 %v471
  %v3015 = vpop.f32.mrf.mxu0
  %v3016 = vadd.f32 %v426, %v3015
  %v3017 = vpop.f32.mrf.mxu0
  %v3018 = vadd.f32 %v426, %v3017
  %3019 = vdwg.mxu0
  %3020 = vmatpush.bf16.msra.mxu0 %v1735
  %3021 = vmatpush.bf16.msra.mxu0 %v1731
  %3022 = vmatpush.bf16.msra.mxu0 %v1727
  %3023 = vmatpush.bf16.msra.mxu0 %v1723
  %3024 = vmatpush.bf16.msra.mxu0 %v1719
  %3025 = vmatpush.bf16.msra.mxu0 %v1715
  %3026 = vmatpush.bf16.msra.mxu0 %v1711
  %3027 = vmatpush.bf16.msra.mxu0 %v1707
  %3028 = vmatmul.bf16.gmra.mxu0 %v472
  %v3029 = vpop.f32.mrf.mxu0
  %v3030 = vadd.f32 %v3016, %v3029
  %v3031 = vpop.f32.mrf.mxu0
  %v3032 = vadd.f32 %v3018, %v3031
  %3033 = vdwg.mxu0
  %3034 = vmatpush.bf16.msra.mxu0 %v1767
  %3035 = vmatpush.bf16.msra.mxu0 %v1763
  %3036 = vmatpush.bf16.msra.mxu0 %v1759
  %3037 = vmatpush.bf16.msra.mxu0 %v1755
  %3038 = vmatpush.bf16.msra.mxu0 %v1751
  %3039 = vmatpush.bf16.msra.mxu0 %v1747
  %3040 = vmatpush.bf16.msra.mxu0 %v1743
  %3041 = vmatpush.bf16.msra.mxu0 %v1739
  %3042 = vmatmul.bf16.gmra.mxu0 %v473
  %v3043 = vpop.f32.mrf.mxu0
  %v3044 = vadd.f32 %v3030, %v3043
  %v3045 = vpop.f32.mrf.mxu0
  %v3046 = vadd.f32 %v3032, %v3045
  %3047 = vdwg.mxu0
  %3048 = vmatpush.bf16.msra.mxu0 %v1799
  %3049 = vmatpush.bf16.msra.mxu0 %v1795
  %3050 = vmatpush.bf16.msra.mxu0 %v1791
  %3051 = vmatpush.bf16.msra.mxu0 %v1787
  %3052 = vmatpush.bf16.msra.mxu0 %v1783
  %3053 = vmatpush.bf16.msra.mxu0 %v1779
  %3054 = vmatpush.bf16.msra.mxu0 %v1775
  %3055 = vmatpush.bf16.msra.mxu0 %v1771
  %3056 = vmatmul.bf16.gmra.mxu0 %v474
  %v3057 = vpop.f32.mrf.mxu0
  %v3058 = vadd.f32 %v3044, %v3057
  %v3059 = vpop.f32.mrf.mxu0
  %v3060 = vadd.f32 %v3046, %v3059
  %3061 = vdwg.mxu0
  %3062 = vmatpush.bf16.msra.mxu0 %v1831
  %3063 = vmatpush.bf16.msra.mxu0 %v1827
  %3064 = vmatpush.bf16.msra.mxu0 %v1823
  %3065 = vmatpush.bf16.msra.mxu0 %v1819
  %3066 = vmatpush.bf16.msra.mxu0 %v1815
  %3067 = vmatpush.bf16.msra.mxu0 %v1811
  %3068 = vmatpush.bf16.msra.mxu0 %v1807
  %3069 = vmatpush.bf16.msra.mxu0 %v1803
  %3070 = vmatmul.bf16.gmra.mxu0 %v475
  %v3071 = vpop.f32.mrf.mxu0
  %v3072 = vadd.f32 %v3058, %v3071
  %v3073 = vpop.f32.mrf.mxu0
  %v3074 = vadd.f32 %v3060, %v3073
  %3075 = vdwg.mxu0
  %3076 = vmatpush.bf16.msra.mxu0 %v1863
  %3077 = vmatpush.bf16.msra.mxu0 %v1859
  %3078 = vmatpush.bf16.msra.mxu0 %v1855
  %3079 = vmatpush.bf16.msra.mxu0 %v1851
  %3080 = vmatpush.bf16.msra.mxu0 %v1847
  %3081 = vmatpush.bf16.msra.mxu0 %v1843
  %3082 = vmatpush.bf16.msra.mxu0 %v1839
  %3083 = vmatpush.bf16.msra.mxu0 %v1835
  %3084 = vmatmul.bf16.gmra.mxu0 %v476
  %v3085 = vpop.f32.mrf.mxu0
  %v3086 = vadd.f32 %v3072, %v3085
  %v3087 = vpop.f32.mrf.mxu0
  %v3088 = vadd.f32 %v3074, %v3087
  %3089 = vdwg.mxu0
  %3090 = vmatpush.bf16.msra.mxu0 %v1895
  %3091 = vmatpush.bf16.msra.mxu0 %v1891
  %3092 = vmatpush.bf16.msra.mxu0 %v1887
  %3093 = vmatpush.bf16.msra.mxu0 %v1883
  %3094 = vmatpush.bf16.msra.mxu0 %v1879
  %3095 = vmatpush.bf16.msra.mxu0 %v1875
  %3096 = vmatpush.bf16.msra.mxu0 %v1871
  %3097 = vmatpush.bf16.msra.mxu0 %v1867
  %3098 = vmatmul.bf16.gmra.mxu0 %v477
  %v3099 = vpop.f32.mrf.mxu0
  %v3100 = vadd.f32 %v3086, %v3099
  %v3101 = vpop.f32.mrf.mxu0
  %v3102 = vadd.f32 %v3088, %v3101
  %3103 = vdwg.mxu0
  %3104 = vmatpush.bf16.msra.mxu0 %v1927
  %3105 = vmatpush.bf16.msra.mxu0 %v1923
  %3106 = vmatpush.bf16.msra.mxu0 %v1919
  %3107 = vmatpush.bf16.msra.mxu0 %v1915
  %3108 = vmatpush.bf16.msra.mxu0 %v1911
  %3109 = vmatpush.bf16.msra.mxu0 %v1907
  %3110 = vmatpush.bf16.msra.mxu0 %v1903
  %3111 = vmatpush.bf16.msra.mxu0 %v1899
  %3112 = vmatmul.bf16.gmra.mxu0 %v478
  %v3113 = vpop.f32.mrf.mxu0
  %v3114 = vadd.f32 %v3100, %v3113
  %v3115 = vpop.f32.mrf.mxu0
  %v3116 = vadd.f32 %v3102, %v3115
  %3117 = vdwg.mxu0
  %3118 = vmatpush.bf16.msra.mxu0 %v1959
  %3119 = vmatpush.bf16.msra.mxu0 %v1955
  %3120 = vmatpush.bf16.msra.mxu0 %v1951
  %3121 = vmatpush.bf16.msra.mxu0 %v1947
  %3122 = vmatpush.bf16.msra.mxu0 %v1943
  %3123 = vmatpush.bf16.msra.mxu0 %v1939
  %3124 = vmatpush.bf16.msra.mxu0 %v1935
  %3125 = vmatpush.bf16.msra.mxu0 %v1931
  %3126 = vmatmul.bf16.gmra.mxu0 %v479
  %v3127 = vpop.f32.mrf.mxu0
  %v3128 = vadd.f32 %v3114, %v3127
  %v3129 = vpop.f32.mrf.mxu0
  %v3130 = vadd.f32 %v3116, %v3129
  %3131 = vdwg.mxu0
  %3132 = vmatpush.bf16.msra.mxu0 %v1991
  %3133 = vmatpush.bf16.msra.mxu0 %v1987
  %3134 = vmatpush.bf16.msra.mxu0 %v1983
  %3135 = vmatpush.bf16.msra.mxu0 %v1979
  %3136 = vmatpush.bf16.msra.mxu0 %v1975
  %3137 = vmatpush.bf16.msra.mxu0 %v1971
  %3138 = vmatpush.bf16.msra.mxu0 %v1967
  %3139 = vmatpush.bf16.msra.mxu0 %v1963
  %3140 = vmatmul.bf16.gmra.mxu0 %v480
  %v3141 = vpop.f32.mrf.mxu0
  %v3142 = vadd.f32 %v3128, %v3141
  %v3143 = vpop.f32.mrf.mxu0
  %v3144 = vadd.f32 %v3130, %v3143
  %3145 = vdwg.mxu0
  %3146 = vmatpush.bf16.msra.mxu0 %v2023
  %3147 = vmatpush.bf16.msra.mxu0 %v2019
  %3148 = vmatpush.bf16.msra.mxu0 %v2015
  %3149 = vmatpush.bf16.msra.mxu0 %v2011
  %3150 = vmatpush.bf16.msra.mxu0 %v2007
  %3151 = vmatpush.bf16.msra.mxu0 %v2003
  %3152 = vmatpush.bf16.msra.mxu0 %v1999
  %3153 = vmatpush.bf16.msra.mxu0 %v1995
  %3154 = vmatmul.bf16.gmra.mxu0 %v481
  %v3155 = vpop.f32.mrf.mxu0
  %v3156 = vadd.f32 %v3142, %v3155
  %v3157 = vpop.f32.mrf.mxu0
  %v3158 = vadd.f32 %v3144, %v3157
  %3159 = vdwg.mxu0
  %3160 = vmatpush.bf16.msra.mxu0 %v2055
  %3161 = vmatpush.bf16.msra.mxu0 %v2051
  %3162 = vmatpush.bf16.msra.mxu0 %v2047
  %3163 = vmatpush.bf16.msra.mxu0 %v2043
  %3164 = vmatpush.bf16.msra.mxu0 %v2039
  %3165 = vmatpush.bf16.msra.mxu0 %v2035
  %3166 = vmatpush.bf16.msra.mxu0 %v2031
  %3167 = vmatpush.bf16.msra.mxu0 %v2027
  %3168 = vmatmul.bf16.gmra.mxu0 %v482
  %v3169 = vpop.f32.mrf.mxu0
  %v3170 = vadd.f32 %v3156, %v3169
  %v3171 = vpop.f32.mrf.mxu0
  %v3172 = vadd.f32 %v3158, %v3171
  %3173 = vdwg.mxu0
  %3174 = vmatpush.bf16.msra.mxu0 0
  %3175 = vmatpush.bf16.msra.mxu0 0
  %3176 = vmatpush.bf16.msra.mxu0 0
  %3177 = vmatpush.bf16.msra.mxu0 0
  %3178 = vmatpush.bf16.msra.mxu0 0
  %3179 = vmatpush.bf16.msra.mxu0 0
  %3180 = vmatpush.bf16.msra.mxu0 %v2063
  %3181 = vmatpush.bf16.msra.mxu0 %v2059
  %3182 = vmatmul.bf16.gmra.mxu0 %v2458
  %v3183 = vpop.f32.mrf.mxu0
  %v3184 = vadd.f32 %v3170, %v3183
  %v3185 = vpop.f32.mrf.mxu0
  %v3186 = vadd.f32 %v3172, %v3185
  %3187 = vdwg.mxu0
  %v3188 = vmax.f32 %v2638, 0.0
  %v3189 = vmax.f32 %v2820, 0.0
  %v3190 = vmax.f32 %v3002, 0.0
  %v3191 = vmax.f32 %v3184, 0.0
  %v3192 = vmax.f32 %v2640, 0.0
  %v3193 = vmax.f32 %v2822, 0.0
  %v3194 = vmax.f32 %v3004, 0.0
  %v3195 = vmax.f32 %v3186, 0.0
  %v3196 = vpack.c.bf16 %v3189, %v3188
  %v3197 = vpack.c.bf16 %v3191, %v3190
  %v3198 = vpack.c.bf16 %v3193, %v3192
  %v3199 = vpack.c.bf16 %v3195, %v3194
  %3200 = vst [vmem:[%s3] sm:$0xff] %v3196
  %3201 = vst [vmem:[%s3 + $0x8] sm:$0xff] %v3197
  %3202 = vst [vmem:[%s3 + $0x10] sm:$0xff] %v3198
  %3203 = vst [vmem:[%s3 + $0x18] sm:$0xff] %v3199
  // Predicated region
  $region14: #{mnist_conv_forward.6} parent=0 // pred_check
    _
  $region15: #{mnist_conv_forward.6} parent=0 // pred_check_branch
    %3205 = sbr.rel (0) target = $region17
  $region16: #{mnist_conv_forward.6} parent=0 // pred_region
    _
  $region17: #{mnist_conv_forward.6} parent=0 // pred_fallthru
    _
  // Predicated region
  $region18: #{mnist_conv_forward.6} parent=0 // pred_check
    _
  $region19: #{mnist_conv_forward.6} parent=0 // pred_check_branch
    %3207 = sbr.rel (0) target = $region21
  $region20: #{mnist_conv_forward.6} parent=0 // pred_region
    _
  $region21: #{mnist_conv_forward.6} parent=0 // pred_fallthru
    _

</llo_original>
